<compile_context>
chip_gen: v7x
topology: tpu7x:2x2x1
jax: 0.10.0
libtpu: 0.0.40
codegen_flags: <defaults>
</compile_context>

<pallas_src>
import math
import numpy as np
import jax
import jax.numpy as jnp
from jax import lax
from jax.experimental import pallas as pl
from jax.experimental.pallas import tpu as pltpu

_SQRT_HALF = math.sqrt(0.5)
_LN_EPS = 1e-5
_NEG_BIG = -1e30            # finite "minus infinity" for attention key masking


# ----------------------------- fused Pallas kernel -----------------------------

def _encoder_kernel(embed_ref, keep_ref, padk_ref,
                    ln_g_ref, ln_b_ref, fc1_w_ref, fc1_b_ref,
                    conv_w_ref, conv_b_ref,
                    attn_wi_ref, attn_bi_ref, attn_wo_ref, attn_bo_ref,
                    fc2_w_ref, fc2_b_ref,
                    x_out_ref, y_out_ref,
                    xp_ref):
    """Entire GPTFConvEncoder forward for one batch element (one grid step)."""
    T, E = embed_ref.shape
    C = fc1_w_ref.shape[1]
    L, K, _, C2 = conv_w_ref.shape
    pad_l, pad_r = (K - 1) // 2, K // 2

    keep = keep_ref[...]                        # [T, 1], 1.0 on real tokens
    pad_keys = padk_ref[...]                    # [1, T], 1.0 on padded keys

    # ---- embed_norm (LayerNorm) -> input_embedding (dropout = eval identity)
    e = embed_ref[...]
    mu = jnp.mean(e, axis=-1, keepdims=True)
    var = jnp.mean((e - mu) * (e - mu), axis=-1, keepdims=True)
    ie = (e - mu) * lax.rsqrt(var + _LN_EPS) * ln_g_ref[...] + ln_b_ref[...]

    # ---- fc1
    x = jnp.dot(ie, fc1_w_ref[...], preferred_element_type=jnp.float32) + fc1_b_ref[...]

    # ---- conv/GLU stack: activations stay VMEM-resident across layers.
    # The conv halo rows are zeroed once per grid step; only the interior of
    # the scratch is rewritten every layer.
    if pad_l > 0:
        xp_ref[0:pad_l, :] = jnp.zeros((pad_l, C), jnp.float32)
    if pad_r > 0:
        xp_ref[pad_l + T:pad_l + T + pad_r, :] = jnp.zeros((pad_r, C), jnp.float32)

    tgt = x                                     # target_embedding placeholder
    for layer in range(L):
        xm = x * keep                           # masked_fill(padding, 0)
        xp_ref[pad_l:pad_l + T, :] = xm
        # ConvTBC as K shifted matmuls against the full [C, 2C] tap weight.
        acc = jnp.dot(xp_ref[0:T, :], conv_w_ref[layer, 0],
                      preferred_element_type=jnp.float32)
        for k in range(1, K):
            acc = acc + jnp.dot(xp_ref[k:k + T, :], conv_w_ref[layer, k],
                                preferred_element_type=jnp.float32)
        acc = acc + conv_b_ref[layer]           # bias added once ([1, 2C] bcast)
        x = acc[:, :C] * jax.nn.sigmoid(acc[:, C:])     # F.glu over channels
        if layer == L - 1:
            tgt = xm                            # masked input == target_embedding

    # ---- AttentionLayer (attached to last conv block) + the cat/GLU after it
    z = (jnp.dot(x, attn_wi_ref[...], preferred_element_type=jnp.float32)
         + attn_bi_ref[...] + tgt) * _SQRT_HALF
    # scores[t, s] = <z_t, x_s>   (encoder_out[0] == x^T)
    scores = lax.dot_general(z, x, (((1,), (1,)), ((), ())),
                             preferred_element_type=jnp.float32)        # [T, T]
    scores = jnp.where(pad_keys > 0.5, _NEG_BIG, scores)
    smax = jnp.max(scores, axis=-1, keepdims=True)
    pexp = jnp.exp(scores - smax)
    inv = pl.reciprocal(jnp.sum(pexp, axis=-1, keepdims=True), approx=True)
    attn = pexp * inv
    ctx = jnp.dot(attn, x, preferred_element_type=jnp.float32)
    ctx = ctx * (T * math.sqrt(1.0 / T))        # spec scales by s == full T
    out = (jnp.dot(ctx, attn_wo_ref[...], preferred_element_type=jnp.float32)
           + attn_bo_ref[...] + x) * _SQRT_HALF
    x = x * jax.nn.sigmoid(out)                 # cat([x, out]) + GLU

    # ---- fc2, padding mask, residual mix with input_embedding
    h = jnp.dot(x, fc2_w_ref[...], preferred_element_type=jnp.float32) + fc2_b_ref[...]
    h = h * keep
    x_out_ref[...] = h
    y_out_ref[...] = (h + ie) * _SQRT_HALF


# ----------------------------- wrapper -----------------------------

def gptf_conv_encoder_forward(src_tokens, embed, p):
    # TODO(synk): share_embed_model.transformer(...) (external GPT) has no local
    # equivalent; its output embedding `embed` [B, T, E] is taken as an input.
    B, T = src_tokens.shape
    E = embed.shape[-1]
    L, K, C, C2 = p['conv_w'].shape

    pad_f = (src_tokens == 0).astype(jnp.float32)
    keep = (1.0 - pad_f)[:, :, None]            # [B, T, 1]
    pad_k = pad_f[:, None, :]                   # [B, 1, T]

    def resident(shape):                        # same block every step -> stays in VMEM
        n = len(shape)
        return pl.BlockSpec(shape, lambda b: (0,) * n)

    def per_batch(d1, d2):                      # one batch element per grid step
        return pl.BlockSpec((None, d1, d2), lambda b: (b, 0, 0))

    x_out, y_out = pl.pallas_call(
        _encoder_kernel,
        grid=(B,),
        in_specs=[
            per_batch(T, E),                    # embed
            per_batch(T, 1),                    # keep mask
            per_batch(1, T),                    # key padding mask
            resident((1, E)), resident((1, E)),              # LayerNorm g, b
            resident((E, C)), resident((1, C)),              # fc1
            resident((L, K, C, C2)), resident((L, 1, C2)),   # conv stack
            resident((C, C)), resident((1, C)),              # attn in_proj
            resident((C, C)), resident((1, C)),              # attn out_proj
            resident((C, E)), resident((1, E)),              # fc2
        ],
        out_specs=(per_batch(T, E), per_batch(T, E)),
        out_shape=(jax.ShapeDtypeStruct((B, T, E), jnp.float32),
                   jax.ShapeDtypeStruct((B, T, E), jnp.float32)),
        scratch_shapes=[pltpu.VMEM((T + K - 1, C), jnp.float32)],   # conv halo
        compiler_params=pltpu.CompilerParams(
            dimension_semantics=("parallel",),  # v7x: shard batch over 2 TCs
            vmem_limit_bytes=64 * 1024 * 1024),
    )(embed, keep, pad_k,
      p['ln_g'], p['ln_b'], p['fc1_w'], p['fc1_b'],
      p['conv_w'], p['conv_b'],
      p['attn_wi'], p['attn_bi'], p['attn_wo'], p['attn_bo'],
      p['fc2_w'], p['fc2_b'])

    return {
        'src_tokens': src_tokens,
        'encoder_out': (x_out, y_out),
        'encoder_padding_mask': (src_tokens == 0),
    }


# ----------------------------- parameters -----------------------------

def init_params(key, *, embed_dim, conv_channels, kernel_size, n_layers, dropout):
    """Deterministic synthetic init matching the PyTorch module's __init__ stds."""
    E, C, K, L = embed_dim, conv_channels, kernel_size, n_layers
    ks = jax.random.split(key, 6)

    def nrm(k, shape, std):
        return (std * jax.random.normal(k, shape)).astype(jnp.float32)

    return {
        'ln_g': jnp.ones((1, E), jnp.float32),
        'ln_b': jnp.zeros((1, E), jnp.float32),
        'fc1_w': nrm(ks[0], (E, C), math.sqrt((1.0 - dropout) / E)),
        'fc1_b': jnp.zeros((1, C), jnp.float32),
        'conv_w': nrm(ks[1], (L, K, C, 2 * C),
                      math.sqrt(4.0 * (1.0 - dropout) / (K * C))),
        'conv_b': jnp.zeros((L, 1, 2 * C), jnp.float32),
        'attn_wi': nrm(ks[2], (C, C), math.sqrt(1.0 / C)),
        'attn_bi': jnp.zeros((1, C), jnp.float32),
        'attn_wo': nrm(ks[3], (C, C), math.sqrt(1.0 / C)),
        'attn_bo': jnp.zeros((1, C), jnp.float32),
        'fc2_w': nrm(ks[4], (C, E), math.sqrt(1.0 / C)),
        'fc2_b': jnp.zeros((1, E), jnp.float32),
    }


# ----------------------------- pure-JAX reference -----------------------------

def reference_forward(src_tokens, embed, p):
    B, T = src_tokens.shape
    L, K, C, C2 = p['conv_w'].shape
    pad_f = (src_tokens == 0).astype(jnp.float32)

    mu = jnp.mean(embed, -1, keepdims=True)
    var = jnp.mean((embed - mu) ** 2, -1, keepdims=True)
    ie = (embed - mu) / jnp.sqrt(var + _LN_EPS) * p['ln_g'] + p['ln_b']
    x = ie @ p['fc1_w'] + p['fc1_b']

    pad_l, pad_r = (K - 1) // 2, K // 2
    for i in range(L):
        xm = x * (1.0 - pad_f)[:, :, None]
        xp = jnp.pad(xm, ((0, 0), (pad_l, pad_r), (0, 0)))
        acc = jnp.zeros((B, T, C2), jnp.float32) + p['conv_b'][i]
        for k in range(K):
            acc = acc + jnp.einsum('btc,co->bto', xp[:, k:k + T, :], p['conv_w'][i, k])
        x = acc[..., :C] * jax.nn.sigmoid(acc[..., C:])
        if i == L - 1:
            z = (x @ p['attn_wi'] + p['attn_bi'] + xm) * _SQRT_HALF
            scores = jnp.einsum('btc,bsc->bts', z, x)
            scores = jnp.where(pad_f[:, None, :] > 0.5, -jnp.inf, scores)
            attn = jax.nn.softmax(scores, axis=-1)
            ctx = jnp.einsum('bts,bsc->btc', attn, x) * (T * math.sqrt(1.0 / T))
            out = (ctx @ p['attn_wo'] + p['attn_bo'] + x) * _SQRT_HALF
            x = x * jax.nn.sigmoid(out)

    h = (x @ p['fc2_w'] + p['fc2_b']) * (1.0 - pad_f)[:, :, None]
    y = (h + ie) * _SQRT_HALF
    return h, y


# ----------------------------- main -----------------------------

if __name__ == "__main__":
    B, T, E, C, K, L = 2, 8, 32, 16, 5, 3    # small analog of embed_dim=384, ((192,5),)*5
    key = jax.random.PRNGKey(0)
    k_embed, k_params = jax.random.split(key)

    # `embed` stands in for share_embed_model.transformer(src_tokens)[0]
    embed = jax.random.normal(k_embed, (B, T, E), jnp.float32)
    src_tokens = jnp.array([[5, 3, 9, 2, 7, 1, 0, 0],
                            [4, 8, 1, 6, 2, 3, 7, 0]], dtype=jnp.int32)

    params = init_params(k_params, embed_dim=E, conv_channels=C,
                         kernel_size=K, n_layers=L, dropout=0.1)

    out = gptf_conv_encoder_forward(src_tokens, embed, params)
    x_out, y_out = out['encoder_out']
    jax.block_until_ready((x_out, y_out))

    x_ref, y_ref = reference_forward(src_tokens, embed, params)
    # Slightly relaxed tolerance: kernel uses rsqrt / EUP approx-reciprocal softmax.
    np.testing.assert_allclose(np.asarray(x_out), np.asarray(x_ref), rtol=3e-3, atol=3e-3)
    np.testing.assert_allclose(np.asarray(y_out), np.asarray(y_ref), rtol=3e-3, atol=3e-3)
    print("KERNEL_OK")
</pallas_src>

<mosaic_0001>
module attributes {stable_mosaic.version = 11 : i64} {
  func.func @_encoder_kernel(%arg0: i32, %arg1: memref<1x8x32xf32, #tpu.memory_space<vmem>>, %arg2: memref<1x8x1xf32, #tpu.memory_space<vmem>>, %arg3: memref<1x1x8xf32, #tpu.memory_space<vmem>>, %arg4: memref<1x32xf32, #tpu.memory_space<vmem>>, %arg5: memref<1x32xf32, #tpu.memory_space<vmem>>, %arg6: memref<32x16xf32, #tpu.memory_space<vmem>>, %arg7: memref<1x16xf32, #tpu.memory_space<vmem>>, %arg8: memref<3x5x16x32xf32, #tpu.memory_space<vmem>>, %arg9: memref<3x1x32xf32, #tpu.memory_space<vmem>>, %arg10: memref<16x16xf32, #tpu.memory_space<vmem>>, %arg11: memref<1x16xf32, #tpu.memory_space<vmem>>, %arg12: memref<16x16xf32, #tpu.memory_space<vmem>>, %arg13: memref<1x16xf32, #tpu.memory_space<vmem>>, %arg14: memref<16x32xf32, #tpu.memory_space<vmem>>, %arg15: memref<1x32xf32, #tpu.memory_space<vmem>>, %arg16: memref<1x8x32xf32, #tpu.memory_space<vmem>>, %arg17: memref<1x8x32xf32, #tpu.memory_space<vmem>>, %arg18: memref<12x16xf32, #tpu.memory_space<vmem>>) attributes {dimension_semantics = [#tpu.dimension_semantics<parallel>], iteration_bounds = array<i64: 2>, scalar_prefetch = 0 : i64, scratch_operands = 1 : i64, tpu.core_type = #tpu.core_type<tc>, window_params = [{transform_indices = @transform_0, window_bounds = array<i64: 1, 8, 32>}, {transform_indices = @transform_1, window_bounds = array<i64: 1, 8, 1>}, {transform_indices = @transform_2, window_bounds = array<i64: 1, 1, 8>}, {pipeline_mode = #tpu.pipeline_mode<synchronous>, transform_indices = @transform_3, window_bounds = array<i64: 1, 32>}, {pipeline_mode = #tpu.pipeline_mode<synchronous>, transform_indices = @transform_4, window_bounds = array<i64: 1, 32>}, {pipeline_mode = #tpu.pipeline_mode<synchronous>, transform_indices = @transform_5, window_bounds = array<i64: 32, 16>}, {pipeline_mode = #tpu.pipeline_mode<synchronous>, transform_indices = @transform_6, window_bounds = array<i64: 1, 16>}, {pipeline_mode = #tpu.pipeline_mode<synchronous>, transform_indices = @transform_7, window_bounds = array<i64: 3, 5, 16, 32>}, {pipeline_mode = #tpu.pipeline_mode<synchronous>, transform_indices = @transform_8, window_bounds = array<i64: 3, 1, 32>}, {pipeline_mode = #tpu.pipeline_mode<synchronous>, transform_indices = @transform_9, window_bounds = array<i64: 16, 16>}, {pipeline_mode = #tpu.pipeline_mode<synchronous>, transform_indices = @transform_10, window_bounds = array<i64: 1, 16>}, {pipeline_mode = #tpu.pipeline_mode<synchronous>, transform_indices = @transform_11, window_bounds = array<i64: 16, 16>}, {pipeline_mode = #tpu.pipeline_mode<synchronous>, transform_indices = @transform_12, window_bounds = array<i64: 1, 16>}, {pipeline_mode = #tpu.pipeline_mode<synchronous>, transform_indices = @transform_13, window_bounds = array<i64: 16, 32>}, {pipeline_mode = #tpu.pipeline_mode<synchronous>, transform_indices = @transform_14, window_bounds = array<i64: 1, 32>}, {transform_indices = @transform_15, window_bounds = array<i64: 1, 8, 32>}, {transform_indices = @transform_16, window_bounds = array<i64: 1, 8, 32>}]} {
    %c0 = arith.constant 0 : index
    %c0_0 = arith.constant 0 : index
    %c0_1 = arith.constant 0 : index
    %0 = vector.load %arg2[%c0, %c0_0, %c0_1] : memref<1x8x1xf32, #tpu.memory_space<vmem>>, vector<1x8x1xf32>
    %1 = vector.shape_cast %0 : vector<1x8x1xf32> to vector<8x1xf32>
    %c0_2 = arith.constant 0 : index
    %c0_3 = arith.constant 0 : index
    %c0_4 = arith.constant 0 : index
    %2 = vector.load %arg3[%c0_2, %c0_3, %c0_4] : memref<1x1x8xf32, #tpu.memory_space<vmem>>, vector<1x1x8xf32>
    %3 = vector.shape_cast %2 : vector<1x1x8xf32> to vector<1x8xf32>
    %c0_5 = arith.constant 0 : index
    %c0_6 = arith.constant 0 : index
    %c0_7 = arith.constant 0 : index
    %4 = vector.load %arg1[%c0_5, %c0_6, %c0_7] : memref<1x8x32xf32, #tpu.memory_space<vmem>>, vector<1x8x32xf32>
    %5 = vector.shape_cast %4 : vector<1x8x32xf32> to vector<8x32xf32>
    %cst = arith.constant dense<0.000000e+00> : vector<8xf32>
    %6 = vector.multi_reduction <add>, %5, %cst [1] : vector<8x32xf32> to vector<8xf32>
    %7 = vector.shape_cast %6 : vector<8xf32> to vector<8x1xf32>
    %cst_8 = arith.constant 3.200000e+01 : f32
    %8 = vector.broadcast %cst_8 : f32 to vector<8x1xf32>
    %9 = arith.divf %7, %8 : vector<8x1xf32>
    %10 = vector.broadcast %9 : vector<8x1xf32> to vector<8x32xf32>
    %11 = arith.subf %5, %10 : vector<8x32xf32>
    %12 = vector.broadcast %9 : vector<8x1xf32> to vector<8x32xf32>
    %13 = arith.subf %5, %12 : vector<8x32xf32>
    %14 = arith.mulf %11, %13 : vector<8x32xf32>
    %cst_9 = arith.constant dense<0.000000e+00> : vector<8xf32>
    %15 = vector.multi_reduction <add>, %14, %cst_9 [1] : vector<8x32xf32> to vector<8xf32>
    %16 = vector.shape_cast %15 : vector<8xf32> to vector<8x1xf32>
    %cst_10 = arith.constant 3.200000e+01 : f32
    %17 = vector.broadcast %cst_10 : f32 to vector<8x1xf32>
    %18 = arith.divf %16, %17 : vector<8x1xf32>
    %19 = vector.broadcast %9 : vector<8x1xf32> to vector<8x32xf32>
    %20 = arith.subf %5, %19 : vector<8x32xf32>
    %cst_11 = arith.constant 9.99999974E-6 : f32
    %21 = vector.broadcast %cst_11 : f32 to vector<8x1xf32>
    %22 = arith.addf %18, %21 : vector<8x1xf32>
    %23 = math.rsqrt %22 : vector<8x1xf32>
    %24 = vector.broadcast %23 : vector<8x1xf32> to vector<8x32xf32>
    %25 = arith.mulf %20, %24 : vector<8x32xf32>
    %c0_12 = arith.constant 0 : index
    %c0_13 = arith.constant 0 : index
    %26 = vector.load %arg4[%c0_12, %c0_13] : memref<1x32xf32, #tpu.memory_space<vmem>>, vector<1x32xf32>
    %27 = vector.broadcast %26 : vector<1x32xf32> to vector<8x32xf32>
    %28 = arith.mulf %25, %27 : vector<8x32xf32>
    %c0_14 = arith.constant 0 : index
    %c0_15 = arith.constant 0 : index
    %29 = vector.load %arg5[%c0_14, %c0_15] : memref<1x32xf32, #tpu.memory_space<vmem>>, vector<1x32xf32>
    %30 = vector.broadcast %29 : vector<1x32xf32> to vector<8x32xf32>
    %31 = arith.addf %28, %30 : vector<8x32xf32>
    %c0_16 = arith.constant 0 : index
    %c0_17 = arith.constant 0 : index
    %32 = vector.load %arg6[%c0_16, %c0_17] : memref<32x16xf32, #tpu.memory_space<vmem>>, vector<32x16xf32>
    %cst_18 = arith.constant dense<0.000000e+00> : vector<8x16xf32>
    %33 = tpu.matmul %31, %32, %cst_18 {dimension_numbers = #tpu.dot_dimension_numbers<[1], [0], [0], [1], [0, 0, 1, 1], [], []>} : vector<8x32xf32>, vector<32x16xf32>, vector<8x16xf32> -> vector<8x16xf32>
    %c0_19 = arith.constant 0 : index
    %c0_20 = arith.constant 0 : index
    %34 = vector.load %arg7[%c0_19, %c0_20] : memref<1x16xf32, #tpu.memory_space<vmem>>, vector<1x16xf32>
    %35 = vector.broadcast %34 : vector<1x16xf32> to vector<8x16xf32>
    %36 = arith.addf %33, %35 : vector<8x16xf32>
    %cst_21 = arith.constant 0.000000e+00 : f32
    %37 = vector.broadcast %cst_21 : f32 to vector<2x16xf32>
    %c0_22 = arith.constant 0 : index
    %c0_23 = arith.constant 0 : index
    %38 = vector.load %arg18[%c0_22, %c0_23] : memref<12x16xf32, #tpu.memory_space<vmem>>, vector<2x16xf32>
    tpu.vector_store %arg18[%c0_22, %c0_23], %37 {strides = array<i32>} : memref<12x16xf32, #tpu.memory_space<vmem>>, vector<2x16xf32>,
    %cst_24 = arith.constant 0.000000e+00 : f32
    %39 = vector.broadcast %cst_24 : f32 to vector<2x16xf32>
    %c10 = arith.constant 10 : index
    %c0_25 = arith.constant 0 : index
    %40 = vector.load %arg18[%c10, %c0_25] : memref<12x16xf32, #tpu.memory_space<vmem>>, vector<2x16xf32>
    tpu.vector_store %arg18[%c10, %c0_25], %39 {strides = array<i32>} : memref<12x16xf32, #tpu.memory_space<vmem>>, vector<2x16xf32>,
    %41 = vector.broadcast %1 : vector<8x1xf32> to vector<8x16xf32>
    %42 = arith.mulf %36, %41 : vector<8x16xf32>
    %c2 = arith.constant 2 : index
    %c0_26 = arith.constant 0 : index
    %43 = vector.load %arg18[%c2, %c0_26] : memref<12x16xf32, #tpu.memory_space<vmem>>, vector<8x16xf32>
    tpu.vector_store %arg18[%c2, %c0_26], %42 {strides = array<i32>} : memref<12x16xf32, #tpu.memory_space<vmem>>, vector<8x16xf32>,
    %c0_27 = arith.constant 0 : index
    %c0_28 = arith.constant 0 : index
    %44 = vector.load %arg18[%c0_27, %c0_28] : memref<12x16xf32, #tpu.memory_space<vmem>>, vector<8x16xf32>
    %c0_29 = arith.constant 0 : index
    %c0_30 = arith.constant 0 : index
    %c0_31 = arith.constant 0 : index
    %c0_32 = arith.constant 0 : index
    %45 = vector.load %arg8[%c0_29, %c0_30, %c0_31, %c0_32] : memref<3x5x16x32xf32, #tpu.memory_space<vmem>>, vector<1x1x16x32xf32>
    %46 = vector.shape_cast %45 : vector<1x1x16x32xf32> to vector<16x32xf32>
    %cst_33 = arith.constant dense<0.000000e+00> : vector<8x32xf32>
    %47 = tpu.matmul %44, %46, %cst_33 {dimension_numbers = #tpu.dot_dimension_numbers<[1], [0], [0], [1], [0, 0, 1, 1], [], []>} : vector<8x16xf32>, vector<16x32xf32>, vector<8x32xf32> -> vector<8x32xf32>
    %c1 = arith.constant 1 : index
    %c0_34 = arith.constant 0 : index
    %48 = vector.load %arg18[%c1, %c0_34] : memref<12x16xf32, #tpu.memory_space<vmem>>, vector<8x16xf32>
    %c0_35 = arith.constant 0 : index
    %c1_36 = arith.constant 1 : index
    %c0_37 = arith.constant 0 : index
    %c0_38 = arith.constant 0 : index
    %49 = vector.load %arg8[%c0_35, %c1_36, %c0_37, %c0_38] : memref<3x5x16x32xf32, #tpu.memory_space<vmem>>, vector<1x1x16x32xf32>
    %50 = vector.shape_cast %49 : vector<1x1x16x32xf32> to vector<16x32xf32>
    %cst_39 = arith.constant dense<0.000000e+00> : vector<8x32xf32>
    %51 = tpu.matmul %48, %50, %cst_39 {dimension_numbers = #tpu.dot_dimension_numbers<[1], [0], [0], [1], [0, 0, 1, 1], [], []>} : vector<8x16xf32>, vector<16x32xf32>, vector<8x32xf32> -> vector<8x32xf32>
    %52 = arith.addf %47, %51 : vector<8x32xf32>
    %c2_40 = arith.constant 2 : index
    %c0_41 = arith.constant 0 : index
    %53 = vector.load %arg18[%c2_40, %c0_41] : memref<12x16xf32, #tpu.memory_space<vmem>>, vector<8x16xf32>
    %c0_42 = arith.constant 0 : index
    %c2_43 = arith.constant 2 : index
    %c0_44 = arith.constant 0 : index
    %c0_45 = arith.constant 0 : index
    %54 = vector.load %arg8[%c0_42, %c2_43, %c0_44, %c0_45] : memref<3x5x16x32xf32, #tpu.memory_space<vmem>>, vector<1x1x16x32xf32>
    %55 = vector.shape_cast %54 : vector<1x1x16x32xf32> to vector<16x32xf32>
    %cst_46 = arith.constant dense<0.000000e+00> : vector<8x32xf32>
    %56 = tpu.matmul %53, %55, %cst_46 {dimension_numbers = #tpu.dot_dimension_numbers<[1], [0], [0], [1], [0, 0, 1, 1], [], []>} : vector<8x16xf32>, vector<16x32xf32>, vector<8x32xf32> -> vector<8x32xf32>
    %57 = arith.addf %52, %56 : vector<8x32xf32>
    %c3 = arith.constant 3 : index
    %c0_47 = arith.constant 0 : index
    %58 = vector.load %arg18[%c3, %c0_47] : memref<12x16xf32, #tpu.memory_space<vmem>>, vector<8x16xf32>
    %c0_48 = arith.constant 0 : index
    %c3_49 = arith.constant 3 : index
    %c0_50 = arith.constant 0 : index
    %c0_51 = arith.constant 0 : index
    %59 = vector.load %arg8[%c0_48, %c3_49, %c0_50, %c0_51] : memref<3x5x16x32xf32, #tpu.memory_space<vmem>>, vector<1x1x16x32xf32>
    %60 = vector.shape_cast %59 : vector<1x1x16x32xf32> to vector<16x32xf32>
    %cst_52 = arith.constant dense<0.000000e+00> : vector<8x32xf32>
    %61 = tpu.matmul %58, %60, %cst_52 {dimension_numbers = #tpu.dot_dimension_numbers<[1], [0], [0], [1], [0, 0, 1, 1], [], []>} : vector<8x16xf32>, vector<16x32xf32>, vector<8x32xf32> -> vector<8x32xf32>
    %62 = arith.addf %57, %61 : vector<8x32xf32>
    %c4 = arith.constant 4 : index
    %c0_53 = arith.constant 0 : index
    %63 = vector.load %arg18[%c4, %c0_53] : memref<12x16xf32, #tpu.memory_space<vmem>>, vector<8x16xf32>
    %c0_54 = arith.constant 0 : index
    %c4_55 = arith.constant 4 : index
    %c0_56 = arith.constant 0 : index
    %c0_57 = arith.constant 0 : index
    %64 = vector.load %arg8[%c0_54, %c4_55, %c0_56, %c0_57] : memref<3x5x16x32xf32, #tpu.memory_space<vmem>>, vector<1x1x16x32xf32>
    %65 = vector.shape_cast %64 : vector<1x1x16x32xf32> to vector<16x32xf32>
    %cst_58 = arith.constant dense<0.000000e+00> : vector<8x32xf32>
    %66 = tpu.matmul %63, %65, %cst_58 {dimension_numbers = #tpu.dot_dimension_numbers<[1], [0], [0], [1], [0, 0, 1, 1], [], []>} : vector<8x16xf32>, vector<16x32xf32>, vector<8x32xf32> -> vector<8x32xf32>
    %67 = arith.addf %62, %66 : vector<8x32xf32>
    %c0_59 = arith.constant 0 : index
    %c0_60 = arith.constant 0 : index
    %c0_61 = arith.constant 0 : index
    %68 = vector.load %arg9[%c0_59, %c0_60, %c0_61] : memref<3x1x32xf32, #tpu.memory_space<vmem>>, vector<1x1x32xf32>
    %69 = vector.shape_cast %68 : vector<1x1x32xf32> to vector<1x32xf32>
    %70 = vector.broadcast %69 : vector<1x32xf32> to vector<8x32xf32>
    %71 = arith.addf %67, %70 : vector<8x32xf32>
    %72 = vector.extract_strided_slice %71 {offsets = [0, 0], sizes = [8, 16], strides = [1, 1]} : vector<8x32xf32> to vector<8x16xf32>
    %73 = vector.extract_strided_slice %71 {offsets = [0, 16], sizes = [8, 16], strides = [1, 1]} : vector<8x32xf32> to vector<8x16xf32>
    %74 = arith.negf %73 : vector<8x16xf32>
    %75 = math.exp %74 : vector<8x16xf32>
    %cst_62 = arith.constant 1.000000e+00 : f32
    %76 = vector.broadcast %cst_62 : f32 to vector<8x16xf32>
    %77 = arith.addf %76, %75 : vector<8x16xf32>
    %78 = arith.divf %76, %77 : vector<8x16xf32>
    %79 = arith.mulf %72, %78 : vector<8x16xf32>
    %80 = vector.broadcast %1 : vector<8x1xf32> to vector<8x16xf32>
    %81 = arith.mulf %79, %80 : vector<8x16xf32>
    %c2_63 = arith.constant 2 : index
    %c0_64 = arith.constant 0 : index
    %82 = vector.load %arg18[%c2_63, %c0_64] : memref<12x16xf32, #tpu.memory_space<vmem>>, vector<8x16xf32>
    tpu.vector_store %arg18[%c2_63, %c0_64], %81 {strides = array<i32>} : memref<12x16xf32, #tpu.memory_space<vmem>>, vector<8x16xf32>,
    %c0_65 = arith.constant 0 : index
    %c0_66 = arith.constant 0 : index
    %83 = vector.load %arg18[%c0_65, %c0_66] : memref<12x16xf32, #tpu.memory_space<vmem>>, vector<8x16xf32>
    %c1_67 = arith.constant 1 : index
    %c0_68 = arith.constant 0 : index
    %c0_69 = arith.constant 0 : index
    %c0_70 = arith.constant 0 : index
    %84 = vector.load %arg8[%c1_67, %c0_68, %c0_69, %c0_70] : memref<3x5x16x32xf32, #tpu.memory_space<vmem>>, vector<1x1x16x32xf32>
    %85 = vector.shape_cast %84 : vector<1x1x16x32xf32> to vector<16x32xf32>
    %cst_71 = arith.constant dense<0.000000e+00> : vector<8x32xf32>
    %86 = tpu.matmul %83, %85, %cst_71 {dimension_numbers = #tpu.dot_dimension_numbers<[1], [0], [0], [1], [0, 0, 1, 1], [], []>} : vector<8x16xf32>, vector<16x32xf32>, vector<8x32xf32> -> vector<8x32xf32>
    %c1_72 = arith.constant 1 : index
    %c0_73 = arith.constant 0 : index
    %87 = vector.load %arg18[%c1_72, %c0_73] : memref<12x16xf32, #tpu.memory_space<vmem>>, vector<8x16xf32>
    %c1_74 = arith.constant 1 : index
    %c1_75 = arith.constant 1 : index
    %c0_76 = arith.constant 0 : index
    %c0_77 = arith.constant 0 : index
    %88 = vector.load %arg8[%c1_74, %c1_75, %c0_76, %c0_77] : memref<3x5x16x32xf32, #tpu.memory_space<vmem>>, vector<1x1x16x32xf32>
    %89 = vector.shape_cast %88 : vector<1x1x16x32xf32> to vector<16x32xf32>
    %cst_78 = arith.constant dense<0.000000e+00> : vector<8x32xf32>
    %90 = tpu.matmul %87, %89, %cst_78 {dimension_numbers = #tpu.dot_dimension_numbers<[1], [0], [0], [1], [0, 0, 1, 1], [], []>} : vector<8x16xf32>, vector<16x32xf32>, vector<8x32xf32> -> vector<8x32xf32>
    %91 = arith.addf %86, %90 : vector<8x32xf32>
    %c2_79 = arith.constant 2 : index
    %c0_80 = arith.constant 0 : index
    %92 = vector.load %arg18[%c2_79, %c0_80] : memref<12x16xf32, #tpu.memory_space<vmem>>, vector<8x16xf32>
    %c1_81 = arith.constant 1 : index
    %c2_82 = arith.constant 2 : index
    %c0_83 = arith.constant 0 : index
    %c0_84 = arith.constant 0 : index
    %93 = vector.load %arg8[%c1_81, %c2_82, %c0_83, %c0_84] : memref<3x5x16x32xf32, #tpu.memory_space<vmem>>, vector<1x1x16x32xf32>
    %94 = vector.shape_cast %93 : vector<1x1x16x32xf32> to vector<16x32xf32>
    %cst_85 = arith.constant dense<0.000000e+00> : vector<8x32xf32>
    %95 = tpu.matmul %92, %94, %cst_85 {dimension_numbers = #tpu.dot_dimension_numbers<[1], [0], [0], [1], [0, 0, 1, 1], [], []>} : vector<8x16xf32>, vector<16x32xf32>, vector<8x32xf32> -> vector<8x32xf32>
    %96 = arith.addf %91, %95 : vector<8x32xf32>
    %c3_86 = arith.constant 3 : index
    %c0_87 = arith.constant 0 : index
    %97 = vector.load %arg18[%c3_86, %c0_87] : memref<12x16xf32, #tpu.memory_space<vmem>>, vector<8x16xf32>
    %c1_88 = arith.constant 1 : index
    %c3_89 = arith.constant 3 : index
    %c0_90 = arith.constant 0 : index
    %c0_91 = arith.constant 0 : index
    %98 = vector.load %arg8[%c1_88, %c3_89, %c0_90, %c0_91] : memref<3x5x16x32xf32, #tpu.memory_space<vmem>>, vector<1x1x16x32xf32>
    %99 = vector.shape_cast %98 : vector<1x1x16x32xf32> to vector<16x32xf32>
    %cst_92 = arith.constant dense<0.000000e+00> : vector<8x32xf32>
    %100 = tpu.matmul %97, %99, %cst_92 {dimension_numbers = #tpu.dot_dimension_numbers<[1], [0], [0], [1], [0, 0, 1, 1], [], []>} : vector<8x16xf32>, vector<16x32xf32>, vector<8x32xf32> -> vector<8x32xf32>
    %101 = arith.addf %96, %100 : vector<8x32xf32>
    %c4_93 = arith.constant 4 : index
    %c0_94 = arith.constant 0 : index
    %102 = vector.load %arg18[%c4_93, %c0_94] : memref<12x16xf32, #tpu.memory_space<vmem>>, vector<8x16xf32>
    %c1_95 = arith.constant 1 : index
    %c4_96 = arith.constant 4 : index
    %c0_97 = arith.constant 0 : index
    %c0_98 = arith.constant 0 : index
    %103 = vector.load %arg8[%c1_95, %c4_96, %c0_97, %c0_98] : memref<3x5x16x32xf32, #tpu.memory_space<vmem>>, vector<1x1x16x32xf32>
    %104 = vector.shape_cast %103 : vector<1x1x16x32xf32> to vector<16x32xf32>
    %cst_99 = arith.constant dense<0.000000e+00> : vector<8x32xf32>
    %105 = tpu.matmul %102, %104, %cst_99 {dimension_numbers = #tpu.dot_dimension_numbers<[1], [0], [0], [1], [0, 0, 1, 1], [], []>} : vector<8x16xf32>, vector<16x32xf32>, vector<8x32xf32> -> vector<8x32xf32>
    %106 = arith.addf %101, %105 : vector<8x32xf32>
    %c1_100 = arith.constant 1 : index
    %c0_101 = arith.constant 0 : index
    %c0_102 = arith.constant 0 : index
    %107 = vector.load %arg9[%c1_100, %c0_101, %c0_102] : memref<3x1x32xf32, #tpu.memory_space<vmem>>, vector<1x1x32xf32>
    %108 = vector.shape_cast %107 : vector<1x1x32xf32> to vector<1x32xf32>
    %109 = vector.broadcast %108 : vector<1x32xf32> to vector<8x32xf32>
    %110 = arith.addf %106, %109 : vector<8x32xf32>
    %111 = vector.extract_strided_slice %110 {offsets = [0, 0], sizes = [8, 16], strides = [1, 1]} : vector<8x32xf32> to vector<8x16xf32>
    %112 = vector.extract_strided_slice %110 {offsets = [0, 16], sizes = [8, 16], strides = [1, 1]} : vector<8x32xf32> to vector<8x16xf32>
    %113 = arith.negf %112 : vector<8x16xf32>
    %114 = math.exp %113 : vector<8x16xf32>
    %cst_103 = arith.constant 1.000000e+00 : f32
    %115 = vector.broadcast %cst_103 : f32 to vector<8x16xf32>
    %116 = arith.addf %115, %114 : vector<8x16xf32>
    %117 = arith.divf %115, %116 : vector<8x16xf32>
    %118 = arith.mulf %111, %117 : vector<8x16xf32>
    %119 = vector.broadcast %1 : vector<8x1xf32> to vector<8x16xf32>
    %120 = arith.mulf %118, %119 : vector<8x16xf32>
    %c2_104 = arith.constant 2 : index
    %c0_105 = arith.constant 0 : index
    %121 = vector.load %arg18[%c2_104, %c0_105] : memref<12x16xf32, #tpu.memory_space<vmem>>, vector<8x16xf32>
    tpu.vector_store %arg18[%c2_104, %c0_105], %120 {strides = array<i32>} : memref<12x16xf32, #tpu.memory_space<vmem>>, vector<8x16xf32>,
    %c0_106 = arith.constant 0 : index
    %c0_107 = arith.constant 0 : index
    %122 = vector.load %arg18[%c0_106, %c0_107] : memref<12x16xf32, #tpu.memory_space<vmem>>, vector<8x16xf32>
    %c2_108 = arith.constant 2 : index
    %c0_109 = arith.constant 0 : index
    %c0_110 = arith.constant 0 : index
    %c0_111 = arith.constant 0 : index
    %123 = vector.load %arg8[%c2_108, %c0_109, %c0_110, %c0_111] : memref<3x5x16x32xf32, #tpu.memory_space<vmem>>, vector<1x1x16x32xf32>
    %124 = vector.shape_cast %123 : vector<1x1x16x32xf32> to vector<16x32xf32>
    %cst_112 = arith.constant dense<0.000000e+00> : vector<8x32xf32>
    %125 = tpu.matmul %122, %124, %cst_112 {dimension_numbers = #tpu.dot_dimension_numbers<[1], [0], [0], [1], [0, 0, 1, 1], [], []>} : vector<8x16xf32>, vector<16x32xf32>, vector<8x32xf32> -> vector<8x32xf32>
    %c1_113 = arith.constant 1 : index
    %c0_114 = arith.constant 0 : index
    %126 = vector.load %arg18[%c1_113, %c0_114] : memref<12x16xf32, #tpu.memory_space<vmem>>, vector<8x16xf32>
    %c2_115 = arith.constant 2 : index
    %c1_116 = arith.constant 1 : index
    %c0_117 = arith.constant 0 : index
    %c0_118 = arith.constant 0 : index
    %127 = vector.load %arg8[%c2_115, %c1_116, %c0_117, %c0_118] : memref<3x5x16x32xf32, #tpu.memory_space<vmem>>, vector<1x1x16x32xf32>
    %128 = vector.shape_cast %127 : vector<1x1x16x32xf32> to vector<16x32xf32>
    %cst_119 = arith.constant dense<0.000000e+00> : vector<8x32xf32>
    %129 = tpu.matmul %126, %128, %cst_119 {dimension_numbers = #tpu.dot_dimension_numbers<[1], [0], [0], [1], [0, 0, 1, 1], [], []>} : vector<8x16xf32>, vector<16x32xf32>, vector<8x32xf32> -> vector<8x32xf32>
    %130 = arith.addf %125, %129 : vector<8x32xf32>
    %c2_120 = arith.constant 2 : index
    %c0_121 = arith.constant 0 : index
    %131 = vector.load %arg18[%c2_120, %c0_121] : memref<12x16xf32, #tpu.memory_space<vmem>>, vector<8x16xf32>
    %c2_122 = arith.constant 2 : index
    %c2_123 = arith.constant 2 : index
    %c0_124 = arith.constant 0 : index
    %c0_125 = arith.constant 0 : index
    %132 = vector.load %arg8[%c2_122, %c2_123, %c0_124, %c0_125] : memref<3x5x16x32xf32, #tpu.memory_space<vmem>>, vector<1x1x16x32xf32>
    %133 = vector.shape_cast %132 : vector<1x1x16x32xf32> to vector<16x32xf32>
    %cst_126 = arith.constant dense<0.000000e+00> : vector<8x32xf32>
    %134 = tpu.matmul %131, %133, %cst_126 {dimension_numbers = #tpu.dot_dimension_numbers<[1], [0], [0], [1], [0, 0, 1, 1], [], []>} : vector<8x16xf32>, vector<16x32xf32>, vector<8x32xf32> -> vector<8x32xf32>
    %135 = arith.addf %130, %134 : vector<8x32xf32>
    %c3_127 = arith.constant 3 : index
    %c0_128 = arith.constant 0 : index
    %136 = vector.load %arg18[%c3_127, %c0_128] : memref<12x16xf32, #tpu.memory_space<vmem>>, vector<8x16xf32>
    %c2_129 = arith.constant 2 : index
    %c3_130 = arith.constant 3 : index
    %c0_131 = arith.constant 0 : index
    %c0_132 = arith.constant 0 : index
    %137 = vector.load %arg8[%c2_129, %c3_130, %c0_131, %c0_132] : memref<3x5x16x32xf32, #tpu.memory_space<vmem>>, vector<1x1x16x32xf32>
    %138 = vector.shape_cast %137 : vector<1x1x16x32xf32> to vector<16x32xf32>
    %cst_133 = arith.constant dense<0.000000e+00> : vector<8x32xf32>
    %139 = tpu.matmul %136, %138, %cst_133 {dimension_numbers = #tpu.dot_dimension_numbers<[1], [0], [0], [1], [0, 0, 1, 1], [], []>} : vector<8x16xf32>, vector<16x32xf32>, vector<8x32xf32> -> vector<8x32xf32>
    %140 = arith.addf %135, %139 : vector<8x32xf32>
    %c4_134 = arith.constant 4 : index
    %c0_135 = arith.constant 0 : index
    %141 = vector.load %arg18[%c4_134, %c0_135] : memref<12x16xf32, #tpu.memory_space<vmem>>, vector<8x16xf32>
    %c2_136 = arith.constant 2 : index
    %c4_137 = arith.constant 4 : index
    %c0_138 = arith.constant 0 : index
    %c0_139 = arith.constant 0 : index
    %142 = vector.load %arg8[%c2_136, %c4_137, %c0_138, %c0_139] : memref<3x5x16x32xf32, #tpu.memory_space<vmem>>, vector<1x1x16x32xf32>
    %143 = vector.shape_cast %142 : vector<1x1x16x32xf32> to vector<16x32xf32>
    %cst_140 = arith.constant dense<0.000000e+00> : vector<8x32xf32>
    %144 = tpu.matmul %141, %143, %cst_140 {dimension_numbers = #tpu.dot_dimension_numbers<[1], [0], [0], [1], [0, 0, 1, 1], [], []>} : vector<8x16xf32>, vector<16x32xf32>, vector<8x32xf32> -> vector<8x32xf32>
    %145 = arith.addf %140, %144 : vector<8x32xf32>
    %c2_141 = arith.constant 2 : index
    %c0_142 = arith.constant 0 : index
    %c0_143 = arith.constant 0 : index
    %146 = vector.load %arg9[%c2_141, %c0_142, %c0_143] : memref<3x1x32xf32, #tpu.memory_space<vmem>>, vector<1x1x32xf32>
    %147 = vector.shape_cast %146 : vector<1x1x32xf32> to vector<1x32xf32>
    %148 = vector.broadcast %147 : vector<1x32xf32> to vector<8x32xf32>
    %149 = arith.addf %145, %148 : vector<8x32xf32>
    %150 = vector.extract_strided_slice %149 {offsets = [0, 0], sizes = [8, 16], strides = [1, 1]} : vector<8x32xf32> to vector<8x16xf32>
    %151 = vector.extract_strided_slice %149 {offsets = [0, 16], sizes = [8, 16], strides = [1, 1]} : vector<8x32xf32> to vector<8x16xf32>
    %152 = arith.negf %151 : vector<8x16xf32>
    %153 = math.exp %152 : vector<8x16xf32>
    %cst_144 = arith.constant 1.000000e+00 : f32
    %154 = vector.broadcast %cst_144 : f32 to vector<8x16xf32>
    %155 = arith.addf %154, %153 : vector<8x16xf32>
    %156 = arith.divf %154, %155 : vector<8x16xf32>
    %157 = arith.mulf %150, %156 : vector<8x16xf32>
    %c0_145 = arith.constant 0 : index
    %c0_146 = arith.constant 0 : index
    %158 = vector.load %arg10[%c0_145, %c0_146] : memref<16x16xf32, #tpu.memory_space<vmem>>, vector<16x16xf32>
    %cst_147 = arith.constant dense<0.000000e+00> : vector<8x16xf32>
    %159 = tpu.matmul %157, %158, %cst_147 {dimension_numbers = #tpu.dot_dimension_numbers<[1], [0], [0], [1], [0, 0, 1, 1], [], []>} : vector<8x16xf32>, vector<16x16xf32>, vector<8x16xf32> -> vector<8x16xf32>
    %c0_148 = arith.constant 0 : index
    %c0_149 = arith.constant 0 : index
    %160 = vector.load %arg11[%c0_148, %c0_149] : memref<1x16xf32, #tpu.memory_space<vmem>>, vector<1x16xf32>
    %161 = vector.broadcast %160 : vector<1x16xf32> to vector<8x16xf32>
    %162 = arith.addf %159, %161 : vector<8x16xf32>
    %163 = arith.addf %162, %120 : vector<8x16xf32>
    %cst_150 = arith.constant 0.707106769 : f32
    %164 = vector.broadcast %cst_150 : f32 to vector<8x16xf32>
    %165 = arith.mulf %163, %164 : vector<8x16xf32>
    %cst_151 = arith.constant dense<0.000000e+00> : vector<8x8xf32>
    %166 = tpu.matmul %165, %157, %cst_151 {dimension_numbers = #tpu.dot_dimension_numbers<[1], [1], [0], [0], [0, 0, 1, 0], [], []>} : vector<8x16xf32>, vector<8x16xf32>, vector<8x8xf32> -> vector<8x8xf32>
    %cst_152 = arith.constant 5.000000e-01 : f32
    %167 = vector.broadcast %cst_152 : f32 to vector<1x8xf32>
    %168 = arith.cmpf ogt, %3, %167 : vector<1x8xf32>
    %cst_153 = arith.constant -1.000000e+30 : f32
    %169 = vector.shape_cast %168 : vector<1x8xi1> to vector<1x8xi1>
    %170 = vector.broadcast %169 : vector<1x8xi1> to vector<8x8xi1>
    %171 = vector.broadcast %cst_153 : f32 to vector<8x8xf32>
    %172 = arith.select %170, %171, %166 : vector<8x8xi1>, vector<8x8xf32>
    %cst_154 = arith.constant dense<0xFF800000> : vector<8xf32>
    %173 = vector.multi_reduction <maximumf>, %172, %cst_154 [1] : vector<8x8xf32> to vector<8xf32>
    %174 = vector.shape_cast %173 : vector<8xf32> to vector<8x1xf32>
    %175 = vector.broadcast %174 : vector<8x1xf32> to vector<8x8xf32>
    %176 = arith.subf %172, %175 : vector<8x8xf32>
    %177 = math.exp %176 : vector<8x8xf32>
    %cst_155 = arith.constant dense<0.000000e+00> : vector<8xf32>
    %178 = vector.multi_reduction <add>, %177, %cst_155 [1] : vector<8x8xf32> to vector<8xf32>
    %179 = vector.shape_cast %178 : vector<8xf32> to vector<8x1xf32>
    %180 = tpu.reciprocal %179 {approx = true} : vector<8x1xf32> -> vector<8x1xf32>
    %181 = vector.broadcast %180 : vector<8x1xf32> to vector<8x8xf32>
    %182 = arith.mulf %177, %181 : vector<8x8xf32>
    %cst_156 = arith.constant dense<0.000000e+00> : vector<8x16xf32>
    %183 = tpu.matmul %182, %157, %cst_156 {dimension_numbers = #tpu.dot_dimension_numbers<[1], [0], [0], [1], [0, 0, 1, 1], [], []>} : vector<8x8xf32>, vector<8x16xf32>, vector<8x16xf32> -> vector<8x16xf32>
    %cst_157 = arith.constant 2.82842708 : f32
    %184 = vector.broadcast %cst_157 : f32 to vector<8x16xf32>
    %185 = arith.mulf %183, %184 : vector<8x16xf32>
    %c0_158 = arith.constant 0 : index
    %c0_159 = arith.constant 0 : index
    %186 = vector.load %arg12[%c0_158, %c0_159] : memref<16x16xf32, #tpu.memory_space<vmem>>, vector<16x16xf32>
    %cst_160 = arith.constant dense<0.000000e+00> : vector<8x16xf32>
    %187 = tpu.matmul %185, %186, %cst_160 {dimension_numbers = #tpu.dot_dimension_numbers<[1], [0], [0], [1], [0, 0, 1, 1], [], []>} : vector<8x16xf32>, vector<16x16xf32>, vector<8x16xf32> -> vector<8x16xf32>
    %c0_161 = arith.constant 0 : index
    %c0_162 = arith.constant 0 : index
    %188 = vector.load %arg13[%c0_161, %c0_162] : memref<1x16xf32, #tpu.memory_space<vmem>>, vector<1x16xf32>
    %189 = vector.broadcast %188 : vector<1x16xf32> to vector<8x16xf32>
    %190 = arith.addf %187, %189 : vector<8x16xf32>
    %191 = arith.addf %190, %157 : vector<8x16xf32>
    %cst_163 = arith.constant 0.707106769 : f32
    %192 = vector.broadcast %cst_163 : f32 to vector<8x16xf32>
    %193 = arith.mulf %191, %192 : vector<8x16xf32>
    %194 = arith.negf %193 : vector<8x16xf32>
    %195 = math.exp %194 : vector<8x16xf32>
    %cst_164 = arith.constant 1.000000e+00 : f32
    %196 = vector.broadcast %cst_164 : f32 to vector<8x16xf32>
    %197 = arith.addf %196, %195 : vector<8x16xf32>
    %198 = arith.divf %196, %197 : vector<8x16xf32>
    %199 = arith.mulf %157, %198 : vector<8x16xf32>
    %c0_165 = arith.constant 0 : index
    %c0_166 = arith.constant 0 : index
    %200 = vector.load %arg14[%c0_165, %c0_166] : memref<16x32xf32, #tpu.memory_space<vmem>>, vector<16x32xf32>
    %cst_167 = arith.constant dense<0.000000e+00> : vector<8x32xf32>
    %201 = tpu.matmul %199, %200, %cst_167 {dimension_numbers = #tpu.dot_dimension_numbers<[1], [0], [0], [1], [0, 0, 1, 1], [], []>} : vector<8x16xf32>, vector<16x32xf32>, vector<8x32xf32> -> vector<8x32xf32>
    %c0_168 = arith.constant 0 : index
    %c0_169 = arith.constant 0 : index
    %202 = vector.load %arg15[%c0_168, %c0_169] : memref<1x32xf32, #tpu.memory_space<vmem>>, vector<1x32xf32>
    %203 = vector.broadcast %202 : vector<1x32xf32> to vector<8x32xf32>
    %204 = arith.addf %201, %203 : vector<8x32xf32>
    %205 = vector.broadcast %1 : vector<8x1xf32> to vector<8x32xf32>
    %206 = arith.mulf %204, %205 : vector<8x32xf32>
    %c0_170 = arith.constant 0 : index
    %c0_171 = arith.constant 0 : index
    %c0_172 = arith.constant 0 : index
    %207 = vector.load %arg16[%c0_170, %c0_171, %c0_172] : memref<1x8x32xf32, #tpu.memory_space<vmem>>, vector<1x8x32xf32>
    %208 = vector.shape_cast %207 : vector<1x8x32xf32> to vector<8x32xf32>
    %209 = vector.shape_cast %206 : vector<8x32xf32> to vector<1x8x32xf32>
    tpu.vector_store %arg16[%c0_170, %c0_171, %c0_172], %209 {strides = array<i32>} : memref<1x8x32xf32, #tpu.memory_space<vmem>>, vector<1x8x32xf32>,
    %210 = arith.addf %206, %31 : vector<8x32xf32>
    %cst_173 = arith.constant 0.707106769 : f32
    %211 = vector.broadcast %cst_173 : f32 to vector<8x32xf32>
    %212 = arith.mulf %210, %211 : vector<8x32xf32>
    %c0_174 = arith.constant 0 : index
    %c0_175 = arith.constant 0 : index
    %c0_176 = arith.constant 0 : index
    %213 = vector.load %arg17[%c0_174, %c0_175, %c0_176] : memref<1x8x32xf32, #tpu.memory_space<vmem>>, vector<1x8x32xf32>
    %214 = vector.shape_cast %213 : vector<1x8x32xf32> to vector<8x32xf32>
    %215 = vector.shape_cast %212 : vector<8x32xf32> to vector<1x8x32xf32>
    tpu.vector_store %arg17[%c0_174, %c0_175, %c0_176], %215 {strides = array<i32>} : memref<1x8x32xf32, #tpu.memory_space<vmem>>, vector<1x8x32xf32>,
    return
  }
  func.func @transform_0(%arg0: i32) -> (i32, i32, i32) {
    %c0_i32 = arith.constant 0 : i32
    %c0_i32_0 = arith.constant 0 : i32
    %c0_i32_1 = arith.constant 0 : i32
    return %arg0, %c0_i32, %c0_i32_0 : i32, i32, i32
  }
  func.func @transform_1(%arg0: i32) -> (i32, i32, i32) {
    %c0_i32 = arith.constant 0 : i32
    %c0_i32_0 = arith.constant 0 : i32
    %c0_i32_1 = arith.constant 0 : i32
    return %arg0, %c0_i32, %c0_i32_0 : i32, i32, i32
  }
  func.func @transform_2(%arg0: i32) -> (i32, i32, i32) {
    %c0_i32 = arith.constant 0 : i32
    %c0_i32_0 = arith.constant 0 : i32
    %c0_i32_1 = arith.constant 0 : i32
    return %arg0, %c0_i32, %c0_i32_0 : i32, i32, i32
  }
  func.func @transform_3(%arg0: i32) -> (i32, i32) {
    %c0_i32 = arith.constant 0 : i32
    %c0_i32_0 = arith.constant 0 : i32
    %c0_i32_1 = arith.constant 0 : i32
    return %c0_i32, %c0_i32_0 : i32, i32
  }
  func.func @transform_4(%arg0: i32) -> (i32, i32) {
    %c0_i32 = arith.constant 0 : i32
    %c0_i32_0 = arith.constant 0 : i32
    %c0_i32_1 = arith.constant 0 : i32
    return %c0_i32, %c0_i32_0 : i32, i32
  }
  func.func @transform_5(%arg0: i32) -> (i32, i32) {
    %c0_i32 = arith.constant 0 : i32
    %c0_i32_0 = arith.constant 0 : i32
    %c0_i32_1 = arith.constant 0 : i32
    return %c0_i32, %c0_i32_0 : i32, i32
  }
  func.func @transform_6(%arg0: i32) -> (i32, i32) {
    %c0_i32 = arith.constant 0 : i32
    %c0_i32_0 = arith.constant 0 : i32
    %c0_i32_1 = arith.constant 0 : i32
    return %c0_i32, %c0_i32_0 : i32, i32
  }
  func.func @transform_7(%arg0: i32) -> (i32, i32, i32, i32) {
    %c0_i32 = arith.constant 0 : i32
    %c0_i32_0 = arith.constant 0 : i32
    %c0_i32_1 = arith.constant 0 : i32
    %c0_i32_2 = arith.constant 0 : i32
    %c0_i32_3 = arith.constant 0 : i32
    return %c0_i32, %c0_i32_0, %c0_i32_1, %c0_i32_2 : i32, i32, i32, i32
  }
  func.func @transform_8(%arg0: i32) -> (i32, i32, i32) {
    %c0_i32 = arith.constant 0 : i32
    %c0_i32_0 = arith.constant 0 : i32
    %c0_i32_1 = arith.constant 0 : i32
    %c0_i32_2 = arith.constant 0 : i32
    return %c0_i32, %c0_i32_0, %c0_i32_1 : i32, i32, i32
  }
  func.func @transform_9(%arg0: i32) -> (i32, i32) {
    %c0_i32 = arith.constant 0 : i32
    %c0_i32_0 = arith.constant 0 : i32
    %c0_i32_1 = arith.constant 0 : i32
    return %c0_i32, %c0_i32_0 : i32, i32
  }
  func.func @transform_10(%arg0: i32) -> (i32, i32) {
    %c0_i32 = arith.constant 0 : i32
    %c0_i32_0 = arith.constant 0 : i32
    %c0_i32_1 = arith.constant 0 : i32
    return %c0_i32, %c0_i32_0 : i32, i32
  }
  func.func @transform_11(%arg0: i32) -> (i32, i32) {
    %c0_i32 = arith.constant 0 : i32
    %c0_i32_0 = arith.constant 0 : i32
    %c0_i32_1 = arith.constant 0 : i32
    return %c0_i32, %c0_i32_0 : i32, i32
  }
  func.func @transform_12(%arg0: i32) -> (i32, i32) {
    %c0_i32 = arith.constant 0 : i32
    %c0_i32_0 = arith.constant 0 : i32
    %c0_i32_1 = arith.constant 0 : i32
    return %c0_i32, %c0_i32_0 : i32, i32
  }
  func.func @transform_13(%arg0: i32) -> (i32, i32) {
    %c0_i32 = arith.constant 0 : i32
    %c0_i32_0 = arith.constant 0 : i32
    %c0_i32_1 = arith.constant 0 : i32
    return %c0_i32, %c0_i32_0 : i32, i32
  }
  func.func @transform_14(%arg0: i32) -> (i32, i32) {
    %c0_i32 = arith.constant 0 : i32
    %c0_i32_0 = arith.constant 0 : i32
    %c0_i32_1 = arith.constant 0 : i32
    return %c0_i32, %c0_i32_0 : i32, i32
  }
  func.func @transform_15(%arg0: i32) -> (i32, i32, i32) {
    %c0_i32 = arith.constant 0 : i32
    %c0_i32_0 = arith.constant 0 : i32
    %c0_i32_1 = arith.constant 0 : i32
    return %arg0, %c0_i32, %c0_i32_0 : i32, i32, i32
  }
  func.func @transform_16(%arg0: i32) -> (i32, i32, i32) {
    %c0_i32 = arith.constant 0 : i32
    %c0_i32_0 = arith.constant 0 : i32
    %c0_i32_1 = arith.constant 0 : i32
    return %arg0, %c0_i32, %c0_i32_0 : i32, i32, i32
  }
}

</mosaic_0001>

<llo_original>
// kernel: tpu_custom_call.1
$region0: #{tpu_custom_call.1}
  #allocation0 [shape = 'u32[]', space=smem, size = 0x4, offset = 0x4, fixed_abs, tag = 'smem constant byte address 0x4 - core index']
  #allocation1 [shape = 'u32[144,128]{1,0:T(1,128)}', space=vmem, size = 0x12000, scoped, tag = 'internal scratch']
  #allocation2 [shape = 'f32[12,16]{1,0:T(8,128)}', space=vmem, size = 0x2000, scoped, tag = 'scratch operand']
  %s0 = inlined_call_operand.hbm [shape: f32[2,8,32], index: 0, kind: input, shape index: {}]
  %s1 = inlined_call_operand.hbm [shape: f32[2,8,1], index: 1, kind: input, shape index: {}]
  %s2 = inlined_call_operand.hbm [shape: f32[2,1,8], index: 2, kind: input, shape index: {}]
  %s3 = inlined_call_operand.hbm [shape: f32[1,32], index: 3, kind: input, shape index: {}]
  %s4 = inlined_call_operand.hbm [shape: f32[1,32], index: 4, kind: input, shape index: {}]
  %s5 = inlined_call_operand.hbm [shape: f32[32,16], index: 5, kind: input, shape index: {}]
  %s6 = inlined_call_operand.hbm [shape: f32[1,16], index: 6, kind: input, shape index: {}]
  %s7 = inlined_call_operand.hbm [shape: f32[3,5,16,32], index: 7, kind: input, shape index: {}]
  %s8 = inlined_call_operand.hbm [shape: f32[3,1,32], index: 8, kind: input, shape index: {}]
  %s9 = inlined_call_operand.hbm [shape: f32[16,16], index: 9, kind: input, shape index: {}]
  %s10 = inlined_call_operand.hbm [shape: f32[1,16], index: 10, kind: input, shape index: {}]
  %s11 = inlined_call_operand.hbm [shape: f32[16,16], index: 11, kind: input, shape index: {}]
  %s12 = inlined_call_operand.hbm [shape: f32[1,16], index: 12, kind: input, shape index: {}]
  %s13 = inlined_call_operand.hbm [shape: f32[16,32], index: 13, kind: input, shape index: {}]
  %s14 = inlined_call_operand.hbm [shape: f32[1,32], index: 14, kind: input, shape index: {}]
  %s15 = inlined_call_operand.hbm [shape: f32[2,8,32], index: 15, kind: output, shape index: {0}]
  %s16 = inlined_call_operand.hbm [shape: f32[2,8,32], index: 16, kind: output, shape index: {1}]
  %17 = xla_tuple %s15, %s16
  %s18 = sld [smem:[#allocation0]]
  $region161: #{tpu_custom_call.1} parent=0
    _
  %s20 = ssub.s32 1, %s18
  %s21 = scalar_select 0, %s20, %s18
  $region1: #{tpu_custom_call.1} parent=0
    #allocation3 [shape = 'u8[8192]{0}', space=vmem, size = 0x2000, scoped, tag = 'input window, operand 0']
    #allocation4 [shape = 's32[2]{0}', space=sflag, size = 0x8, scoped, tag = 'scoped memory for tpu_custom_call.1']
    #allocation5 [shape = 's32[2]{0}', space=sflag, size = 0x8, scoped, tag = 'scoped memory for tpu_custom_call.1']
    #allocation6 [shape = 'u8[8192]{0}', space=vmem, size = 0x2000, scoped, tag = 'input window, operand 1']
    #allocation7 [shape = 's32[2]{0}', space=sflag, size = 0x8, scoped, tag = 'scoped memory for tpu_custom_call.1']
    #allocation8 [shape = 'u8[1024]{0}', space=vmem, size = 0x400, scoped, tag = 'input window, operand 2']
    #allocation9 [shape = 'u8[512]{0}', space=vmem, size = 0x400, scoped, tag = 'input window, operand 3, single buffered']
    #allocation10 [shape = 's32[1]{0}', space=sflag, size = 0x4, scoped, tag = 'scoped memory for tpu_custom_call.1']
    #allocation11 [shape = 'u8[512]{0}', space=vmem, size = 0x400, scoped, tag = 'input window, operand 4, single buffered']
    #allocation12 [shape = 'u8[16384]{0}', space=vmem, size = 0x4000, scoped, tag = 'input window, operand 5, single buffered']
    #allocation13 [shape = 's32[1]{0}', space=sflag, size = 0x4, scoped, tag = 'scoped memory for tpu_custom_call.1']
    #allocation14 [shape = 'u8[512]{0}', space=vmem, size = 0x400, scoped, tag = 'input window, operand 6, single buffered']
    #allocation15 [shape = 'u8[122880]{0}', space=vmem, size = 0x1e000, scoped, tag = 'input window, operand 7, single buffered']
    #allocation16 [shape = 's32[1]{0}', space=sflag, size = 0x4, scoped, tag = 'scoped memory for tpu_custom_call.1']
    #allocation17 [shape = 'u8[1536]{0}', space=vmem, size = 0x800, scoped, tag = 'input window, operand 8, single buffered']
    #allocation18 [shape = 'u8[8192]{0}', space=vmem, size = 0x2000, scoped, tag = 'input window, operand 9, single buffered']
    #allocation19 [shape = 's32[1]{0}', space=sflag, size = 0x4, scoped, tag = 'scoped memory for tpu_custom_call.1']
    #allocation20 [shape = 'u8[512]{0}', space=vmem, size = 0x400, scoped, tag = 'input window, operand 10, single buffered']
    #allocation21 [shape = 'u8[8192]{0}', space=vmem, size = 0x2000, scoped, tag = 'input window, operand 11, single buffered']
    #allocation22 [shape = 's32[1]{0}', space=sflag, size = 0x4, scoped, tag = 'scoped memory for tpu_custom_call.1']
    #allocation23 [shape = 'u8[512]{0}', space=vmem, size = 0x400, scoped, tag = 'input window, operand 12, single buffered']
    #allocation24 [shape = 'u8[8192]{0}', space=vmem, size = 0x2000, scoped, tag = 'input window, operand 13, single buffered']
    #allocation25 [shape = 's32[1]{0}', space=sflag, size = 0x4, scoped, tag = 'scoped memory for tpu_custom_call.1']
    #allocation26 [shape = 'u8[512]{0}', space=vmem, size = 0x400, scoped, tag = 'input window, operand 14, single buffered']
    #allocation27 [shape = 'u8[8192]{0}', space=vmem, size = 0x2000, scoped, tag = 'output window, operand 0']
    #allocation28 [shape = 'u8[8192]{0}', space=vmem, size = 0x2000, scoped, tag = 'output window, operand 1']
    #allocation29 [shape = 's32[2]{0}', space=sflag, size = 0x8, scoped, tag = 'scoped memory for tpu_custom_call.1']
    %22 = vsyncpa [#allocation4], 0
    %s23 = scalar_lea.sflag [#allocation4], 1
    %24 = vsyncpa %s23, 0
    %25 = vsyncpa [#allocation7], 0
    %s26 = scalar_lea.sflag [#allocation7], 1
    %27 = vsyncpa %s26, 0
    %28 = vsyncpa [#allocation10], 0
    %29 = vsyncpa [#allocation13], 0
    %30 = vsyncpa [#allocation16], 0
    %31 = vsyncpa [#allocation19], 0
    %32 = vsyncpa [#allocation22], 0
    %33 = vsyncpa [#allocation25], 0
    %34 = vsyncpa [#allocation5], 0
    %s35 = scalar_lea.sflag [#allocation5], 1
    %36 = vsyncpa %s35, 0
    %37 = vsyncpa [#allocation29], 0
    %s38 = scalar_lea.sflag [#allocation29], 1
    %39 = vsyncpa %s38, 0
    loop: start=0, step=1, limit=4
    $region2: #{tpu_custom_call.1} parent=1 // loop_pre_header
      _
    $region3: #{tpu_custom_call.1} parent=1 // loop_header
      %s41 = sphi 0, %s45
      %p42 = scmp.ge.s32.totalorder %s41, 4
      %s51 = sphi 0, %s53
      %s54 = sphi 0, %s51
      %s55 = sphi 0, %s54
      %s71 = sphi 0, %s55
      %s77 = sphi 0, %s79
      %s80 = sphi 0, %s77
      %s81 = sphi 0, %s80
      %s97 = sphi 0, %s81
      %s103 = sphi 0, %s105
      %s106 = sphi 0, %s103
      %s107 = sphi 0, %s106
      %s123 = sphi 0, %s107
      %s127 = sphi 0, %s127
      %s129 = sphi 0, %s127
      %s130 = sphi 0, %s129
      %s144 = sphi 0, %s130
      %s148 = sphi 0, %s148
      %s150 = sphi 0, %s148
      %s151 = sphi 0, %s150
      %s165 = sphi 0, %s151
      %s169 = sphi 0, %s169
      %s171 = sphi 0, %s169
      %s172 = sphi 0, %s171
      %s186 = sphi 0, %s172
      %s190 = sphi 0, %s190
      %s192 = sphi 0, %s190
      %s193 = sphi 0, %s192
      %s207 = sphi 0, %s193
      %s211 = sphi 0, %s211
      %s213 = sphi 0, %s211
      %s214 = sphi 0, %s213
      %s228 = sphi 0, %s214
      %s232 = sphi 0, %s232
      %s234 = sphi 0, %s232
      %s235 = sphi 0, %s234
      %s249 = sphi 0, %s235
      %s253 = sphi 0, %s253
      %s255 = sphi 0, %s253
      %s256 = sphi 0, %s255
      %s270 = sphi 0, %s256
      %s274 = sphi 0, %s274
      %s276 = sphi 0, %s274
      %s277 = sphi 0, %s276
      %s291 = sphi 0, %s277
      %s295 = sphi 0, %s295
      %s297 = sphi 0, %s295
      %s298 = sphi 0, %s297
      %s312 = sphi 0, %s298
      %s316 = sphi 0, %s316
      %s318 = sphi 0, %s316
      %s319 = sphi 0, %s318
      %s333 = sphi 0, %s319
      %s337 = sphi 0, %s337
      %s339 = sphi 0, %s337
      %s340 = sphi 0, %s339
      %s354 = sphi 0, %s340
      %s358 = sphi 0, %s358
      %s360 = sphi 0, %s358
      %s361 = sphi 0, %s360
      %s375 = sphi 0, %s361
      %s381 = sphi 0, %s383
      %s384 = sphi 0, %s381
      %s385 = sphi 0, %s384
      %s401 = sphi 0, %s385
      %s407 = sphi 0, %s409
      %s410 = sphi 0, %s407
      %s411 = sphi 0, %s410
      %s427 = sphi 0, %s411
    $region4: #{tpu_custom_call.1} parent=1 // loop_header_branch
      %44 = sbr.rel (%p42) target = $region8
    $region5: #{tpu_custom_call.1} parent=1 // loop_body
      %s46 = ssub.s32 %s41, 1
      %s47 = ssub.s32 %s41, 2
      %s48 = sadd.s32 %s41, 1
      %s49 = ssub.s32 %s41, %s48
      %p50 = scmp.eq.s32.totalorder %s49, 0
      %s52 = sadd.s32 %s51, 1
      %s53 = scalar_select %p50, %s51, %s52
      %p56 = pneg %p50
      %p57 = scmp.eq.s32.totalorder %s41, 1
      %p58 = por %p56, %p57
      %p59 = scmp.ne.s32.totalorder %s51, %s54
      %p60 = scmp.eq.s32.totalorder %s41, 0
      %p61 = por %p59, %p60
      %p62 = scmp.ne.s32.totalorder %s51, %s54
      %p63 = scmp.eq.s32.totalorder %s46, 1
      %p64 = por %p62, %p63
      %p65 = scmp.ne.s32.totalorder %s54, %s55
      %p66 = scmp.eq.s32.totalorder %s46, 0
      %p67 = por %p65, %p66
      %p68 = scmp.ne.s32.totalorder %s54, %s55
      %p69 = scmp.eq.s32.totalorder %s47, 1
      %p70 = por %p68, %p69
      %p72 = scmp.ne.s32.totalorder %s55, %s71
      %p73 = scmp.eq.s32.totalorder %s47, 0
      %p74 = por %p72, %p73
      %s75 = ssub.s32 %s41, %s48
      %p76 = scmp.eq.s32.totalorder %s75, 0
      %s78 = sadd.s32 %s77, 1
      %s79 = scalar_select %p76, %s77, %s78
      %p82 = pneg %p76
      %p83 = scmp.eq.s32.totalorder %s41, 1
      %p84 = por %p82, %p83
      %p85 = scmp.ne.s32.totalorder %s77, %s80
      %p86 = scmp.eq.s32.totalorder %s41, 0
      %p87 = por %p85, %p86
      %p88 = scmp.ne.s32.totalorder %s77, %s80
      %p89 = scmp.eq.s32.totalorder %s46, 1
      %p90 = por %p88, %p89
      %p91 = scmp.ne.s32.totalorder %s80, %s81
      %p92 = scmp.eq.s32.totalorder %s46, 0
      %p93 = por %p91, %p92
      %p94 = scmp.ne.s32.totalorder %s80, %s81
      %p95 = scmp.eq.s32.totalorder %s47, 1
      %p96 = por %p94, %p95
      %p98 = scmp.ne.s32.totalorder %s81, %s97
      %p99 = scmp.eq.s32.totalorder %s47, 0
      %p100 = por %p98, %p99
      %s101 = ssub.s32 %s41, %s48
      %p102 = scmp.eq.s32.totalorder %s101, 0
      %s104 = sadd.s32 %s103, 1
      %s105 = scalar_select %p102, %s103, %s104
      %p108 = pneg %p102
      %p109 = scmp.eq.s32.totalorder %s41, 1
      %p110 = por %p108, %p109
      %p111 = scmp.ne.s32.totalorder %s103, %s106
      %p112 = scmp.eq.s32.totalorder %s41, 0
      %p113 = por %p111, %p112
      %p114 = scmp.ne.s32.totalorder %s103, %s106
      %p115 = scmp.eq.s32.totalorder %s46, 1
      %p116 = por %p114, %p115
      %p117 = scmp.ne.s32.totalorder %s106, %s107
      %p118 = scmp.eq.s32.totalorder %s46, 0
      %p119 = por %p117, %p118
      %p120 = scmp.ne.s32.totalorder %s106, %s107
      %p121 = scmp.eq.s32.totalorder %s47, 1
      %p122 = por %p120, %p121
      %p124 = scmp.ne.s32.totalorder %s107, %s123
      %p125 = scmp.eq.s32.totalorder %s47, 0
      %p126 = por %p124, %p125
      %s128 = sadd.s32 %s127, 1
      %p131 = scmp.eq.s32.totalorder %s41, 1
      %p132 = scmp.ne.s32.totalorder %s127, %s129
      %p133 = scmp.eq.s32.totalorder %s41, 0
      %p134 = por %p132, %p133
      %p135 = scmp.ne.s32.totalorder %s127, %s129
      %p136 = scmp.eq.s32.totalorder %s46, 1
      %p137 = por %p135, %p136
      %p138 = scmp.ne.s32.totalorder %s129, %s130
      %p139 = scmp.eq.s32.totalorder %s46, 0
      %p140 = por %p138, %p139
      %p141 = scmp.ne.s32.totalorder %s129, %s130
      %p142 = scmp.eq.s32.totalorder %s47, 1
      %p143 = por %p141, %p142
      %p145 = scmp.ne.s32.totalorder %s130, %s144
      %p146 = scmp.eq.s32.totalorder %s47, 0
      %p147 = por %p145, %p146
      %s149 = sadd.s32 %s148, 1
      %p152 = scmp.eq.s32.totalorder %s41, 1
      %p153 = scmp.ne.s32.totalorder %s148, %s150
      %p154 = scmp.eq.s32.totalorder %s41, 0
      %p155 = por %p153, %p154
      %p156 = scmp.ne.s32.totalorder %s148, %s150
      %p157 = scmp.eq.s32.totalorder %s46, 1
      %p158 = por %p156, %p157
      %p159 = scmp.ne.s32.totalorder %s150, %s151
      %p160 = scmp.eq.s32.totalorder %s46, 0
      %p161 = por %p159, %p160
      %p162 = scmp.ne.s32.totalorder %s150, %s151
      %p163 = scmp.eq.s32.totalorder %s47, 1
      %p164 = por %p162, %p163
      %p166 = scmp.ne.s32.totalorder %s151, %s165
      %p167 = scmp.eq.s32.totalorder %s47, 0
      %p168 = por %p166, %p167
      %s170 = sadd.s32 %s169, 1
      %p173 = scmp.eq.s32.totalorder %s41, 1
      %p174 = scmp.ne.s32.totalorder %s169, %s171
      %p175 = scmp.eq.s32.totalorder %s41, 0
      %p176 = por %p174, %p175
      %p177 = scmp.ne.s32.totalorder %s169, %s171
      %p178 = scmp.eq.s32.totalorder %s46, 1
      %p179 = por %p177, %p178
      %p180 = scmp.ne.s32.totalorder %s171, %s172
      %p181 = scmp.eq.s32.totalorder %s46, 0
      %p182 = por %p180, %p181
      %p183 = scmp.ne.s32.totalorder %s171, %s172
      %p184 = scmp.eq.s32.totalorder %s47, 1
      %p185 = por %p183, %p184
      %p187 = scmp.ne.s32.totalorder %s172, %s186
      %p188 = scmp.eq.s32.totalorder %s47, 0
      %p189 = por %p187, %p188
      %s191 = sadd.s32 %s190, 1
      %p194 = scmp.eq.s32.totalorder %s41, 1
      %p195 = scmp.ne.s32.totalorder %s190, %s192
      %p196 = scmp.eq.s32.totalorder %s41, 0
      %p197 = por %p195, %p196
      %p198 = scmp.ne.s32.totalorder %s190, %s192
      %p199 = scmp.eq.s32.totalorder %s46, 1
      %p200 = por %p198, %p199
      %p201 = scmp.ne.s32.totalorder %s192, %s193
      %p202 = scmp.eq.s32.totalorder %s46, 0
      %p203 = por %p201, %p202
      %p204 = scmp.ne.s32.totalorder %s192, %s193
      %p205 = scmp.eq.s32.totalorder %s47, 1
      %p206 = por %p204, %p205
      %p208 = scmp.ne.s32.totalorder %s193, %s207
      %p209 = scmp.eq.s32.totalorder %s47, 0
      %p210 = por %p208, %p209
      %s212 = sadd.s32 %s211, 1
      %p215 = scmp.eq.s32.totalorder %s41, 1
      %p216 = scmp.ne.s32.totalorder %s211, %s213
      %p217 = scmp.eq.s32.totalorder %s41, 0
      %p218 = por %p216, %p217
      %p219 = scmp.ne.s32.totalorder %s211, %s213
      %p220 = scmp.eq.s32.totalorder %s46, 1
      %p221 = por %p219, %p220
      %p222 = scmp.ne.s32.totalorder %s213, %s214
      %p223 = scmp.eq.s32.totalorder %s46, 0
      %p224 = por %p222, %p223
      %p225 = scmp.ne.s32.totalorder %s213, %s214
      %p226 = scmp.eq.s32.totalorder %s47, 1
      %p227 = por %p225, %p226
      %p229 = scmp.ne.s32.totalorder %s214, %s228
      %p230 = scmp.eq.s32.totalorder %s47, 0
      %p231 = por %p229, %p230
      %s233 = sadd.s32 %s232, 1
      %p236 = scmp.eq.s32.totalorder %s41, 1
      %p237 = scmp.ne.s32.totalorder %s232, %s234
      %p238 = scmp.eq.s32.totalorder %s41, 0
      %p239 = por %p237, %p238
      %p240 = scmp.ne.s32.totalorder %s232, %s234
      %p241 = scmp.eq.s32.totalorder %s46, 1
      %p242 = por %p240, %p241
      %p243 = scmp.ne.s32.totalorder %s234, %s235
      %p244 = scmp.eq.s32.totalorder %s46, 0
      %p245 = por %p243, %p244
      %p246 = scmp.ne.s32.totalorder %s234, %s235
      %p247 = scmp.eq.s32.totalorder %s47, 1
      %p248 = por %p246, %p247
      %p250 = scmp.ne.s32.totalorder %s235, %s249
      %p251 = scmp.eq.s32.totalorder %s47, 0
      %p252 = por %p250, %p251
      %s254 = sadd.s32 %s253, 1
      %p257 = scmp.eq.s32.totalorder %s41, 1
      %p258 = scmp.ne.s32.totalorder %s253, %s255
      %p259 = scmp.eq.s32.totalorder %s41, 0
      %p260 = por %p258, %p259
      %p261 = scmp.ne.s32.totalorder %s253, %s255
      %p262 = scmp.eq.s32.totalorder %s46, 1
      %p263 = por %p261, %p262
      %p264 = scmp.ne.s32.totalorder %s255, %s256
      %p265 = scmp.eq.s32.totalorder %s46, 0
      %p266 = por %p264, %p265
      %p267 = scmp.ne.s32.totalorder %s255, %s256
      %p268 = scmp.eq.s32.totalorder %s47, 1
      %p269 = por %p267, %p268
      %p271 = scmp.ne.s32.totalorder %s256, %s270
      %p272 = scmp.eq.s32.totalorder %s47, 0
      %p273 = por %p271, %p272
      %s275 = sadd.s32 %s274, 1
      %p278 = scmp.eq.s32.totalorder %s41, 1
      %p279 = scmp.ne.s32.totalorder %s274, %s276
      %p280 = scmp.eq.s32.totalorder %s41, 0
      %p281 = por %p279, %p280
      %p282 = scmp.ne.s32.totalorder %s274, %s276
      %p283 = scmp.eq.s32.totalorder %s46, 1
      %p284 = por %p282, %p283
      %p285 = scmp.ne.s32.totalorder %s276, %s277
      %p286 = scmp.eq.s32.totalorder %s46, 0
      %p287 = por %p285, %p286
      %p288 = scmp.ne.s32.totalorder %s276, %s277
      %p289 = scmp.eq.s32.totalorder %s47, 1
      %p290 = por %p288, %p289
      %p292 = scmp.ne.s32.totalorder %s277, %s291
      %p293 = scmp.eq.s32.totalorder %s47, 0
      %p294 = por %p292, %p293
      %s296 = sadd.s32 %s295, 1
      %p299 = scmp.eq.s32.totalorder %s41, 1
      %p300 = scmp.ne.s32.totalorder %s295, %s297
      %p301 = scmp.eq.s32.totalorder %s41, 0
      %p302 = por %p300, %p301
      %p303 = scmp.ne.s32.totalorder %s295, %s297
      %p304 = scmp.eq.s32.totalorder %s46, 1
      %p305 = por %p303, %p304
      %p306 = scmp.ne.s32.totalorder %s297, %s298
      %p307 = scmp.eq.s32.totalorder %s46, 0
      %p308 = por %p306, %p307
      %p309 = scmp.ne.s32.totalorder %s297, %s298
      %p310 = scmp.eq.s32.totalorder %s47, 1
      %p311 = por %p309, %p310
      %p313 = scmp.ne.s32.totalorder %s298, %s312
      %p314 = scmp.eq.s32.totalorder %s47, 0
      %p315 = por %p313, %p314
      %s317 = sadd.s32 %s316, 1
      %p320 = scmp.eq.s32.totalorder %s41, 1
      %p321 = scmp.ne.s32.totalorder %s316, %s318
      %p322 = scmp.eq.s32.totalorder %s41, 0
      %p323 = por %p321, %p322
      %p324 = scmp.ne.s32.totalorder %s316, %s318
      %p325 = scmp.eq.s32.totalorder %s46, 1
      %p326 = por %p324, %p325
      %p327 = scmp.ne.s32.totalorder %s318, %s319
      %p328 = scmp.eq.s32.totalorder %s46, 0
      %p329 = por %p327, %p328
      %p330 = scmp.ne.s32.totalorder %s318, %s319
      %p331 = scmp.eq.s32.totalorder %s47, 1
      %p332 = por %p330, %p331
      %p334 = scmp.ne.s32.totalorder %s319, %s333
      %p335 = scmp.eq.s32.totalorder %s47, 0
      %p336 = por %p334, %p335
      %s338 = sadd.s32 %s337, 1
      %p341 = scmp.eq.s32.totalorder %s41, 1
      %p342 = scmp.ne.s32.totalorder %s337, %s339
      %p343 = scmp.eq.s32.totalorder %s41, 0
      %p344 = por %p342, %p343
      %p345 = scmp.ne.s32.totalorder %s337, %s339
      %p346 = scmp.eq.s32.totalorder %s46, 1
      %p347 = por %p345, %p346
      %p348 = scmp.ne.s32.totalorder %s339, %s340
      %p349 = scmp.eq.s32.totalorder %s46, 0
      %p350 = por %p348, %p349
      %p351 = scmp.ne.s32.totalorder %s339, %s340
      %p352 = scmp.eq.s32.totalorder %s47, 1
      %p353 = por %p351, %p352
      %p355 = scmp.ne.s32.totalorder %s340, %s354
      %p356 = scmp.eq.s32.totalorder %s47, 0
      %p357 = por %p355, %p356
      %s359 = sadd.s32 %s358, 1
      %p362 = scmp.eq.s32.totalorder %s41, 1
      %p363 = scmp.ne.s32.totalorder %s358, %s360
      %p364 = scmp.eq.s32.totalorder %s41, 0
      %p365 = por %p363, %p364
      %p366 = scmp.ne.s32.totalorder %s358, %s360
      %p367 = scmp.eq.s32.totalorder %s46, 1
      %p368 = por %p366, %p367
      %p369 = scmp.ne.s32.totalorder %s360, %s361
      %p370 = scmp.eq.s32.totalorder %s46, 0
      %p371 = por %p369, %p370
      %p372 = scmp.ne.s32.totalorder %s360, %s361
      %p373 = scmp.eq.s32.totalorder %s47, 1
      %p374 = por %p372, %p373
      %p376 = scmp.ne.s32.totalorder %s361, %s375
      %p377 = scmp.eq.s32.totalorder %s47, 0
      %p378 = por %p376, %p377
      %s379 = ssub.s32 %s41, %s48
      %p380 = scmp.eq.s32.totalorder %s379, 0
      %s382 = sadd.s32 %s381, 1
      %s383 = scalar_select %p380, %s381, %s382
      %p386 = pneg %p380
      %p387 = scmp.eq.s32.totalorder %s41, 1
      %p388 = por %p386, %p387
      %p389 = scmp.ne.s32.totalorder %s381, %s384
      %p390 = scmp.eq.s32.totalorder %s41, 0
      %p391 = por %p389, %p390
      %p392 = scmp.ne.s32.totalorder %s381, %s384
      %p393 = scmp.eq.s32.totalorder %s46, 1
      %p394 = por %p392, %p393
      %p395 = scmp.ne.s32.totalorder %s384, %s385
      %p396 = scmp.eq.s32.totalorder %s46, 0
      %p397 = por %p395, %p396
      %p398 = scmp.ne.s32.totalorder %s384, %s385
      %p399 = scmp.eq.s32.totalorder %s47, 1
      %p400 = por %p398, %p399
      %p402 = scmp.ne.s32.totalorder %s385, %s401
      %p403 = scmp.eq.s32.totalorder %s47, 0
      %p404 = por %p402, %p403
      %s405 = ssub.s32 %s41, %s48
      %p406 = scmp.eq.s32.totalorder %s405, 0
      %s408 = sadd.s32 %s407, 1
      %s409 = scalar_select %p406, %s407, %s408
      %p412 = pneg %p406
      %p413 = scmp.eq.s32.totalorder %s41, 1
      %p414 = por %p412, %p413
      %p415 = scmp.ne.s32.totalorder %s407, %s410
      %p416 = scmp.eq.s32.totalorder %s41, 0
      %p417 = por %p415, %p416
      %p418 = scmp.ne.s32.totalorder %s407, %s410
      %p419 = scmp.eq.s32.totalorder %s46, 1
      %p420 = por %p418, %p419
      %p421 = scmp.ne.s32.totalorder %s410, %s411
      %p422 = scmp.eq.s32.totalorder %s46, 0
      %p423 = por %p421, %p422
      %p424 = scmp.ne.s32.totalorder %s410, %s411
      %p425 = scmp.eq.s32.totalorder %s47, 1
      %p426 = por %p424, %p425
      %p428 = scmp.ne.s32.totalorder %s411, %s427
      %p429 = scmp.eq.s32.totalorder %s47, 0
      %p430 = por %p428, %p429
      %p431 = scmp.le.s32.totalorder 1, %s41
      %p432 = scmp.lt.s32.totalorder %s41, 3
      %p433 = pnand %p431, %p432
      %p434 = pneg %p433
      // Predicated region
      $region9: #{tpu_custom_call.1} parent=5 // pred_check
        _
      $region10: #{tpu_custom_call.1} parent=5 // pred_check_branch
        %436 = sbr.rel (%p433) target = $region12
      $region11: #{tpu_custom_call.1} parent=5 // pred_region
        %s437 = ssub.s32 %s41, 1
        // Predicated region
        $region13: #{tpu_custom_call.1} parent=11 // pred_check
          %p438 = pneg %p140
        $region14: #{tpu_custom_call.1} parent=11 // pred_check_branch
          %440 = sbr.rel (%p438) target = $region16
        $region15: #{tpu_custom_call.1} parent=11 // pred_region
          %s442 = ssub.s32 16, 16
          %443 = vsyncadd [#allocation10], %s442
          %s445 = sshll.u32 [#allocation9], 4
          %s446 = int_to_ptr.vmem [resolvable:$true] %s445
          %448 = dma.hbm_to_vmem [thread:$0]  %s3, 16, %s446, [#allocation10]
        $region16: #{tpu_custom_call.1} parent=11 // pred_fallthru
          _
        // Predicated region
        $region17: #{tpu_custom_call.1} parent=11 // pred_check
          %p449 = pneg %p161
        $region18: #{tpu_custom_call.1} parent=11 // pred_check_branch
          %451 = sbr.rel (%p449) target = $region20
        $region19: #{tpu_custom_call.1} parent=11 // pred_region
          %s453 = ssub.s32 16, 16
          %454 = vsyncadd [#allocation10], %s453
          %s456 = sshll.u32 [#allocation11], 4
          %s457 = int_to_ptr.vmem [resolvable:$true] %s456
          %459 = dma.hbm_to_vmem [thread:$0]  %s4, 16, %s457, [#allocation10]
        $region20: #{tpu_custom_call.1} parent=11 // pred_fallthru
          _
        // Predicated region
        $region21: #{tpu_custom_call.1} parent=11 // pred_check
          %p460 = pneg %p182
        $region22: #{tpu_custom_call.1} parent=11 // pred_check_branch
          %462 = sbr.rel (%p460) target = $region24
        $region23: #{tpu_custom_call.1} parent=11 // pred_region
          %s464 = ssub.s32 512, 512
          %465 = vsyncadd [#allocation13], %s464
          %s466 = sshll.u32 [#allocation12], 4
          %s467 = int_to_ptr.vmem [resolvable:$true] %s466
          %472 = dma.hbm_to_vmem [thread:$0]  %s5, 512, %s467, [#allocation13], 128, 128, 8
        $region24: #{tpu_custom_call.1} parent=11 // pred_fallthru
          _
        // Predicated region
        $region25: #{tpu_custom_call.1} parent=11 // pred_check
          %p473 = pneg %p203
        $region26: #{tpu_custom_call.1} parent=11 // pred_check_branch
          %475 = sbr.rel (%p473) target = $region28
        $region27: #{tpu_custom_call.1} parent=11 // pred_region
          %s477 = ssub.s32 16, 16
          %478 = vsyncadd [#allocation13], %s477
          %s480 = sshll.u32 [#allocation14], 4
          %s481 = int_to_ptr.vmem [resolvable:$true] %s480
          %483 = dma.hbm_to_vmem [thread:$0]  %s6, 16, %s481, [#allocation13]
        $region28: #{tpu_custom_call.1} parent=11 // pred_fallthru
          _
        // Predicated region
        $region29: #{tpu_custom_call.1} parent=11 // pred_check
          %p484 = pneg %p224
        $region30: #{tpu_custom_call.1} parent=11 // pred_check_branch
          %486 = sbr.rel (%p484) target = $region32
        $region31: #{tpu_custom_call.1} parent=11 // pred_region
          %s488 = ssub.s32 3840, 3840
          %489 = vsyncadd [#allocation16], %s488
          %s490 = sshll.u32 [#allocation15], 4
          %s491 = int_to_ptr.vmem [resolvable:$true] %s490
          %496 = dma.hbm_to_vmem [thread:$0]  %s7, 3840, %s491, [#allocation16], 128, 128, 8
        $region32: #{tpu_custom_call.1} parent=11 // pred_fallthru
          _
        // Predicated region
        $region33: #{tpu_custom_call.1} parent=11 // pred_check
          %p497 = pneg %p245
        $region34: #{tpu_custom_call.1} parent=11 // pred_check_branch
          %499 = sbr.rel (%p497) target = $region36
        $region35: #{tpu_custom_call.1} parent=11 // pred_region
          %s501 = ssub.s32 48, 48
          %502 = vsyncadd [#allocation16], %s501
          %s503 = sshll.u32 [#allocation17], 4
          %s504 = int_to_ptr.vmem [resolvable:$true] %s503
          %509 = dma.hbm_to_vmem [thread:$0]  %s8, 48, %s504, [#allocation16], 16, 16, 1
        $region36: #{tpu_custom_call.1} parent=11 // pred_fallthru
          _
        // Predicated region
        $region37: #{tpu_custom_call.1} parent=11 // pred_check
          %p510 = pneg %p266
        $region38: #{tpu_custom_call.1} parent=11 // pred_check_branch
          %512 = sbr.rel (%p510) target = $region40
        $region39: #{tpu_custom_call.1} parent=11 // pred_region
          %s514 = ssub.s32 256, 256
          %515 = vsyncadd [#allocation19], %s514
          %s516 = sshll.u32 [#allocation18], 4
          %s517 = int_to_ptr.vmem [resolvable:$true] %s516
          %522 = dma.hbm_to_vmem [thread:$0]  %s9, 256, %s517, [#allocation19], 128, 128, 8
        $region40: #{tpu_custom_call.1} parent=11 // pred_fallthru
          _
        // Predicated region
        $region41: #{tpu_custom_call.1} parent=11 // pred_check
          %p523 = pneg %p287
        $region42: #{tpu_custom_call.1} parent=11 // pred_check_branch
          %525 = sbr.rel (%p523) target = $region44
        $region43: #{tpu_custom_call.1} parent=11 // pred_region
          %s527 = ssub.s32 16, 16
          %528 = vsyncadd [#allocation19], %s527
          %s530 = sshll.u32 [#allocation20], 4
          %s531 = int_to_ptr.vmem [resolvable:$true] %s530
          %533 = dma.hbm_to_vmem [thread:$0]  %s10, 16, %s531, [#allocation19]
        $region44: #{tpu_custom_call.1} parent=11 // pred_fallthru
          _
        // Predicated region
        $region45: #{tpu_custom_call.1} parent=11 // pred_check
          %p534 = pneg %p308
        $region46: #{tpu_custom_call.1} parent=11 // pred_check_branch
          %536 = sbr.rel (%p534) target = $region48
        $region47: #{tpu_custom_call.1} parent=11 // pred_region
          %s538 = ssub.s32 256, 256
          %539 = vsyncadd [#allocation22], %s538
          %s540 = sshll.u32 [#allocation21], 4
          %s541 = int_to_ptr.vmem [resolvable:$true] %s540
          %546 = dma.hbm_to_vmem [thread:$0]  %s11, 256, %s541, [#allocation22], 128, 128, 8
        $region48: #{tpu_custom_call.1} parent=11 // pred_fallthru
          _
        // Predicated region
        $region49: #{tpu_custom_call.1} parent=11 // pred_check
          %p547 = pneg %p329
        $region50: #{tpu_custom_call.1} parent=11 // pred_check_branch
          %549 = sbr.rel (%p547) target = $region52
        $region51: #{tpu_custom_call.1} parent=11 // pred_region
          %s551 = ssub.s32 16, 16
          %552 = vsyncadd [#allocation22], %s551
          %s554 = sshll.u32 [#allocation23], 4
          %s555 = int_to_ptr.vmem [resolvable:$true] %s554
          %557 = dma.hbm_to_vmem [thread:$0]  %s12, 16, %s555, [#allocation22]
        $region52: #{tpu_custom_call.1} parent=11 // pred_fallthru
          _
        // Predicated region
        $region53: #{tpu_custom_call.1} parent=11 // pred_check
          %p558 = pneg %p350
        $region54: #{tpu_custom_call.1} parent=11 // pred_check_branch
          %560 = sbr.rel (%p558) target = $region56
        $region55: #{tpu_custom_call.1} parent=11 // pred_region
          %s562 = ssub.s32 256, 256
          %563 = vsyncadd [#allocation25], %s562
          %s564 = sshll.u32 [#allocation24], 4
          %s565 = int_to_ptr.vmem [resolvable:$true] %s564
          %570 = dma.hbm_to_vmem [thread:$0]  %s13, 256, %s565, [#allocation25], 128, 128, 8
        $region56: #{tpu_custom_call.1} parent=11 // pred_fallthru
          _
        // Predicated region
        $region57: #{tpu_custom_call.1} parent=11 // pred_check
          %p571 = pneg %p371
        $region58: #{tpu_custom_call.1} parent=11 // pred_check_branch
          %573 = sbr.rel (%p571) target = $region60
        $region59: #{tpu_custom_call.1} parent=11 // pred_region
          %s575 = ssub.s32 16, 16
          %576 = vsyncadd [#allocation25], %s575
          %s578 = sshll.u32 [#allocation26], 4
          %s579 = int_to_ptr.vmem [resolvable:$true] %s578
          %581 = dma.hbm_to_vmem [thread:$0]  %s14, 16, %s579, [#allocation25]
        $region60: #{tpu_custom_call.1} parent=11 // pred_fallthru
          _
      $region12: #{tpu_custom_call.1} parent=5 // pred_fallthru
        _
      %p582 = scmp.lt.s32.totalorder %s41, 2
      // Predicated region
      $region61: #{tpu_custom_call.1} parent=5 // pred_check
        %p583 = pneg %p582
      $region62: #{tpu_custom_call.1} parent=5 // pred_check_branch
        %585 = sbr.rel (%p583) target = $region64
      $region63: #{tpu_custom_call.1} parent=5 // pred_region
        // Predicated region
        $region65: #{tpu_custom_call.1} parent=63 // pred_check
          %p586 = pneg %p61
        $region66: #{tpu_custom_call.1} parent=63 // pred_check_branch
          %588 = sbr.rel (%p586) target = $region68
        $region67: #{tpu_custom_call.1} parent=63 // pred_region
          %s589 = sand.u32 %s51, 1
          %s590 = scalar_lea.sflag [#allocation4], %s589
          %s591 = sand.u32 %s51, 1
          %s592 = smul.addr %s591, 8
          %s593 = scalar_lea.vmem [#allocation3], %s592
          %s595 = ssub.s32 128, 128
          %596 = vsyncadd %s590, %s595
          %s597 = smul.addr %s41, 128
          %s598 = scalar_lea.hbm %s0, %s597
          %s600 = sshll.u32 %s593, 4
          %s601 = int_to_ptr.vmem [resolvable:$true] %s600
          %603 = dma.hbm_to_vmem [thread:$0]  %s598, 128, %s601, %s590
        $region68: #{tpu_custom_call.1} parent=63 // pred_fallthru
          _
        // Predicated region
        $region69: #{tpu_custom_call.1} parent=63 // pred_check
          %p604 = pneg %p87
        $region70: #{tpu_custom_call.1} parent=63 // pred_check_branch
          %606 = sbr.rel (%p604) target = $region72
        $region71: #{tpu_custom_call.1} parent=63 // pred_region
          %s607 = sand.u32 %s41, 1
          %s608 = scalar_lea.sflag [#allocation7], %s607
          %s609 = sand.u32 %s77, 1
          %s610 = smul.addr %s609, 8
          %s611 = scalar_lea.vmem [#allocation6], %s610
          %s613 = ssub.s32 128, 128
          %614 = vsyncadd %s608, %s613
          %s615 = smul.addr %s41, 128
          %s616 = scalar_lea.hbm %s1, %s615
          %s618 = sshll.u32 %s611, 4
          %s619 = int_to_ptr.vmem [resolvable:$true] %s618
          %621 = dma.hbm_to_vmem [thread:$0]  %s616, 128, %s619, %s608
        $region72: #{tpu_custom_call.1} parent=63 // pred_fallthru
          _
        // Predicated region
        $region73: #{tpu_custom_call.1} parent=63 // pred_check
          %p622 = pneg %p113
        $region74: #{tpu_custom_call.1} parent=63 // pred_check_branch
          %624 = sbr.rel (%p622) target = $region76
        $region75: #{tpu_custom_call.1} parent=63 // pred_region
          %s625 = sand.u32 %s41, 1
          %s626 = scalar_lea.sflag [#allocation7], %s625
          %s627 = sand.u32 %s103, 1
          %s628 = scalar_lea.vmem [#allocation8], %s627
          %s630 = ssub.s32 16, 16
          %631 = vsyncadd %s626, %s630
          %s632 = smul.addr %s41, 16
          %s633 = scalar_lea.hbm %s2, %s632
          %s635 = sshll.u32 %s628, 4
          %s636 = int_to_ptr.vmem [resolvable:$true] %s635
          %638 = dma.hbm_to_vmem [thread:$0]  %s633, 16, %s636, %s626
        $region76: #{tpu_custom_call.1} parent=63 // pred_fallthru
          _
      $region64: #{tpu_custom_call.1} parent=5 // pred_fallthru
        _
      %p639 = scmp.le.s32.totalorder 1, %s41
      %p640 = scmp.lt.s32.totalorder %s41, 3
      %p641 = pnand %p639, %p640
      %p642 = pneg %p641
      // Predicated region
      $region77: #{tpu_custom_call.1} parent=5 // pred_check
        _
      $region78: #{tpu_custom_call.1} parent=5 // pred_check_branch
        %644 = sbr.rel (%p641) target = $region80
      $region79: #{tpu_custom_call.1} parent=5 // pred_region
        %s645 = ssub.s32 %s41, 1
        %s646 = sand.u32 %s54, 1
        %s647 = scalar_lea.sflag [#allocation4], %s646
        %s648 = sand.u32 %s54, 1
        %s649 = smul.addr %s648, 8
        %s650 = scalar_lea.vmem [#allocation3], %s649
        // Predicated region
        $region81: #{tpu_custom_call.1} parent=79 // pred_check
          %p651 = pneg %p67
        $region82: #{tpu_custom_call.1} parent=79 // pred_check_branch
          %653 = sbr.rel (%p651) target = $region84
        $region83: #{tpu_custom_call.1} parent=79 // pred_region
          %654 = dma.done %s647, 128
        $region84: #{tpu_custom_call.1} parent=79 // pred_fallthru
          _
        %s655 = sand.u32 %s46, 1
        %s656 = scalar_lea.sflag [#allocation7], %s655
        %s657 = sand.u32 %s80, 1
        %s658 = smul.addr %s657, 8
        %s659 = scalar_lea.vmem [#allocation6], %s658
        // Predicated region
        $region85: #{tpu_custom_call.1} parent=79 // pred_check
          %p660 = pneg %p93
        $region86: #{tpu_custom_call.1} parent=79 // pred_check_branch
          %662 = sbr.rel (%p660) target = $region88
        $region87: #{tpu_custom_call.1} parent=79 // pred_region
          %663 = dma.done %s656, 128
        $region88: #{tpu_custom_call.1} parent=79 // pred_fallthru
          _
        %s664 = sand.u32 %s46, 1
        %s665 = scalar_lea.sflag [#allocation7], %s664
        %s666 = sand.u32 %s106, 1
        %s667 = scalar_lea.vmem [#allocation8], %s666
        // Predicated region
        $region89: #{tpu_custom_call.1} parent=79 // pred_check
          %p668 = pneg %p119
        $region90: #{tpu_custom_call.1} parent=79 // pred_check_branch
          %670 = sbr.rel (%p668) target = $region92
        $region91: #{tpu_custom_call.1} parent=79 // pred_region
          %671 = dma.done %s665, 16
        $region92: #{tpu_custom_call.1} parent=79 // pred_fallthru
          _
        // Predicated region
        $region93: #{tpu_custom_call.1} parent=79 // pred_check
          %p672 = pneg %p140
        $region94: #{tpu_custom_call.1} parent=79 // pred_check_branch
          %674 = sbr.rel (%p672) target = $region96
        $region95: #{tpu_custom_call.1} parent=79 // pred_region
          %675 = dma.done [#allocation10], 16
        $region96: #{tpu_custom_call.1} parent=79 // pred_fallthru
          _
        // Predicated region
        $region97: #{tpu_custom_call.1} parent=79 // pred_check
          %p676 = pneg %p161
        $region98: #{tpu_custom_call.1} parent=79 // pred_check_branch
          %678 = sbr.rel (%p676) target = $region100
        $region99: #{tpu_custom_call.1} parent=79 // pred_region
          %679 = dma.done [#allocation10], 16
        $region100: #{tpu_custom_call.1} parent=79 // pred_fallthru
          _
        // Predicated region
        $region101: #{tpu_custom_call.1} parent=79 // pred_check
          %p680 = pneg %p182
        $region102: #{tpu_custom_call.1} parent=79 // pred_check_branch
          %682 = sbr.rel (%p680) target = $region104
        $region103: #{tpu_custom_call.1} parent=79 // pred_region
          %683 = dma.done [#allocation13], 512
        $region104: #{tpu_custom_call.1} parent=79 // pred_fallthru
          _
        // Predicated region
        $region105: #{tpu_custom_call.1} parent=79 // pred_check
          %p684 = pneg %p203
        $region106: #{tpu_custom_call.1} parent=79 // pred_check_branch
          %686 = sbr.rel (%p684) target = $region108
        $region107: #{tpu_custom_call.1} parent=79 // pred_region
          %687 = dma.done [#allocation13], 16
        $region108: #{tpu_custom_call.1} parent=79 // pred_fallthru
          _
        // Predicated region
        $region109: #{tpu_custom_call.1} parent=79 // pred_check
          %p688 = pneg %p224
        $region110: #{tpu_custom_call.1} parent=79 // pred_check_branch
          %690 = sbr.rel (%p688) target = $region112
        $region111: #{tpu_custom_call.1} parent=79 // pred_region
          %691 = dma.done [#allocation16], 3840
        $region112: #{tpu_custom_call.1} parent=79 // pred_fallthru
          _
        // Predicated region
        $region113: #{tpu_custom_call.1} parent=79 // pred_check
          %p692 = pneg %p245
        $region114: #{tpu_custom_call.1} parent=79 // pred_check_branch
          %694 = sbr.rel (%p692) target = $region116
        $region115: #{tpu_custom_call.1} parent=79 // pred_region
          %695 = dma.done [#allocation16], 48
        $region116: #{tpu_custom_call.1} parent=79 // pred_fallthru
          _
        // Predicated region
        $region117: #{tpu_custom_call.1} parent=79 // pred_check
          %p696 = pneg %p266
        $region118: #{tpu_custom_call.1} parent=79 // pred_check_branch
          %698 = sbr.rel (%p696) target = $region120
        $region119: #{tpu_custom_call.1} parent=79 // pred_region
          %699 = dma.done [#allocation19], 256
        $region120: #{tpu_custom_call.1} parent=79 // pred_fallthru
          _
        // Predicated region
        $region121: #{tpu_custom_call.1} parent=79 // pred_check
          %p700 = pneg %p287
        $region122: #{tpu_custom_call.1} parent=79 // pred_check_branch
          %702 = sbr.rel (%p700) target = $region124
        $region123: #{tpu_custom_call.1} parent=79 // pred_region
          %703 = dma.done [#allocation19], 16
        $region124: #{tpu_custom_call.1} parent=79 // pred_fallthru
          _
        // Predicated region
        $region125: #{tpu_custom_call.1} parent=79 // pred_check
          %p704 = pneg %p308
        $region126: #{tpu_custom_call.1} parent=79 // pred_check_branch
          %706 = sbr.rel (%p704) target = $region128
        $region127: #{tpu_custom_call.1} parent=79 // pred_region
          %707 = dma.done [#allocation22], 256
        $region128: #{tpu_custom_call.1} parent=79 // pred_fallthru
          _
        // Predicated region
        $region129: #{tpu_custom_call.1} parent=79 // pred_check
          %p708 = pneg %p329
        $region130: #{tpu_custom_call.1} parent=79 // pred_check_branch
          %710 = sbr.rel (%p708) target = $region132
        $region131: #{tpu_custom_call.1} parent=79 // pred_region
          %711 = dma.done [#allocation22], 16
        $region132: #{tpu_custom_call.1} parent=79 // pred_fallthru
          _
        // Predicated region
        $region133: #{tpu_custom_call.1} parent=79 // pred_check
          %p712 = pneg %p350
        $region134: #{tpu_custom_call.1} parent=79 // pred_check_branch
          %714 = sbr.rel (%p712) target = $region136
        $region135: #{tpu_custom_call.1} parent=79 // pred_region
          %715 = dma.done [#allocation25], 256
        $region136: #{tpu_custom_call.1} parent=79 // pred_fallthru
          _
        // Predicated region
        $region137: #{tpu_custom_call.1} parent=79 // pred_check
          %p716 = pneg %p371
        $region138: #{tpu_custom_call.1} parent=79 // pred_check_branch
          %718 = sbr.rel (%p716) target = $region140
        $region139: #{tpu_custom_call.1} parent=79 // pred_region
          %719 = dma.done [#allocation25], 16
        $region140: #{tpu_custom_call.1} parent=79 // pred_fallthru
          _
        %s720 = sand.u32 %s54, 1
        %s721 = scalar_lea.sflag [#allocation4], %s720
        %s722 = sand.u32 %s54, 1
        %s723 = smul.addr %s722, 8
        %s724 = scalar_lea.vmem [#allocation3], %s723
        %p725 = pneg %p67
        %p726 = pneg %p64
        %s727 = sand.u32 %s46, 1
        %s728 = scalar_lea.sflag [#allocation7], %s727
        %s729 = sand.u32 %s80, 1
        %s730 = smul.addr %s729, 8
        %s731 = scalar_lea.vmem [#allocation6], %s730
        %p732 = pneg %p93
        %p733 = pneg %p90
        %s734 = sand.u32 %s46, 1
        %s735 = scalar_lea.sflag [#allocation7], %s734
        %s736 = sand.u32 %s106, 1
        %s737 = scalar_lea.vmem [#allocation8], %s736
        %p738 = pneg %p119
        %p739 = pneg %p116
        %p740 = pneg %p140
        %p741 = pneg %p137
        %p742 = pneg %p161
        %p743 = pneg %p158
        %p744 = pneg %p182
        %p745 = pneg %p179
        %p746 = pneg %p203
        %p747 = pneg %p200
        %p748 = pneg %p224
        %p749 = pneg %p221
        %p750 = pneg %p245
        %p751 = pneg %p242
        %p752 = pneg %p266
        %p753 = pneg %p263
        %p754 = pneg %p287
        %p755 = pneg %p284
        %p756 = pneg %p308
        %p757 = pneg %p305
        %p758 = pneg %p329
        %p759 = pneg %p326
        %p760 = pneg %p350
        %p761 = pneg %p347
        %p762 = pneg %p371
        %p763 = pneg %p368
        %p764 = pneg %p397
        %p765 = pneg %p394
        %s766 = sand.u32 %s384, 1
        %s767 = scalar_lea.sflag [#allocation5], %s766
        %s768 = sand.u32 %s384, 1
        %s769 = smul.addr %s768, 8
        %s770 = scalar_lea.vmem [#allocation27], %s769
        %p771 = pneg %p423
        %p772 = pneg %p420
        %s773 = sand.u32 %s410, 1
        %s774 = scalar_lea.sflag [#allocation29], %s773
        %s775 = sand.u32 %s410, 1
        %s776 = smul.addr %s775, 8
        %s777 = scalar_lea.vmem [#allocation28], %s776
        %v778 = vld [vmem:[%s659] sm:$0xff]
        %v779 = vld [vmem:[%s667] sm:$0x1]
        %v780 = vld [vmem:[%s650] sm:$0xff]
        %vm781 = vcmask 261120
        %v782 = vsel %vm781, %v780, 0.0
        %783 = vadd.xlane.f32.xlu0 %v782
        %v784 = vpop.xlane.xlu0 %783
        %v785 = vrcp.pop 32.0
        %v786 = vmul.f32 %v784, %v785
        %v787 = vsub.f32 %v780, %v786
        %v788 = vmul.f32 %v787, %v787
        %v789 = vsel %vm781, %v788, 0.0
        %790 = vadd.xlane.f32.xlu0 %v789
        %v791 = vpop.xlane.xlu0 %790
        %v792 = vmul.f32 %v791, %v785
        %v793 = vadd.f32 %v792, 1e-05
        %v794 = vrsqrt.pop %v793
        %v795 = vmul.f32 %v787, %v794
        %v796 = vld [vmem:[#allocation9] sm:$0x1]
        %v798 = vlaneseq
        %v799 = vshrl.u32 %v798, 7
        %v800 = vsub.s32 0, %v799
        %v801 = vrot.slane %v796, %v800
        %v803 = vmul.f32 %v795, %v801
        %v804 = vld [vmem:[#allocation11] sm:$0x1]
        %v806 = vlaneseq
        %v807 = vshrl.u32 %v806, 7
        %v808 = vsub.s32 0, %v807
        %v809 = vrot.slane %v804, %v808
        %v811 = vadd.f32 %v803, %v809
        %v812 = vld [vmem:[#allocation12] sm:$0xff]
        %v813 = vld [vmem:[#allocation12 + $0x8] sm:$0xff]
        %v814 = vld [vmem:[#allocation12 + $0x10] sm:$0xff]
        %v815 = vld [vmem:[#allocation12 + $0x18] sm:$0xff]
        %v816 = vld [vmem:[#allocation14] sm:$0x1]
        %v818 = vlaneseq
        %v819 = vshrl.u32 %v818, 7
        %v820 = vsub.s32 0, %v819
        %v821 = vrot.slane %v816, %v820
        %v824 = vsel %vm781, %v811, 0
        %826 = vmatprep.subr.mxu0 0.0
        %827 = vmatpush1.msra.mxu0 %v812
        %828 = vmatprep.subr.mxu0 0.0
        %829 = vmatpush1.msra.mxu0 %v813
        %830 = vmatprep.subr.mxu0 0.0
        %831 = vmatpush1.msra.mxu0 %v814
        %832 = vmatprep.subr.mxu0 0.0
        %833 = vmatpush1.msra.mxu0 %v815
        %834 = vmatprep.subr.mxu0 0.0
        %835 = vmatpush1.msra.mxu0 0.0
        %836 = vmatprep.subr.mxu0 0.0
        %837 = vmatpush1.msra.mxu0 0.0
        %838 = vmatprep.subr.mxu0 0.0
        %839 = vmatpush1.msra.mxu0 0.0
        %840 = vmatprep.subr.mxu0 0.0
        %841 = vmatpush1.msra.mxu0 0.0
        %842 = vmatprep.subr.mxu0 0.0
        %843 = vmatpush1.msra.mxu0 0.0
        %844 = vmatprep.subr.mxu0 0.0
        %845 = vmatpush1.msra.mxu0 0.0
        %846 = vmatprep.subr.mxu0 0.0
        %847 = vmatpush1.msra.mxu0 0.0
        %848 = vmatprep.subr.mxu0 0.0
        %849 = vmatpush1.msra.mxu0 0.0
        %850 = vmatprep.subr.mxu0 0.0
        %851 = vmatpush1.msra.mxu0 0.0
        %852 = vmatprep.subr.mxu0 0.0
        %853 = vmatpush1.msra.mxu0 0.0
        %854 = vmatprep.subr.mxu0 0.0
        %855 = vmatpush1.msra.mxu0 0.0
        %856 = vmatprep.subr.mxu0 0.0
        %857 = vmatpush1.msra.mxu0 0.0
        %858 = vmatprep.subr.mxu0 0.0
        %859 = vmatpush1.msra.mxu0 0.0
        %860 = vmatprep.subr.mxu0 0.0
        %861 = vmatpush1.msra.mxu0 0.0
        %862 = vmatprep.subr.mxu0 0.0
        %863 = vmatpush1.msra.mxu0 0.0
        %864 = vmatprep.subr.mxu0 0.0
        %865 = vmatpush1.msra.mxu0 0.0
        %866 = vmatprep.subr.mxu0 0.0
        %867 = vmatpush1.msra.mxu0 0.0
        %868 = vmatprep.subr.mxu0 0.0
        %869 = vmatpush1.msra.mxu0 0.0
        %870 = vmatprep.subr.mxu0 0.0
        %871 = vmatpush1.msra.mxu0 0.0
        %872 = vmatprep.subr.mxu0 0.0
        %873 = vmatpush1.msra.mxu0 0.0
        %874 = vmatprep.subr.mxu0 0.0
        %875 = vmatpush1.msra.mxu0 0.0
        %876 = vmatprep.subr.mxu0 0.0
        %877 = vmatpush1.msra.mxu0 0.0
        %878 = vmatprep.subr.mxu0 0.0
        %879 = vmatpush1.msra.mxu0 0.0
        %880 = vmatprep.subr.mxu0 0.0
        %881 = vmatpush1.msra.mxu0 0.0
        %882 = vmatprep.subr.mxu0 0.0
        %883 = vmatpush1.msra.mxu0 0.0
        %884 = vmatprep.subr.mxu0 0.0
        %885 = vmatpush1.msra.mxu0 0.0
        %886 = vmatprep.subr.mxu0 0.0
        %887 = vmatpush1.msra.mxu0 0.0
        %888 = vmatprep.subr.mxu0 0.0
        %889 = vmatpush1.msra.mxu0 0.0
        %890 = vmatprep.mubr.f32.mxu0 0.0
        %891 = vmatmul.mubr.f32.gmra.mrb[0].mxu0 %v824
        %v892 = vpop.f32.mrb[0].mxu0
        %v893 = vadd.f32 %v821, %v892
        %v894 = vpop.f32.mrb[0].mxu0
        %895 = vdwg.mxu0
        %vm896 = vcmask 123904
        %897 = vst.msk [vmem:[#allocation2] sm:$0x3] %vm896, 0.0
        %898 = vst.msk [vmem:[#allocation2 + $0xa] sm:$0x3] %vm896, 0.0
        %900 = vset.pattern.permute.xlu0 0
        %901 = vperm.xlu0 %900, %v778
        %v902 = vpop.permute.xlu0 %901
        %v904 = vmul.f32 %v893, %v902
        %vm905 = vcmask 130048
        %906 = vst.msk [vmem:[#allocation2 + $0x2] sm:$0xff] %vm905, %v904
        %v907 = vld [vmem:[#allocation2] sm:$0xff]
        %v908 = vld [vmem:[#allocation15] sm:$0xff]
        %v909 = vld [vmem:[#allocation15 + $0x8] sm:$0xff]
        %v910 = vld [vmem:[#allocation2 + $0x1] sm:$0xff]
        %s911 = scalar_lea.vmem [#allocation15], 16
        %v912 = vld [vmem:[%s911] sm:$0xff]
        %v913 = vld [vmem:[%s911 + $0x8] sm:$0xff]
        %v915 = vsel %vm905, %v910, 0
        %917 = vmatprep.subr.mxu0 0.0
        %918 = vmatpush1.msra.mxu0 %v912
        %919 = vmatprep.subr.mxu0 0.0
        %920 = vmatpush1.msra.mxu0 %v913
        %921 = vmatprep.subr.mxu0 0.0
        %922 = vmatpush1.msra.mxu0 0.0
        %923 = vmatprep.subr.mxu0 0.0
        %924 = vmatpush1.msra.mxu0 0.0
        %925 = vmatprep.subr.mxu0 0.0
        %926 = vmatpush1.msra.mxu0 0.0
        %927 = vmatprep.subr.mxu0 0.0
        %928 = vmatpush1.msra.mxu0 0.0
        %929 = vmatprep.subr.mxu0 0.0
        %930 = vmatpush1.msra.mxu0 0.0
        %931 = vmatprep.subr.mxu0 0.0
        %932 = vmatpush1.msra.mxu0 0.0
        %933 = vmatprep.subr.mxu0 0.0
        %934 = vmatpush1.msra.mxu0 0.0
        %935 = vmatprep.subr.mxu0 0.0
        %936 = vmatpush1.msra.mxu0 0.0
        %937 = vmatprep.subr.mxu0 0.0
        %938 = vmatpush1.msra.mxu0 0.0
        %939 = vmatprep.subr.mxu0 0.0
        %940 = vmatpush1.msra.mxu0 0.0
        %941 = vmatprep.subr.mxu0 0.0
        %942 = vmatpush1.msra.mxu0 0.0
        %943 = vmatprep.subr.mxu0 0.0
        %944 = vmatpush1.msra.mxu0 0.0
        %945 = vmatprep.subr.mxu0 0.0
        %946 = vmatpush1.msra.mxu0 0.0
        %947 = vmatprep.subr.mxu0 0.0
        %948 = vmatpush1.msra.mxu0 0.0
        %949 = vmatprep.subr.mxu0 0.0
        %950 = vmatpush1.msra.mxu0 0.0
        %951 = vmatprep.subr.mxu0 0.0
        %952 = vmatpush1.msra.mxu0 0.0
        %953 = vmatprep.subr.mxu0 0.0
        %954 = vmatpush1.msra.mxu0 0.0
        %955 = vmatprep.subr.mxu0 0.0
        %956 = vmatpush1.msra.mxu0 0.0
        %957 = vmatprep.subr.mxu0 0.0
        %958 = vmatpush1.msra.mxu0 0.0
        %959 = vmatprep.subr.mxu0 0.0
        %960 = vmatpush1.msra.mxu0 0.0
        %961 = vmatprep.subr.mxu0 0.0
        %962 = vmatpush1.msra.mxu0 0.0
        %963 = vmatprep.subr.mxu0 0.0
        %964 = vmatpush1.msra.mxu0 0.0
        %965 = vmatprep.subr.mxu0 0.0
        %966 = vmatpush1.msra.mxu0 0.0
        %967 = vmatprep.subr.mxu0 0.0
        %968 = vmatpush1.msra.mxu0 0.0
        %969 = vmatprep.subr.mxu0 0.0
        %970 = vmatpush1.msra.mxu0 0.0
        %971 = vmatprep.subr.mxu0 0.0
        %972 = vmatpush1.msra.mxu0 0.0
        %973 = vmatprep.subr.mxu0 0.0
        %974 = vmatpush1.msra.mxu0 0.0
        %975 = vmatprep.subr.mxu0 0.0
        %976 = vmatpush1.msra.mxu0 0.0
        %977 = vmatprep.subr.mxu0 0.0
        %978 = vmatpush1.msra.mxu0 0.0
        %979 = vmatprep.subr.mxu0 0.0
        %980 = vmatpush1.msra.mxu0 0.0
        %981 = vmatprep.mubr.f32.mxu0 0.0
        %982 = vmatmul.mubr.f32.gmra.mrb[0].mxu0 %v915
        %v983 = vpop.f32.mrb[0].mxu0
        %v984 = vadd.f32 0.0, %v983
        %v985 = vpop.f32.mrb[0].mxu0
        %986 = vdwg.mxu0
        %v988 = vsel %vm905, %v907, 0
        %990 = vmatprep.subr.mxu0 0.0
        %991 = vmatpush1.msra.mxu0 %v908
        %992 = vmatprep.subr.mxu0 0.0
        %993 = vmatpush1.msra.mxu0 %v909
        %994 = vmatprep.subr.mxu0 0.0
        %995 = vmatpush1.msra.mxu0 0.0
        %996 = vmatprep.subr.mxu0 0.0
        %997 = vmatpush1.msra.mxu0 0.0
        %998 = vmatprep.subr.mxu0 0.0
        %999 = vmatpush1.msra.mxu0 0.0
        %1000 = vmatprep.subr.mxu0 0.0
        %1001 = vmatpush1.msra.mxu0 0.0
        %1002 = vmatprep.subr.mxu0 0.0
        %1003 = vmatpush1.msra.mxu0 0.0
        %1004 = vmatprep.subr.mxu0 0.0
        %1005 = vmatpush1.msra.mxu0 0.0
        %1006 = vmatprep.subr.mxu0 0.0
        %1007 = vmatpush1.msra.mxu0 0.0
        %1008 = vmatprep.subr.mxu0 0.0
        %1009 = vmatpush1.msra.mxu0 0.0
        %1010 = vmatprep.subr.mxu0 0.0
        %1011 = vmatpush1.msra.mxu0 0.0
        %1012 = vmatprep.subr.mxu0 0.0
        %1013 = vmatpush1.msra.mxu0 0.0
        %1014 = vmatprep.subr.mxu0 0.0
        %1015 = vmatpush1.msra.mxu0 0.0
        %1016 = vmatprep.subr.mxu0 0.0
        %1017 = vmatpush1.msra.mxu0 0.0
        %1018 = vmatprep.subr.mxu0 0.0
        %1019 = vmatpush1.msra.mxu0 0.0
        %1020 = vmatprep.subr.mxu0 0.0
        %1021 = vmatpush1.msra.mxu0 0.0
        %1022 = vmatprep.subr.mxu0 0.0
        %1023 = vmatpush1.msra.mxu0 0.0
        %1024 = vmatprep.subr.mxu0 0.0
        %1025 = vmatpush1.msra.mxu0 0.0
        %1026 = vmatprep.subr.mxu0 0.0
        %1027 = vmatpush1.msra.mxu0 0.0
        %1028 = vmatprep.subr.mxu0 0.0
        %1029 = vmatpush1.msra.mxu0 0.0
        %1030 = vmatprep.subr.mxu0 0.0
        %1031 = vmatpush1.msra.mxu0 0.0
        %1032 = vmatprep.subr.mxu0 0.0
        %1033 = vmatpush1.msra.mxu0 0.0
        %1034 = vmatprep.subr.mxu0 0.0
        %1035 = vmatpush1.msra.mxu0 0.0
        %1036 = vmatprep.subr.mxu0 0.0
        %1037 = vmatpush1.msra.mxu0 0.0
        %1038 = vmatprep.subr.mxu0 0.0
        %1039 = vmatpush1.msra.mxu0 0.0
        %1040 = vmatprep.subr.mxu0 0.0
        %1041 = vmatpush1.msra.mxu0 0.0
        %1042 = vmatprep.subr.mxu0 0.0
        %1043 = vmatpush1.msra.mxu0 0.0
        %1044 = vmatprep.subr.mxu0 0.0
        %1045 = vmatpush1.msra.mxu0 0.0
        %1046 = vmatprep.subr.mxu0 0.0
        %1047 = vmatpush1.msra.mxu0 0.0
        %1048 = vmatprep.subr.mxu0 0.0
        %1049 = vmatpush1.msra.mxu0 0.0
        %1050 = vmatprep.subr.mxu0 0.0
        %1051 = vmatpush1.msra.mxu0 0.0
        %1052 = vmatprep.subr.mxu0 0.0
        %1053 = vmatpush1.msra.mxu0 0.0
        %1054 = vmatprep.mubr.f32.mxu0 0.0
        %1055 = vmatmul.mubr.f32.gmra.mrb[0].mxu0 %v988
        %v1056 = vpop.f32.mrb[0].mxu0
        %v1057 = vadd.f32 %v984, %v1056
        %v1058 = vpop.f32.mrb[0].mxu0
        %1059 = vdwg.mxu0
        %v1060 = vld [vmem:[#allocation2 + $0x2] sm:$0xff]
        %s1061 = scalar_lea.vmem [#allocation15], 32
        %v1062 = vld [vmem:[%s1061] sm:$0xff]
        %v1063 = vld [vmem:[%s1061 + $0x8] sm:$0xff]
        %v1065 = vsel %vm905, %v1060, 0
        %1067 = vmatprep.subr.mxu0 0.0
        %1068 = vmatpush1.msra.mxu0 %v1062
        %1069 = vmatprep.subr.mxu0 0.0
        %1070 = vmatpush1.msra.mxu0 %v1063
        %1071 = vmatprep.subr.mxu0 0.0
        %1072 = vmatpush1.msra.mxu0 0.0
        %1073 = vmatprep.subr.mxu0 0.0
        %1074 = vmatpush1.msra.mxu0 0.0
        %1075 = vmatprep.subr.mxu0 0.0
        %1076 = vmatpush1.msra.mxu0 0.0
        %1077 = vmatprep.subr.mxu0 0.0
        %1078 = vmatpush1.msra.mxu0 0.0
        %1079 = vmatprep.subr.mxu0 0.0
        %1080 = vmatpush1.msra.mxu0 0.0
        %1081 = vmatprep.subr.mxu0 0.0
        %1082 = vmatpush1.msra.mxu0 0.0
        %1083 = vmatprep.subr.mxu0 0.0
        %1084 = vmatpush1.msra.mxu0 0.0
        %1085 = vmatprep.subr.mxu0 0.0
        %1086 = vmatpush1.msra.mxu0 0.0
        %1087 = vmatprep.subr.mxu0 0.0
        %1088 = vmatpush1.msra.mxu0 0.0
        %1089 = vmatprep.subr.mxu0 0.0
        %1090 = vmatpush1.msra.mxu0 0.0
        %1091 = vmatprep.subr.mxu0 0.0
        %1092 = vmatpush1.msra.mxu0 0.0
        %1093 = vmatprep.subr.mxu0 0.0
        %1094 = vmatpush1.msra.mxu0 0.0
        %1095 = vmatprep.subr.mxu0 0.0
        %1096 = vmatpush1.msra.mxu0 0.0
        %1097 = vmatprep.subr.mxu0 0.0
        %1098 = vmatpush1.msra.mxu0 0.0
        %1099 = vmatprep.subr.mxu0 0.0
        %1100 = vmatpush1.msra.mxu0 0.0
        %1101 = vmatprep.subr.mxu0 0.0
        %1102 = vmatpush1.msra.mxu0 0.0
        %1103 = vmatprep.subr.mxu0 0.0
        %1104 = vmatpush1.msra.mxu0 0.0
        %1105 = vmatprep.subr.mxu0 0.0
        %1106 = vmatpush1.msra.mxu0 0.0
        %1107 = vmatprep.subr.mxu0 0.0
        %1108 = vmatpush1.msra.mxu0 0.0
        %1109 = vmatprep.subr.mxu0 0.0
        %1110 = vmatpush1.msra.mxu0 0.0
        %1111 = vmatprep.subr.mxu0 0.0
        %1112 = vmatpush1.msra.mxu0 0.0
        %1113 = vmatprep.subr.mxu0 0.0
        %1114 = vmatpush1.msra.mxu0 0.0
        %1115 = vmatprep.subr.mxu0 0.0
        %1116 = vmatpush1.msra.mxu0 0.0
        %1117 = vmatprep.subr.mxu0 0.0
        %1118 = vmatpush1.msra.mxu0 0.0
        %1119 = vmatprep.subr.mxu0 0.0
        %1120 = vmatpush1.msra.mxu0 0.0
        %1121 = vmatprep.subr.mxu0 0.0
        %1122 = vmatpush1.msra.mxu0 0.0
        %1123 = vmatprep.subr.mxu0 0.0
        %1124 = vmatpush1.msra.mxu0 0.0
        %1125 = vmatprep.subr.mxu0 0.0
        %1126 = vmatpush1.msra.mxu0 0.0
        %1127 = vmatprep.subr.mxu0 0.0
        %1128 = vmatpush1.msra.mxu0 0.0
        %1129 = vmatprep.subr.mxu0 0.0
        %1130 = vmatpush1.msra.mxu0 0.0
        %1131 = vmatprep.mubr.f32.mxu0 0.0
        %1132 = vmatmul.mubr.f32.gmra.mrb[0].mxu0 %v1065
        %v1133 = vpop.f32.mrb[0].mxu0
        %v1134 = vadd.f32 0.0, %v1133
        %v1135 = vpop.f32.mrb[0].mxu0
        %1136 = vdwg.mxu0
        %v1137 = vadd.f32 %v1057, %v1134
        %v1138 = vld [vmem:[#allocation2 + $0x3] sm:$0xff]
        %s1139 = scalar_lea.vmem [#allocation15], 48
        %v1140 = vld [vmem:[%s1139] sm:$0xff]
        %v1141 = vld [vmem:[%s1139 + $0x8] sm:$0xff]
        %v1143 = vsel %vm905, %v1138, 0
        %1145 = vmatprep.subr.mxu0 0.0
        %1146 = vmatpush1.msra.mxu0 %v1140
        %1147 = vmatprep.subr.mxu0 0.0
        %1148 = vmatpush1.msra.mxu0 %v1141
        %1149 = vmatprep.subr.mxu0 0.0
        %1150 = vmatpush1.msra.mxu0 0.0
        %1151 = vmatprep.subr.mxu0 0.0
        %1152 = vmatpush1.msra.mxu0 0.0
        %1153 = vmatprep.subr.mxu0 0.0
        %1154 = vmatpush1.msra.mxu0 0.0
        %1155 = vmatprep.subr.mxu0 0.0
        %1156 = vmatpush1.msra.mxu0 0.0
        %1157 = vmatprep.subr.mxu0 0.0
        %1158 = vmatpush1.msra.mxu0 0.0
        %1159 = vmatprep.subr.mxu0 0.0
        %1160 = vmatpush1.msra.mxu0 0.0
        %1161 = vmatprep.subr.mxu0 0.0
        %1162 = vmatpush1.msra.mxu0 0.0
        %1163 = vmatprep.subr.mxu0 0.0
        %1164 = vmatpush1.msra.mxu0 0.0
        %1165 = vmatprep.subr.mxu0 0.0
        %1166 = vmatpush1.msra.mxu0 0.0
        %1167 = vmatprep.subr.mxu0 0.0
        %1168 = vmatpush1.msra.mxu0 0.0
        %1169 = vmatprep.subr.mxu0 0.0
        %1170 = vmatpush1.msra.mxu0 0.0
        %1171 = vmatprep.subr.mxu0 0.0
        %1172 = vmatpush1.msra.mxu0 0.0
        %1173 = vmatprep.subr.mxu0 0.0
        %1174 = vmatpush1.msra.mxu0 0.0
        %1175 = vmatprep.subr.mxu0 0.0
        %1176 = vmatpush1.msra.mxu0 0.0
        %1177 = vmatprep.subr.mxu0 0.0
        %1178 = vmatpush1.msra.mxu0 0.0
        %1179 = vmatprep.subr.mxu0 0.0
        %1180 = vmatpush1.msra.mxu0 0.0
        %1181 = vmatprep.subr.mxu0 0.0
        %1182 = vmatpush1.msra.mxu0 0.0
        %1183 = vmatprep.subr.mxu0 0.0
        %1184 = vmatpush1.msra.mxu0 0.0
        %1185 = vmatprep.subr.mxu0 0.0
        %1186 = vmatpush1.msra.mxu0 0.0
        %1187 = vmatprep.subr.mxu0 0.0
        %1188 = vmatpush1.msra.mxu0 0.0
        %1189 = vmatprep.subr.mxu0 0.0
        %1190 = vmatpush1.msra.mxu0 0.0
        %1191 = vmatprep.subr.mxu0 0.0
        %1192 = vmatpush1.msra.mxu0 0.0
        %1193 = vmatprep.subr.mxu0 0.0
        %1194 = vmatpush1.msra.mxu0 0.0
        %1195 = vmatprep.subr.mxu0 0.0
        %1196 = vmatpush1.msra.mxu0 0.0
        %1197 = vmatprep.subr.mxu0 0.0
        %1198 = vmatpush1.msra.mxu0 0.0
        %1199 = vmatprep.subr.mxu0 0.0
        %1200 = vmatpush1.msra.mxu0 0.0
        %1201 = vmatprep.subr.mxu0 0.0
        %1202 = vmatpush1.msra.mxu0 0.0
        %1203 = vmatprep.subr.mxu0 0.0
        %1204 = vmatpush1.msra.mxu0 0.0
        %1205 = vmatprep.subr.mxu0 0.0
        %1206 = vmatpush1.msra.mxu0 0.0
        %1207 = vmatprep.subr.mxu0 0.0
        %1208 = vmatpush1.msra.mxu0 0.0
        %1209 = vmatprep.mubr.f32.mxu0 0.0
        %1210 = vmatmul.mubr.f32.gmra.mrb[0].mxu0 %v1143
        %v1211 = vpop.f32.mrb[0].mxu0
        %v1212 = vadd.f32 0.0, %v1211
        %v1213 = vpop.f32.mrb[0].mxu0
        %1214 = vdwg.mxu0
        %v1215 = vadd.f32 %v1137, %v1212
        %v1216 = vld [vmem:[#allocation2 + $0x4] sm:$0xff]
        %s1217 = scalar_lea.vmem [#allocation15], 64
        %v1218 = vld [vmem:[%s1217] sm:$0xff]
        %v1219 = vld [vmem:[%s1217 + $0x8] sm:$0xff]
        %v1221 = vsel %vm905, %v1216, 0
        %1223 = vmatprep.subr.mxu0 0.0
        %1224 = vmatpush1.msra.mxu0 %v1218
        %1225 = vmatprep.subr.mxu0 0.0
        %1226 = vmatpush1.msra.mxu0 %v1219
        %1227 = vmatprep.subr.mxu0 0.0
        %1228 = vmatpush1.msra.mxu0 0.0
        %1229 = vmatprep.subr.mxu0 0.0
        %1230 = vmatpush1.msra.mxu0 0.0
        %1231 = vmatprep.subr.mxu0 0.0
        %1232 = vmatpush1.msra.mxu0 0.0
        %1233 = vmatprep.subr.mxu0 0.0
        %1234 = vmatpush1.msra.mxu0 0.0
        %1235 = vmatprep.subr.mxu0 0.0
        %1236 = vmatpush1.msra.mxu0 0.0
        %1237 = vmatprep.subr.mxu0 0.0
        %1238 = vmatpush1.msra.mxu0 0.0
        %1239 = vmatprep.subr.mxu0 0.0
        %1240 = vmatpush1.msra.mxu0 0.0
        %1241 = vmatprep.subr.mxu0 0.0
        %1242 = vmatpush1.msra.mxu0 0.0
        %1243 = vmatprep.subr.mxu0 0.0
        %1244 = vmatpush1.msra.mxu0 0.0
        %1245 = vmatprep.subr.mxu0 0.0
        %1246 = vmatpush1.msra.mxu0 0.0
        %1247 = vmatprep.subr.mxu0 0.0
        %1248 = vmatpush1.msra.mxu0 0.0
        %1249 = vmatprep.subr.mxu0 0.0
        %1250 = vmatpush1.msra.mxu0 0.0
        %1251 = vmatprep.subr.mxu0 0.0
        %1252 = vmatpush1.msra.mxu0 0.0
        %1253 = vmatprep.subr.mxu0 0.0
        %1254 = vmatpush1.msra.mxu0 0.0
        %1255 = vmatprep.subr.mxu0 0.0
        %1256 = vmatpush1.msra.mxu0 0.0
        %1257 = vmatprep.subr.mxu0 0.0
        %1258 = vmatpush1.msra.mxu0 0.0
        %1259 = vmatprep.subr.mxu0 0.0
        %1260 = vmatpush1.msra.mxu0 0.0
        %1261 = vmatprep.subr.mxu0 0.0
        %1262 = vmatpush1.msra.mxu0 0.0
        %1263 = vmatprep.subr.mxu0 0.0
        %1264 = vmatpush1.msra.mxu0 0.0
        %1265 = vmatprep.subr.mxu0 0.0
        %1266 = vmatpush1.msra.mxu0 0.0
        %1267 = vmatprep.subr.mxu0 0.0
        %1268 = vmatpush1.msra.mxu0 0.0
        %1269 = vmatprep.subr.mxu0 0.0
        %1270 = vmatpush1.msra.mxu0 0.0
        %1271 = vmatprep.subr.mxu0 0.0
        %1272 = vmatpush1.msra.mxu0 0.0
        %1273 = vmatprep.subr.mxu0 0.0
        %1274 = vmatpush1.msra.mxu0 0.0
        %1275 = vmatprep.subr.mxu0 0.0
        %1276 = vmatpush1.msra.mxu0 0.0
        %1277 = vmatprep.subr.mxu0 0.0
        %1278 = vmatpush1.msra.mxu0 0.0
        %1279 = vmatprep.subr.mxu0 0.0
        %1280 = vmatpush1.msra.mxu0 0.0
        %1281 = vmatprep.subr.mxu0 0.0
        %1282 = vmatpush1.msra.mxu0 0.0
        %1283 = vmatprep.subr.mxu0 0.0
        %1284 = vmatpush1.msra.mxu0 0.0
        %1285 = vmatprep.subr.mxu0 0.0
        %1286 = vmatpush1.msra.mxu0 0.0
        %1287 = vmatprep.mubr.f32.mxu0 0.0
        %1288 = vmatmul.mubr.f32.gmra.mrb[0].mxu0 %v1221
        %v1289 = vpop.f32.mrb[0].mxu0
        %v1290 = vadd.f32 0.0, %v1289
        %v1291 = vpop.f32.mrb[0].mxu0
        %1292 = vdwg.mxu0
        %v1293 = vadd.f32 %v1215, %v1290
        %v1294 = vld [vmem:[#allocation17] sm:$0x1]
        %v1296 = vlaneseq
        %v1297 = vshrl.u32 %v1296, 7
        %v1298 = vsub.s32 0, %v1297
        %v1299 = vrot.slane %v1294, %v1298
        %v1301 = vadd.f32 %v1293, %v1299
        %v1302 = vxor.u32 %v1301, 2147483648
        %v1303 = vmul.f32 %v1302, 1.442695
        %v1304 = vpow.pop %v1303
        %v1305 = vadd.f32 %v1304, 1.0
        %v1306 = vrcp.pop %v1305
        %v1307 = vmul.f32 1.0, %v1306
        %1309 = vrot.lane.b32.xlu0 %v1307, 112
        %v1310 = vpop.permute.xlu0 %1309
        %v1312 = vmul.f32 %v1301, %v1310
        %v1313 = vmul.f32 %v1312, %v902
        %1314 = vst.msk [vmem:[#allocation2 + $0x2] sm:$0xff] %vm905, %v1313
        %v1315 = vld [vmem:[#allocation2] sm:$0xff]
        %s1316 = scalar_lea.vmem [#allocation15], 80
        %v1317 = vld [vmem:[%s1316] sm:$0xff]
        %v1318 = vld [vmem:[%s1316 + $0x8] sm:$0xff]
        %v1319 = vld [vmem:[#allocation2 + $0x1] sm:$0xff]
        %s1320 = scalar_lea.vmem [#allocation15], 96
        %v1321 = vld [vmem:[%s1320] sm:$0xff]
        %v1322 = vld [vmem:[%s1320 + $0x8] sm:$0xff]
        %v1324 = vsel %vm905, %v1319, 0
        %1326 = vmatprep.subr.mxu0 0.0
        %1327 = vmatpush1.msra.mxu0 %v1321
        %1328 = vmatprep.subr.mxu0 0.0
        %1329 = vmatpush1.msra.mxu0 %v1322
        %1330 = vmatprep.subr.mxu0 0.0
        %1331 = vmatpush1.msra.mxu0 0.0
        %1332 = vmatprep.subr.mxu0 0.0
        %1333 = vmatpush1.msra.mxu0 0.0
        %1334 = vmatprep.subr.mxu0 0.0
        %1335 = vmatpush1.msra.mxu0 0.0
        %1336 = vmatprep.subr.mxu0 0.0
        %1337 = vmatpush1.msra.mxu0 0.0
        %1338 = vmatprep.subr.mxu0 0.0
        %1339 = vmatpush1.msra.mxu0 0.0
        %1340 = vmatprep.subr.mxu0 0.0
        %1341 = vmatpush1.msra.mxu0 0.0
        %1342 = vmatprep.subr.mxu0 0.0
        %1343 = vmatpush1.msra.mxu0 0.0
        %1344 = vmatprep.subr.mxu0 0.0
        %1345 = vmatpush1.msra.mxu0 0.0
        %1346 = vmatprep.subr.mxu0 0.0
        %1347 = vmatpush1.msra.mxu0 0.0
        %1348 = vmatprep.subr.mxu0 0.0
        %1349 = vmatpush1.msra.mxu0 0.0
        %1350 = vmatprep.subr.mxu0 0.0
        %1351 = vmatpush1.msra.mxu0 0.0
        %1352 = vmatprep.subr.mxu0 0.0
        %1353 = vmatpush1.msra.mxu0 0.0
        %1354 = vmatprep.subr.mxu0 0.0
        %1355 = vmatpush1.msra.mxu0 0.0
        %1356 = vmatprep.subr.mxu0 0.0
        %1357 = vmatpush1.msra.mxu0 0.0
        %1358 = vmatprep.subr.mxu0 0.0
        %1359 = vmatpush1.msra.mxu0 0.0
        %1360 = vmatprep.subr.mxu0 0.0
        %1361 = vmatpush1.msra.mxu0 0.0
        %1362 = vmatprep.subr.mxu0 0.0
        %1363 = vmatpush1.msra.mxu0 0.0
        %1364 = vmatprep.subr.mxu0 0.0
        %1365 = vmatpush1.msra.mxu0 0.0
        %1366 = vmatprep.subr.mxu0 0.0
        %1367 = vmatpush1.msra.mxu0 0.0
        %1368 = vmatprep.subr.mxu0 0.0
        %1369 = vmatpush1.msra.mxu0 0.0
        %1370 = vmatprep.subr.mxu0 0.0
        %1371 = vmatpush1.msra.mxu0 0.0
        %1372 = vmatprep.subr.mxu0 0.0
        %1373 = vmatpush1.msra.mxu0 0.0
        %1374 = vmatprep.subr.mxu0 0.0
        %1375 = vmatpush1.msra.mxu0 0.0
        %1376 = vmatprep.subr.mxu0 0.0
        %1377 = vmatpush1.msra.mxu0 0.0
        %1378 = vmatprep.subr.mxu0 0.0
        %1379 = vmatpush1.msra.mxu0 0.0
        %1380 = vmatprep.subr.mxu0 0.0
        %1381 = vmatpush1.msra.mxu0 0.0
        %1382 = vmatprep.subr.mxu0 0.0
        %1383 = vmatpush1.msra.mxu0 0.0
        %1384 = vmatprep.subr.mxu0 0.0
        %1385 = vmatpush1.msra.mxu0 0.0
        %1386 = vmatprep.subr.mxu0 0.0
        %1387 = vmatpush1.msra.mxu0 0.0
        %1388 = vmatprep.subr.mxu0 0.0
        %1389 = vmatpush1.msra.mxu0 0.0
        %1390 = vmatprep.mubr.f32.mxu0 0.0
        %1391 = vmatmul.mubr.f32.gmra.mrb[0].mxu0 %v1324
        %v1392 = vpop.f32.mrb[0].mxu0
        %v1393 = vadd.f32 0.0, %v1392
        %v1394 = vpop.f32.mrb[0].mxu0
        %1395 = vdwg.mxu0
        %v1397 = vsel %vm905, %v1315, 0
        %1399 = vmatprep.subr.mxu0 0.0
        %1400 = vmatpush1.msra.mxu0 %v1317
        %1401 = vmatprep.subr.mxu0 0.0
        %1402 = vmatpush1.msra.mxu0 %v1318
        %1403 = vmatprep.subr.mxu0 0.0
        %1404 = vmatpush1.msra.mxu0 0.0
        %1405 = vmatprep.subr.mxu0 0.0
        %1406 = vmatpush1.msra.mxu0 0.0
        %1407 = vmatprep.subr.mxu0 0.0
        %1408 = vmatpush1.msra.mxu0 0.0
        %1409 = vmatprep.subr.mxu0 0.0
        %1410 = vmatpush1.msra.mxu0 0.0
        %1411 = vmatprep.subr.mxu0 0.0
        %1412 = vmatpush1.msra.mxu0 0.0
        %1413 = vmatprep.subr.mxu0 0.0
        %1414 = vmatpush1.msra.mxu0 0.0
        %1415 = vmatprep.subr.mxu0 0.0
        %1416 = vmatpush1.msra.mxu0 0.0
        %1417 = vmatprep.subr.mxu0 0.0
        %1418 = vmatpush1.msra.mxu0 0.0
        %1419 = vmatprep.subr.mxu0 0.0
        %1420 = vmatpush1.msra.mxu0 0.0
        %1421 = vmatprep.subr.mxu0 0.0
        %1422 = vmatpush1.msra.mxu0 0.0
        %1423 = vmatprep.subr.mxu0 0.0
        %1424 = vmatpush1.msra.mxu0 0.0
        %1425 = vmatprep.subr.mxu0 0.0
        %1426 = vmatpush1.msra.mxu0 0.0
        %1427 = vmatprep.subr.mxu0 0.0
        %1428 = vmatpush1.msra.mxu0 0.0
        %1429 = vmatprep.subr.mxu0 0.0
        %1430 = vmatpush1.msra.mxu0 0.0
        %1431 = vmatprep.subr.mxu0 0.0
        %1432 = vmatpush1.msra.mxu0 0.0
        %1433 = vmatprep.subr.mxu0 0.0
        %1434 = vmatpush1.msra.mxu0 0.0
        %1435 = vmatprep.subr.mxu0 0.0
        %1436 = vmatpush1.msra.mxu0 0.0
        %1437 = vmatprep.subr.mxu0 0.0
        %1438 = vmatpush1.msra.mxu0 0.0
        %1439 = vmatprep.subr.mxu0 0.0
        %1440 = vmatpush1.msra.mxu0 0.0
        %1441 = vmatprep.subr.mxu0 0.0
        %1442 = vmatpush1.msra.mxu0 0.0
        %1443 = vmatprep.subr.mxu0 0.0
        %1444 = vmatpush1.msra.mxu0 0.0
        %1445 = vmatprep.subr.mxu0 0.0
        %1446 = vmatpush1.msra.mxu0 0.0
        %1447 = vmatprep.subr.mxu0 0.0
        %1448 = vmatpush1.msra.mxu0 0.0
        %1449 = vmatprep.subr.mxu0 0.0
        %1450 = vmatpush1.msra.mxu0 0.0
        %1451 = vmatprep.subr.mxu0 0.0
        %1452 = vmatpush1.msra.mxu0 0.0
        %1453 = vmatprep.subr.mxu0 0.0
        %1454 = vmatpush1.msra.mxu0 0.0
        %1455 = vmatprep.subr.mxu0 0.0
        %1456 = vmatpush1.msra.mxu0 0.0
        %1457 = vmatprep.subr.mxu0 0.0
        %1458 = vmatpush1.msra.mxu0 0.0
        %1459 = vmatprep.subr.mxu0 0.0
        %1460 = vmatpush1.msra.mxu0 0.0
        %1461 = vmatprep.subr.mxu0 0.0
        %1462 = vmatpush1.msra.mxu0 0.0
        %1463 = vmatprep.mubr.f32.mxu0 0.0
        %1464 = vmatmul.mubr.f32.gmra.mrb[0].mxu0 %v1397
        %v1465 = vpop.f32.mrb[0].mxu0
        %v1466 = vadd.f32 %v1393, %v1465
        %v1467 = vpop.f32.mrb[0].mxu0
        %1468 = vdwg.mxu0
        %v1469 = vld [vmem:[#allocation2 + $0x2] sm:$0xff]
        %s1470 = scalar_lea.vmem [#allocation15], 112
        %v1471 = vld [vmem:[%s1470] sm:$0xff]
        %v1472 = vld [vmem:[%s1470 + $0x8] sm:$0xff]
        %v1474 = vsel %vm905, %v1469, 0
        %1476 = vmatprep.subr.mxu0 0.0
        %1477 = vmatpush1.msra.mxu0 %v1471
        %1478 = vmatprep.subr.mxu0 0.0
        %1479 = vmatpush1.msra.mxu0 %v1472
        %1480 = vmatprep.subr.mxu0 0.0
        %1481 = vmatpush1.msra.mxu0 0.0
        %1482 = vmatprep.subr.mxu0 0.0
        %1483 = vmatpush1.msra.mxu0 0.0
        %1484 = vmatprep.subr.mxu0 0.0
        %1485 = vmatpush1.msra.mxu0 0.0
        %1486 = vmatprep.subr.mxu0 0.0
        %1487 = vmatpush1.msra.mxu0 0.0
        %1488 = vmatprep.subr.mxu0 0.0
        %1489 = vmatpush1.msra.mxu0 0.0
        %1490 = vmatprep.subr.mxu0 0.0
        %1491 = vmatpush1.msra.mxu0 0.0
        %1492 = vmatprep.subr.mxu0 0.0
        %1493 = vmatpush1.msra.mxu0 0.0
        %1494 = vmatprep.subr.mxu0 0.0
        %1495 = vmatpush1.msra.mxu0 0.0
        %1496 = vmatprep.subr.mxu0 0.0
        %1497 = vmatpush1.msra.mxu0 0.0
        %1498 = vmatprep.subr.mxu0 0.0
        %1499 = vmatpush1.msra.mxu0 0.0
        %1500 = vmatprep.subr.mxu0 0.0
        %1501 = vmatpush1.msra.mxu0 0.0
        %1502 = vmatprep.subr.mxu0 0.0
        %1503 = vmatpush1.msra.mxu0 0.0
        %1504 = vmatprep.subr.mxu0 0.0
        %1505 = vmatpush1.msra.mxu0 0.0
        %1506 = vmatprep.subr.mxu0 0.0
        %1507 = vmatpush1.msra.mxu0 0.0
        %1508 = vmatprep.subr.mxu0 0.0
        %1509 = vmatpush1.msra.mxu0 0.0
        %1510 = vmatprep.subr.mxu0 0.0
        %1511 = vmatpush1.msra.mxu0 0.0
        %1512 = vmatprep.subr.mxu0 0.0
        %1513 = vmatpush1.msra.mxu0 0.0
        %1514 = vmatprep.subr.mxu0 0.0
        %1515 = vmatpush1.msra.mxu0 0.0
        %1516 = vmatprep.subr.mxu0 0.0
        %1517 = vmatpush1.msra.mxu0 0.0
        %1518 = vmatprep.subr.mxu0 0.0
        %1519 = vmatpush1.msra.mxu0 0.0
        %1520 = vmatprep.subr.mxu0 0.0
        %1521 = vmatpush1.msra.mxu0 0.0
        %1522 = vmatprep.subr.mxu0 0.0
        %1523 = vmatpush1.msra.mxu0 0.0
        %1524 = vmatprep.subr.mxu0 0.0
        %1525 = vmatpush1.msra.mxu0 0.0
        %1526 = vmatprep.subr.mxu0 0.0
        %1527 = vmatpush1.msra.mxu0 0.0
        %1528 = vmatprep.subr.mxu0 0.0
        %1529 = vmatpush1.msra.mxu0 0.0
        %1530 = vmatprep.subr.mxu0 0.0
        %1531 = vmatpush1.msra.mxu0 0.0
        %1532 = vmatprep.subr.mxu0 0.0
        %1533 = vmatpush1.msra.mxu0 0.0
        %1534 = vmatprep.subr.mxu0 0.0
        %1535 = vmatpush1.msra.mxu0 0.0
        %1536 = vmatprep.subr.mxu0 0.0
        %1537 = vmatpush1.msra.mxu0 0.0
        %1538 = vmatprep.subr.mxu0 0.0
        %1539 = vmatpush1.msra.mxu0 0.0
        %1540 = vmatprep.mubr.f32.mxu0 0.0
        %1541 = vmatmul.mubr.f32.gmra.mrb[0].mxu0 %v1474
        %v1542 = vpop.f32.mrb[0].mxu0
        %v1543 = vadd.f32 0.0, %v1542
        %v1544 = vpop.f32.mrb[0].mxu0
        %1545 = vdwg.mxu0
        %v1546 = vadd.f32 %v1466, %v1543
        %v1547 = vld [vmem:[#allocation2 + $0x3] sm:$0xff]
        %s1548 = scalar_lea.vmem [#allocation15], 128
        %v1549 = vld [vmem:[%s1548] sm:$0xff]
        %v1550 = vld [vmem:[%s1548 + $0x8] sm:$0xff]
        %v1552 = vsel %vm905, %v1547, 0
        %1554 = vmatprep.subr.mxu0 0.0
        %1555 = vmatpush1.msra.mxu0 %v1549
        %1556 = vmatprep.subr.mxu0 0.0
        %1557 = vmatpush1.msra.mxu0 %v1550
        %1558 = vmatprep.subr.mxu0 0.0
        %1559 = vmatpush1.msra.mxu0 0.0
        %1560 = vmatprep.subr.mxu0 0.0
        %1561 = vmatpush1.msra.mxu0 0.0
        %1562 = vmatprep.subr.mxu0 0.0
        %1563 = vmatpush1.msra.mxu0 0.0
        %1564 = vmatprep.subr.mxu0 0.0
        %1565 = vmatpush1.msra.mxu0 0.0
        %1566 = vmatprep.subr.mxu0 0.0
        %1567 = vmatpush1.msra.mxu0 0.0
        %1568 = vmatprep.subr.mxu0 0.0
        %1569 = vmatpush1.msra.mxu0 0.0
        %1570 = vmatprep.subr.mxu0 0.0
        %1571 = vmatpush1.msra.mxu0 0.0
        %1572 = vmatprep.subr.mxu0 0.0
        %1573 = vmatpush1.msra.mxu0 0.0
        %1574 = vmatprep.subr.mxu0 0.0
        %1575 = vmatpush1.msra.mxu0 0.0
        %1576 = vmatprep.subr.mxu0 0.0
        %1577 = vmatpush1.msra.mxu0 0.0
        %1578 = vmatprep.subr.mxu0 0.0
        %1579 = vmatpush1.msra.mxu0 0.0
        %1580 = vmatprep.subr.mxu0 0.0
        %1581 = vmatpush1.msra.mxu0 0.0
        %1582 = vmatprep.subr.mxu0 0.0
        %1583 = vmatpush1.msra.mxu0 0.0
        %1584 = vmatprep.subr.mxu0 0.0
        %1585 = vmatpush1.msra.mxu0 0.0
        %1586 = vmatprep.subr.mxu0 0.0
        %1587 = vmatpush1.msra.mxu0 0.0
        %1588 = vmatprep.subr.mxu0 0.0
        %1589 = vmatpush1.msra.mxu0 0.0
        %1590 = vmatprep.subr.mxu0 0.0
        %1591 = vmatpush1.msra.mxu0 0.0
        %1592 = vmatprep.subr.mxu0 0.0
        %1593 = vmatpush1.msra.mxu0 0.0
        %1594 = vmatprep.subr.mxu0 0.0
        %1595 = vmatpush1.msra.mxu0 0.0
        %1596 = vmatprep.subr.mxu0 0.0
        %1597 = vmatpush1.msra.mxu0 0.0
        %1598 = vmatprep.subr.mxu0 0.0
        %1599 = vmatpush1.msra.mxu0 0.0
        %1600 = vmatprep.subr.mxu0 0.0
        %1601 = vmatpush1.msra.mxu0 0.0
        %1602 = vmatprep.subr.mxu0 0.0
        %1603 = vmatpush1.msra.mxu0 0.0
        %1604 = vmatprep.subr.mxu0 0.0
        %1605 = vmatpush1.msra.mxu0 0.0
        %1606 = vmatprep.subr.mxu0 0.0
        %1607 = vmatpush1.msra.mxu0 0.0
        %1608 = vmatprep.subr.mxu0 0.0
        %1609 = vmatpush1.msra.mxu0 0.0
        %1610 = vmatprep.subr.mxu0 0.0
        %1611 = vmatpush1.msra.mxu0 0.0
        %1612 = vmatprep.subr.mxu0 0.0
        %1613 = vmatpush1.msra.mxu0 0.0
        %1614 = vmatprep.subr.mxu0 0.0
        %1615 = vmatpush1.msra.mxu0 0.0
        %1616 = vmatprep.subr.mxu0 0.0
        %1617 = vmatpush1.msra.mxu0 0.0
        %1618 = vmatprep.mubr.f32.mxu0 0.0
        %1619 = vmatmul.mubr.f32.gmra.mrb[0].mxu0 %v1552
        %v1620 = vpop.f32.mrb[0].mxu0
        %v1621 = vadd.f32 0.0, %v1620
        %v1622 = vpop.f32.mrb[0].mxu0
        %1623 = vdwg.mxu0
        %v1624 = vadd.f32 %v1546, %v1621
        %v1625 = vld [vmem:[#allocation2 + $0x4] sm:$0xff]
        %s1626 = scalar_lea.vmem [#allocation15], 144
        %v1627 = vld [vmem:[%s1626] sm:$0xff]
        %v1628 = vld [vmem:[%s1626 + $0x8] sm:$0xff]
        %v1630 = vsel %vm905, %v1625, 0
        %1632 = vmatprep.subr.mxu0 0.0
        %1633 = vmatpush1.msra.mxu0 %v1627
        %1634 = vmatprep.subr.mxu0 0.0
        %1635 = vmatpush1.msra.mxu0 %v1628
        %1636 = vmatprep.subr.mxu0 0.0
        %1637 = vmatpush1.msra.mxu0 0.0
        %1638 = vmatprep.subr.mxu0 0.0
        %1639 = vmatpush1.msra.mxu0 0.0
        %1640 = vmatprep.subr.mxu0 0.0
        %1641 = vmatpush1.msra.mxu0 0.0
        %1642 = vmatprep.subr.mxu0 0.0
        %1643 = vmatpush1.msra.mxu0 0.0
        %1644 = vmatprep.subr.mxu0 0.0
        %1645 = vmatpush1.msra.mxu0 0.0
        %1646 = vmatprep.subr.mxu0 0.0
        %1647 = vmatpush1.msra.mxu0 0.0
        %1648 = vmatprep.subr.mxu0 0.0
        %1649 = vmatpush1.msra.mxu0 0.0
        %1650 = vmatprep.subr.mxu0 0.0
        %1651 = vmatpush1.msra.mxu0 0.0
        %1652 = vmatprep.subr.mxu0 0.0
        %1653 = vmatpush1.msra.mxu0 0.0
        %1654 = vmatprep.subr.mxu0 0.0
        %1655 = vmatpush1.msra.mxu0 0.0
        %1656 = vmatprep.subr.mxu0 0.0
        %1657 = vmatpush1.msra.mxu0 0.0
        %1658 = vmatprep.subr.mxu0 0.0
        %1659 = vmatpush1.msra.mxu0 0.0
        %1660 = vmatprep.subr.mxu0 0.0
        %1661 = vmatpush1.msra.mxu0 0.0
        %1662 = vmatprep.subr.mxu0 0.0
        %1663 = vmatpush1.msra.mxu0 0.0
        %1664 = vmatprep.subr.mxu0 0.0
        %1665 = vmatpush1.msra.mxu0 0.0
        %1666 = vmatprep.subr.mxu0 0.0
        %1667 = vmatpush1.msra.mxu0 0.0
        %1668 = vmatprep.subr.mxu0 0.0
        %1669 = vmatpush1.msra.mxu0 0.0
        %1670 = vmatprep.subr.mxu0 0.0
        %1671 = vmatpush1.msra.mxu0 0.0
        %1672 = vmatprep.subr.mxu0 0.0
        %1673 = vmatpush1.msra.mxu0 0.0
        %1674 = vmatprep.subr.mxu0 0.0
        %1675 = vmatpush1.msra.mxu0 0.0
        %1676 = vmatprep.subr.mxu0 0.0
        %1677 = vmatpush1.msra.mxu0 0.0
        %1678 = vmatprep.subr.mxu0 0.0
        %1679 = vmatpush1.msra.mxu0 0.0
        %1680 = vmatprep.subr.mxu0 0.0
        %1681 = vmatpush1.msra.mxu0 0.0
        %1682 = vmatprep.subr.mxu0 0.0
        %1683 = vmatpush1.msra.mxu0 0.0
        %1684 = vmatprep.subr.mxu0 0.0
        %1685 = vmatpush1.msra.mxu0 0.0
        %1686 = vmatprep.subr.mxu0 0.0
        %1687 = vmatpush1.msra.mxu0 0.0
        %1688 = vmatprep.subr.mxu0 0.0
        %1689 = vmatpush1.msra.mxu0 0.0
        %1690 = vmatprep.subr.mxu0 0.0
        %1691 = vmatpush1.msra.mxu0 0.0
        %1692 = vmatprep.subr.mxu0 0.0
        %1693 = vmatpush1.msra.mxu0 0.0
        %1694 = vmatprep.subr.mxu0 0.0
        %1695 = vmatpush1.msra.mxu0 0.0
        %1696 = vmatprep.mubr.f32.mxu0 0.0
        %1697 = vmatmul.mubr.f32.gmra.mrb[0].mxu0 %v1630
        %v1698 = vpop.f32.mrb[0].mxu0
        %v1699 = vadd.f32 0.0, %v1698
        %v1700 = vpop.f32.mrb[0].mxu0
        %1701 = vdwg.mxu0
        %v1702 = vadd.f32 %v1624, %v1699
        %s1703 = scalar_lea.vmem [#allocation17], 1
        %v1704 = vld [vmem:[%s1703] sm:$0x1]
        %v1706 = vlaneseq
        %v1707 = vshrl.u32 %v1706, 7
        %v1708 = vsub.s32 0, %v1707
        %v1709 = vrot.slane %v1704, %v1708
        %v1711 = vadd.f32 %v1702, %v1709
        %v1712 = vxor.u32 %v1711, 2147483648
        %v1713 = vmul.f32 %v1712, 1.442695
        %v1714 = vpow.pop %v1713
        %v1715 = vadd.f32 %v1714, 1.0
        %v1716 = vrcp.pop %v1715
        %v1717 = vmul.f32 1.0, %v1716
        %1719 = vrot.lane.b32.xlu0 %v1717, 112
        %v1720 = vpop.permute.xlu0 %1719
        %v1722 = vmul.f32 %v1711, %v1720
        %v1723 = vmul.f32 %v1722, %v902
        %1724 = vst.msk [vmem:[#allocation2 + $0x2] sm:$0xff] %vm905, %v1723
        %v1725 = vld [vmem:[#allocation2] sm:$0xff]
        %s1726 = scalar_lea.vmem [#allocation15], 160
        %v1727 = vld [vmem:[%s1726] sm:$0xff]
        %v1728 = vld [vmem:[%s1726 + $0x8] sm:$0xff]
        %v1729 = vld [vmem:[#allocation2 + $0x1] sm:$0xff]
        %s1730 = scalar_lea.vmem [#allocation15], 176
        %v1731 = vld [vmem:[%s1730] sm:$0xff]
        %v1732 = vld [vmem:[%s1730 + $0x8] sm:$0xff]
        %v1734 = vsel %vm905, %v1729, 0
        %1736 = vmatprep.subr.mxu0 0.0
        %1737 = vmatpush1.msra.mxu0 %v1731
        %1738 = vmatprep.subr.mxu0 0.0
        %1739 = vmatpush1.msra.mxu0 %v1732
        %1740 = vmatprep.subr.mxu0 0.0
        %1741 = vmatpush1.msra.mxu0 0.0
        %1742 = vmatprep.subr.mxu0 0.0
        %1743 = vmatpush1.msra.mxu0 0.0
        %1744 = vmatprep.subr.mxu0 0.0
        %1745 = vmatpush1.msra.mxu0 0.0
        %1746 = vmatprep.subr.mxu0 0.0
        %1747 = vmatpush1.msra.mxu0 0.0
        %1748 = vmatprep.subr.mxu0 0.0
        %1749 = vmatpush1.msra.mxu0 0.0
        %1750 = vmatprep.subr.mxu0 0.0
        %1751 = vmatpush1.msra.mxu0 0.0
        %1752 = vmatprep.subr.mxu0 0.0
        %1753 = vmatpush1.msra.mxu0 0.0
        %1754 = vmatprep.subr.mxu0 0.0
        %1755 = vmatpush1.msra.mxu0 0.0
        %1756 = vmatprep.subr.mxu0 0.0
        %1757 = vmatpush1.msra.mxu0 0.0
        %1758 = vmatprep.subr.mxu0 0.0
        %1759 = vmatpush1.msra.mxu0 0.0
        %1760 = vmatprep.subr.mxu0 0.0
        %1761 = vmatpush1.msra.mxu0 0.0
        %1762 = vmatprep.subr.mxu0 0.0
        %1763 = vmatpush1.msra.mxu0 0.0
        %1764 = vmatprep.subr.mxu0 0.0
        %1765 = vmatpush1.msra.mxu0 0.0
        %1766 = vmatprep.subr.mxu0 0.0
        %1767 = vmatpush1.msra.mxu0 0.0
        %1768 = vmatprep.subr.mxu0 0.0
        %1769 = vmatpush1.msra.mxu0 0.0
        %1770 = vmatprep.subr.mxu0 0.0
        %1771 = vmatpush1.msra.mxu0 0.0
        %1772 = vmatprep.subr.mxu0 0.0
        %1773 = vmatpush1.msra.mxu0 0.0
        %1774 = vmatprep.subr.mxu0 0.0
        %1775 = vmatpush1.msra.mxu0 0.0
        %1776 = vmatprep.subr.mxu0 0.0
        %1777 = vmatpush1.msra.mxu0 0.0
        %1778 = vmatprep.subr.mxu0 0.0
        %1779 = vmatpush1.msra.mxu0 0.0
        %1780 = vmatprep.subr.mxu0 0.0
        %1781 = vmatpush1.msra.mxu0 0.0
        %1782 = vmatprep.subr.mxu0 0.0
        %1783 = vmatpush1.msra.mxu0 0.0
        %1784 = vmatprep.subr.mxu0 0.0
        %1785 = vmatpush1.msra.mxu0 0.0
        %1786 = vmatprep.subr.mxu0 0.0
        %1787 = vmatpush1.msra.mxu0 0.0
        %1788 = vmatprep.subr.mxu0 0.0
        %1789 = vmatpush1.msra.mxu0 0.0
        %1790 = vmatprep.subr.mxu0 0.0
        %1791 = vmatpush1.msra.mxu0 0.0
        %1792 = vmatprep.subr.mxu0 0.0
        %1793 = vmatpush1.msra.mxu0 0.0
        %1794 = vmatprep.subr.mxu0 0.0
        %1795 = vmatpush1.msra.mxu0 0.0
        %1796 = vmatprep.subr.mxu0 0.0
        %1797 = vmatpush1.msra.mxu0 0.0
        %1798 = vmatprep.subr.mxu0 0.0
        %1799 = vmatpush1.msra.mxu0 0.0
        %1800 = vmatprep.mubr.f32.mxu0 0.0
        %1801 = vmatmul.mubr.f32.gmra.mrb[0].mxu0 %v1734
        %v1802 = vpop.f32.mrb[0].mxu0
        %v1803 = vadd.f32 0.0, %v1802
        %v1804 = vpop.f32.mrb[0].mxu0
        %1805 = vdwg.mxu0
        %v1807 = vsel %vm905, %v1725, 0
        %1809 = vmatprep.subr.mxu0 0.0
        %1810 = vmatpush1.msra.mxu0 %v1727
        %1811 = vmatprep.subr.mxu0 0.0
        %1812 = vmatpush1.msra.mxu0 %v1728
        %1813 = vmatprep.subr.mxu0 0.0
        %1814 = vmatpush1.msra.mxu0 0.0
        %1815 = vmatprep.subr.mxu0 0.0
        %1816 = vmatpush1.msra.mxu0 0.0
        %1817 = vmatprep.subr.mxu0 0.0
        %1818 = vmatpush1.msra.mxu0 0.0
        %1819 = vmatprep.subr.mxu0 0.0
        %1820 = vmatpush1.msra.mxu0 0.0
        %1821 = vmatprep.subr.mxu0 0.0
        %1822 = vmatpush1.msra.mxu0 0.0
        %1823 = vmatprep.subr.mxu0 0.0
        %1824 = vmatpush1.msra.mxu0 0.0
        %1825 = vmatprep.subr.mxu0 0.0
        %1826 = vmatpush1.msra.mxu0 0.0
        %1827 = vmatprep.subr.mxu0 0.0
        %1828 = vmatpush1.msra.mxu0 0.0
        %1829 = vmatprep.subr.mxu0 0.0
        %1830 = vmatpush1.msra.mxu0 0.0
        %1831 = vmatprep.subr.mxu0 0.0
        %1832 = vmatpush1.msra.mxu0 0.0
        %1833 = vmatprep.subr.mxu0 0.0
        %1834 = vmatpush1.msra.mxu0 0.0
        %1835 = vmatprep.subr.mxu0 0.0
        %1836 = vmatpush1.msra.mxu0 0.0
        %1837 = vmatprep.subr.mxu0 0.0
        %1838 = vmatpush1.msra.mxu0 0.0
        %1839 = vmatprep.subr.mxu0 0.0
        %1840 = vmatpush1.msra.mxu0 0.0
        %1841 = vmatprep.subr.mxu0 0.0
        %1842 = vmatpush1.msra.mxu0 0.0
        %1843 = vmatprep.subr.mxu0 0.0
        %1844 = vmatpush1.msra.mxu0 0.0
        %1845 = vmatprep.subr.mxu0 0.0
        %1846 = vmatpush1.msra.mxu0 0.0
        %1847 = vmatprep.subr.mxu0 0.0
        %1848 = vmatpush1.msra.mxu0 0.0
        %1849 = vmatprep.subr.mxu0 0.0
        %1850 = vmatpush1.msra.mxu0 0.0
        %1851 = vmatprep.subr.mxu0 0.0
        %1852 = vmatpush1.msra.mxu0 0.0
        %1853 = vmatprep.subr.mxu0 0.0
        %1854 = vmatpush1.msra.mxu0 0.0
        %1855 = vmatprep.subr.mxu0 0.0
        %1856 = vmatpush1.msra.mxu0 0.0
        %1857 = vmatprep.subr.mxu0 0.0
        %1858 = vmatpush1.msra.mxu0 0.0
        %1859 = vmatprep.subr.mxu0 0.0
        %1860 = vmatpush1.msra.mxu0 0.0
        %1861 = vmatprep.subr.mxu0 0.0
        %1862 = vmatpush1.msra.mxu0 0.0
        %1863 = vmatprep.subr.mxu0 0.0
        %1864 = vmatpush1.msra.mxu0 0.0
        %1865 = vmatprep.subr.mxu0 0.0
        %1866 = vmatpush1.msra.mxu0 0.0
        %1867 = vmatprep.subr.mxu0 0.0
        %1868 = vmatpush1.msra.mxu0 0.0
        %1869 = vmatprep.subr.mxu0 0.0
        %1870 = vmatpush1.msra.mxu0 0.0
        %1871 = vmatprep.subr.mxu0 0.0
        %1872 = vmatpush1.msra.mxu0 0.0
        %1873 = vmatprep.mubr.f32.mxu0 0.0
        %1874 = vmatmul.mubr.f32.gmra.mrb[0].mxu0 %v1807
        %v1875 = vpop.f32.mrb[0].mxu0
        %v1876 = vadd.f32 %v1803, %v1875
        %v1877 = vpop.f32.mrb[0].mxu0
        %1878 = vdwg.mxu0
        %v1879 = vld [vmem:[#allocation2 + $0x2] sm:$0xff]
        %s1880 = scalar_lea.vmem [#allocation15], 192
        %v1881 = vld [vmem:[%s1880] sm:$0xff]
        %v1882 = vld [vmem:[%s1880 + $0x8] sm:$0xff]
        %v1884 = vsel %vm905, %v1879, 0
        %1886 = vmatprep.subr.mxu0 0.0
        %1887 = vmatpush1.msra.mxu0 %v1881
        %1888 = vmatprep.subr.mxu0 0.0
        %1889 = vmatpush1.msra.mxu0 %v1882
        %1890 = vmatprep.subr.mxu0 0.0
        %1891 = vmatpush1.msra.mxu0 0.0
        %1892 = vmatprep.subr.mxu0 0.0
        %1893 = vmatpush1.msra.mxu0 0.0
        %1894 = vmatprep.subr.mxu0 0.0
        %1895 = vmatpush1.msra.mxu0 0.0
        %1896 = vmatprep.subr.mxu0 0.0
        %1897 = vmatpush1.msra.mxu0 0.0
        %1898 = vmatprep.subr.mxu0 0.0
        %1899 = vmatpush1.msra.mxu0 0.0
        %1900 = vmatprep.subr.mxu0 0.0
        %1901 = vmatpush1.msra.mxu0 0.0
        %1902 = vmatprep.subr.mxu0 0.0
        %1903 = vmatpush1.msra.mxu0 0.0
        %1904 = vmatprep.subr.mxu0 0.0
        %1905 = vmatpush1.msra.mxu0 0.0
        %1906 = vmatprep.subr.mxu0 0.0
        %1907 = vmatpush1.msra.mxu0 0.0
        %1908 = vmatprep.subr.mxu0 0.0
        %1909 = vmatpush1.msra.mxu0 0.0
        %1910 = vmatprep.subr.mxu0 0.0
        %1911 = vmatpush1.msra.mxu0 0.0
        %1912 = vmatprep.subr.mxu0 0.0
        %1913 = vmatpush1.msra.mxu0 0.0
        %1914 = vmatprep.subr.mxu0 0.0
        %1915 = vmatpush1.msra.mxu0 0.0
        %1916 = vmatprep.subr.mxu0 0.0
        %1917 = vmatpush1.msra.mxu0 0.0
        %1918 = vmatprep.subr.mxu0 0.0
        %1919 = vmatpush1.msra.mxu0 0.0
        %1920 = vmatprep.subr.mxu0 0.0
        %1921 = vmatpush1.msra.mxu0 0.0
        %1922 = vmatprep.subr.mxu0 0.0
        %1923 = vmatpush1.msra.mxu0 0.0
        %1924 = vmatprep.subr.mxu0 0.0
        %1925 = vmatpush1.msra.mxu0 0.0
        %1926 = vmatprep.subr.mxu0 0.0
        %1927 = vmatpush1.msra.mxu0 0.0
        %1928 = vmatprep.subr.mxu0 0.0
        %1929 = vmatpush1.msra.mxu0 0.0
        %1930 = vmatprep.subr.mxu0 0.0
        %1931 = vmatpush1.msra.mxu0 0.0
        %1932 = vmatprep.subr.mxu0 0.0
        %1933 = vmatpush1.msra.mxu0 0.0
        %1934 = vmatprep.subr.mxu0 0.0
        %1935 = vmatpush1.msra.mxu0 0.0
        %1936 = vmatprep.subr.mxu0 0.0
        %1937 = vmatpush1.msra.mxu0 0.0
        %1938 = vmatprep.subr.mxu0 0.0
        %1939 = vmatpush1.msra.mxu0 0.0
        %1940 = vmatprep.subr.mxu0 0.0
        %1941 = vmatpush1.msra.mxu0 0.0
        %1942 = vmatprep.subr.mxu0 0.0
        %1943 = vmatpush1.msra.mxu0 0.0
        %1944 = vmatprep.subr.mxu0 0.0
        %1945 = vmatpush1.msra.mxu0 0.0
        %1946 = vmatprep.subr.mxu0 0.0
        %1947 = vmatpush1.msra.mxu0 0.0
        %1948 = vmatprep.subr.mxu0 0.0
        %1949 = vmatpush1.msra.mxu0 0.0
        %1950 = vmatprep.mubr.f32.mxu0 0.0
        %1951 = vmatmul.mubr.f32.gmra.mrb[0].mxu0 %v1884
        %v1952 = vpop.f32.mrb[0].mxu0
        %v1953 = vadd.f32 0.0, %v1952
        %v1954 = vpop.f32.mrb[0].mxu0
        %1955 = vdwg.mxu0
        %v1956 = vadd.f32 %v1876, %v1953
        %v1957 = vld [vmem:[#allocation2 + $0x3] sm:$0xff]
        %s1958 = scalar_lea.vmem [#allocation15], 208
        %v1959 = vld [vmem:[%s1958] sm:$0xff]
        %v1960 = vld [vmem:[%s1958 + $0x8] sm:$0xff]
        %v1962 = vsel %vm905, %v1957, 0
        %1964 = vmatprep.subr.mxu0 0.0
        %1965 = vmatpush1.msra.mxu0 %v1959
        %1966 = vmatprep.subr.mxu0 0.0
        %1967 = vmatpush1.msra.mxu0 %v1960
        %1968 = vmatprep.subr.mxu0 0.0
        %1969 = vmatpush1.msra.mxu0 0.0
        %1970 = vmatprep.subr.mxu0 0.0
        %1971 = vmatpush1.msra.mxu0 0.0
        %1972 = vmatprep.subr.mxu0 0.0
        %1973 = vmatpush1.msra.mxu0 0.0
        %1974 = vmatprep.subr.mxu0 0.0
        %1975 = vmatpush1.msra.mxu0 0.0
        %1976 = vmatprep.subr.mxu0 0.0
        %1977 = vmatpush1.msra.mxu0 0.0
        %1978 = vmatprep.subr.mxu0 0.0
        %1979 = vmatpush1.msra.mxu0 0.0
        %1980 = vmatprep.subr.mxu0 0.0
        %1981 = vmatpush1.msra.mxu0 0.0
        %1982 = vmatprep.subr.mxu0 0.0
        %1983 = vmatpush1.msra.mxu0 0.0
        %1984 = vmatprep.subr.mxu0 0.0
        %1985 = vmatpush1.msra.mxu0 0.0
        %1986 = vmatprep.subr.mxu0 0.0
        %1987 = vmatpush1.msra.mxu0 0.0
        %1988 = vmatprep.subr.mxu0 0.0
        %1989 = vmatpush1.msra.mxu0 0.0
        %1990 = vmatprep.subr.mxu0 0.0
        %1991 = vmatpush1.msra.mxu0 0.0
        %1992 = vmatprep.subr.mxu0 0.0
        %1993 = vmatpush1.msra.mxu0 0.0
        %1994 = vmatprep.subr.mxu0 0.0
        %1995 = vmatpush1.msra.mxu0 0.0
        %1996 = vmatprep.subr.mxu0 0.0
        %1997 = vmatpush1.msra.mxu0 0.0
        %1998 = vmatprep.subr.mxu0 0.0
        %1999 = vmatpush1.msra.mxu0 0.0
        %2000 = vmatprep.subr.mxu0 0.0
        %2001 = vmatpush1.msra.mxu0 0.0
        %2002 = vmatprep.subr.mxu0 0.0
        %2003 = vmatpush1.msra.mxu0 0.0
        %2004 = vmatprep.subr.mxu0 0.0
        %2005 = vmatpush1.msra.mxu0 0.0
        %2006 = vmatprep.subr.mxu0 0.0
        %2007 = vmatpush1.msra.mxu0 0.0
        %2008 = vmatprep.subr.mxu0 0.0
        %2009 = vmatpush1.msra.mxu0 0.0
        %2010 = vmatprep.subr.mxu0 0.0
        %2011 = vmatpush1.msra.mxu0 0.0
        %2012 = vmatprep.subr.mxu0 0.0
        %2013 = vmatpush1.msra.mxu0 0.0
        %2014 = vmatprep.subr.mxu0 0.0
        %2015 = vmatpush1.msra.mxu0 0.0
        %2016 = vmatprep.subr.mxu0 0.0
        %2017 = vmatpush1.msra.mxu0 0.0
        %2018 = vmatprep.subr.mxu0 0.0
        %2019 = vmatpush1.msra.mxu0 0.0
        %2020 = vmatprep.subr.mxu0 0.0
        %2021 = vmatpush1.msra.mxu0 0.0
        %2022 = vmatprep.subr.mxu0 0.0
        %2023 = vmatpush1.msra.mxu0 0.0
        %2024 = vmatprep.subr.mxu0 0.0
        %2025 = vmatpush1.msra.mxu0 0.0
        %2026 = vmatprep.subr.mxu0 0.0
        %2027 = vmatpush1.msra.mxu0 0.0
        %2028 = vmatprep.mubr.f32.mxu0 0.0
        %2029 = vmatmul.mubr.f32.gmra.mrb[0].mxu0 %v1962
        %v2030 = vpop.f32.mrb[0].mxu0
        %v2031 = vadd.f32 0.0, %v2030
        %v2032 = vpop.f32.mrb[0].mxu0
        %2033 = vdwg.mxu0
        %v2034 = vadd.f32 %v1956, %v2031
        %v2035 = vld [vmem:[#allocation2 + $0x4] sm:$0xff]
        %s2036 = scalar_lea.vmem [#allocation15], 224
        %v2037 = vld [vmem:[%s2036] sm:$0xff]
        %v2038 = vld [vmem:[%s2036 + $0x8] sm:$0xff]
        %v2040 = vsel %vm905, %v2035, 0
        %2042 = vmatprep.subr.mxu0 0.0
        %2043 = vmatpush1.msra.mxu0 %v2037
        %2044 = vmatprep.subr.mxu0 0.0
        %2045 = vmatpush1.msra.mxu0 %v2038
        %2046 = vmatprep.subr.mxu0 0.0
        %2047 = vmatpush1.msra.mxu0 0.0
        %2048 = vmatprep.subr.mxu0 0.0
        %2049 = vmatpush1.msra.mxu0 0.0
        %2050 = vmatprep.subr.mxu0 0.0
        %2051 = vmatpush1.msra.mxu0 0.0
        %2052 = vmatprep.subr.mxu0 0.0
        %2053 = vmatpush1.msra.mxu0 0.0
        %2054 = vmatprep.subr.mxu0 0.0
        %2055 = vmatpush1.msra.mxu0 0.0
        %2056 = vmatprep.subr.mxu0 0.0
        %2057 = vmatpush1.msra.mxu0 0.0
        %2058 = vmatprep.subr.mxu0 0.0
        %2059 = vmatpush1.msra.mxu0 0.0
        %2060 = vmatprep.subr.mxu0 0.0
        %2061 = vmatpush1.msra.mxu0 0.0
        %2062 = vmatprep.subr.mxu0 0.0
        %2063 = vmatpush1.msra.mxu0 0.0
        %2064 = vmatprep.subr.mxu0 0.0
        %2065 = vmatpush1.msra.mxu0 0.0
        %2066 = vmatprep.subr.mxu0 0.0
        %2067 = vmatpush1.msra.mxu0 0.0
        %2068 = vmatprep.subr.mxu0 0.0
        %2069 = vmatpush1.msra.mxu0 0.0
        %2070 = vmatprep.subr.mxu0 0.0
        %2071 = vmatpush1.msra.mxu0 0.0
        %2072 = vmatprep.subr.mxu0 0.0
        %2073 = vmatpush1.msra.mxu0 0.0
        %2074 = vmatprep.subr.mxu0 0.0
        %2075 = vmatpush1.msra.mxu0 0.0
        %2076 = vmatprep.subr.mxu0 0.0
        %2077 = vmatpush1.msra.mxu0 0.0
        %2078 = vmatprep.subr.mxu0 0.0
        %2079 = vmatpush1.msra.mxu0 0.0
        %2080 = vmatprep.subr.mxu0 0.0
        %2081 = vmatpush1.msra.mxu0 0.0
        %2082 = vmatprep.subr.mxu0 0.0
        %2083 = vmatpush1.msra.mxu0 0.0
        %2084 = vmatprep.subr.mxu0 0.0
        %2085 = vmatpush1.msra.mxu0 0.0
        %2086 = vmatprep.subr.mxu0 0.0
        %2087 = vmatpush1.msra.mxu0 0.0
        %2088 = vmatprep.subr.mxu0 0.0
        %2089 = vmatpush1.msra.mxu0 0.0
        %2090 = vmatprep.subr.mxu0 0.0
        %2091 = vmatpush1.msra.mxu0 0.0
        %2092 = vmatprep.subr.mxu0 0.0
        %2093 = vmatpush1.msra.mxu0 0.0
        %2094 = vmatprep.subr.mxu0 0.0
        %2095 = vmatpush1.msra.mxu0 0.0
        %2096 = vmatprep.subr.mxu0 0.0
        %2097 = vmatpush1.msra.mxu0 0.0
        %2098 = vmatprep.subr.mxu0 0.0
        %2099 = vmatpush1.msra.mxu0 0.0
        %2100 = vmatprep.subr.mxu0 0.0
        %2101 = vmatpush1.msra.mxu0 0.0
        %2102 = vmatprep.subr.mxu0 0.0
        %2103 = vmatpush1.msra.mxu0 0.0
        %2104 = vmatprep.subr.mxu0 0.0
        %2105 = vmatpush1.msra.mxu0 0.0
        %2106 = vmatprep.mubr.f32.mxu0 0.0
        %2107 = vmatmul.mubr.f32.gmra.mrb[0].mxu0 %v2040
        %v2108 = vpop.f32.mrb[0].mxu0
        %v2109 = vadd.f32 0.0, %v2108
        %v2110 = vpop.f32.mrb[0].mxu0
        %2111 = vdwg.mxu0
        %v2112 = vadd.f32 %v2034, %v2109
        %s2113 = scalar_lea.vmem [#allocation17], 2
        %v2114 = vld [vmem:[%s2113] sm:$0x1]
        %v2116 = vlaneseq
        %v2117 = vshrl.u32 %v2116, 7
        %v2118 = vsub.s32 0, %v2117
        %v2119 = vrot.slane %v2114, %v2118
        %v2121 = vadd.f32 %v2112, %v2119
        %v2122 = vxor.u32 %v2121, 2147483648
        %v2123 = vmul.f32 %v2122, 1.442695
        %v2124 = vpow.pop %v2123
        %v2125 = vadd.f32 %v2124, 1.0
        %v2126 = vrcp.pop %v2125
        %v2127 = vmul.f32 1.0, %v2126
        %2129 = vrot.lane.b32.xlu0 %v2127, 112
        %v2130 = vpop.permute.xlu0 %2129
        %v2132 = vmul.f32 %v2121, %v2130
        %v2133 = vld [vmem:[#allocation18] sm:$0xff]
        %v2134 = vld [vmem:[#allocation18 + $0x8] sm:$0xff]
        %v2135 = vld [vmem:[#allocation20] sm:$0x1]
        %v2137 = vlaneseq
        %v2138 = vshrl.u32 %v2137, 7
        %v2139 = vsub.s32 0, %v2138
        %v2140 = vrot.slane %v2135, %v2139
        %v2143 = vsel %vm905, %v2132, 0
        %2145 = vmatprep.subr.mxu0 0.0
        %2146 = vmatpush1.msra.mxu0 %v2133
        %2147 = vmatprep.subr.mxu0 0.0
        %2148 = vmatpush1.msra.mxu0 %v2134
        %2149 = vmatprep.subr.mxu0 0.0
        %2150 = vmatpush1.msra.mxu0 0.0
        %2151 = vmatprep.subr.mxu0 0.0
        %2152 = vmatpush1.msra.mxu0 0.0
        %2153 = vmatprep.subr.mxu0 0.0
        %2154 = vmatpush1.msra.mxu0 0.0
        %2155 = vmatprep.subr.mxu0 0.0
        %2156 = vmatpush1.msra.mxu0 0.0
        %2157 = vmatprep.subr.mxu0 0.0
        %2158 = vmatpush1.msra.mxu0 0.0
        %2159 = vmatprep.subr.mxu0 0.0
        %2160 = vmatpush1.msra.mxu0 0.0
        %2161 = vmatprep.subr.mxu0 0.0
        %2162 = vmatpush1.msra.mxu0 0.0
        %2163 = vmatprep.subr.mxu0 0.0
        %2164 = vmatpush1.msra.mxu0 0.0
        %2165 = vmatprep.subr.mxu0 0.0
        %2166 = vmatpush1.msra.mxu0 0.0
        %2167 = vmatprep.subr.mxu0 0.0
        %2168 = vmatpush1.msra.mxu0 0.0
        %2169 = vmatprep.subr.mxu0 0.0
        %2170 = vmatpush1.msra.mxu0 0.0
        %2171 = vmatprep.subr.mxu0 0.0
        %2172 = vmatpush1.msra.mxu0 0.0
        %2173 = vmatprep.subr.mxu0 0.0
        %2174 = vmatpush1.msra.mxu0 0.0
        %2175 = vmatprep.subr.mxu0 0.0
        %2176 = vmatpush1.msra.mxu0 0.0
        %2177 = vmatprep.subr.mxu0 0.0
        %2178 = vmatpush1.msra.mxu0 0.0
        %2179 = vmatprep.subr.mxu0 0.0
        %2180 = vmatpush1.msra.mxu0 0.0
        %2181 = vmatprep.subr.mxu0 0.0
        %2182 = vmatpush1.msra.mxu0 0.0
        %2183 = vmatprep.subr.mxu0 0.0
        %2184 = vmatpush1.msra.mxu0 0.0
        %2185 = vmatprep.subr.mxu0 0.0
        %2186 = vmatpush1.msra.mxu0 0.0
        %2187 = vmatprep.subr.mxu0 0.0
        %2188 = vmatpush1.msra.mxu0 0.0
        %2189 = vmatprep.subr.mxu0 0.0
        %2190 = vmatpush1.msra.mxu0 0.0
        %2191 = vmatprep.subr.mxu0 0.0
        %2192 = vmatpush1.msra.mxu0 0.0
        %2193 = vmatprep.subr.mxu0 0.0
        %2194 = vmatpush1.msra.mxu0 0.0
        %2195 = vmatprep.subr.mxu0 0.0
        %2196 = vmatpush1.msra.mxu0 0.0
        %2197 = vmatprep.subr.mxu0 0.0
        %2198 = vmatpush1.msra.mxu0 0.0
        %2199 = vmatprep.subr.mxu0 0.0
        %2200 = vmatpush1.msra.mxu0 0.0
        %2201 = vmatprep.subr.mxu0 0.0
        %2202 = vmatpush1.msra.mxu0 0.0
        %2203 = vmatprep.subr.mxu0 0.0
        %2204 = vmatpush1.msra.mxu0 0.0
        %2205 = vmatprep.subr.mxu0 0.0
        %2206 = vmatpush1.msra.mxu0 0.0
        %2207 = vmatprep.subr.mxu0 0.0
        %2208 = vmatpush1.msra.mxu0 0.0
        %2209 = vmatprep.mubr.f32.mxu0 0.0
        %2210 = vmatmul.mubr.f32.gmra.mrb[0].mxu0 %v2143
        %v2211 = vpop.f32.mrb[0].mxu0
        %v2212 = vadd.f32 %v2140, %v2211
        %v2213 = vpop.f32.mrb[0].mxu0
        %2214 = vdwg.mxu0
        %v2215 = vadd.f32 %v2212, %v1723
        %v2216 = vmul.f32 %v2215, 0.70710677
        %v2218 = vsel %vm905, %v2216, 0
        %2220 = vmatprep.subr.mxu0 0.0
        %2221 = vmatpush1.xpose.msra.mxu0 %v2143
        %2222 = vmatprep.subr.mxu0 0.0
        %2223 = vmatpush1.xpose.msra.mxu0 0.0
        %2224 = vmatprep.subr.mxu0 0.0
        %2225 = vmatpush1.xpose.msra.mxu0 0.0
        %2226 = vmatprep.subr.mxu0 0.0
        %2227 = vmatpush1.xpose.msra.mxu0 0.0
        %2228 = vmatprep.subr.mxu0 0.0
        %2229 = vmatpush1.xpose.msra.mxu0 0.0
        %2230 = vmatprep.subr.mxu0 0.0
        %2231 = vmatpush1.xpose.msra.mxu0 0.0
        %2232 = vmatprep.subr.mxu0 0.0
        %2233 = vmatpush1.xpose.msra.mxu0 0.0
        %2234 = vmatprep.subr.mxu0 0.0
        %2235 = vmatpush1.xpose.msra.mxu0 0.0
        %2236 = vmatprep.subr.mxu0 0.0
        %2237 = vmatpush1.xpose.msra.mxu0 0.0
        %2238 = vmatprep.subr.mxu0 0.0
        %2239 = vmatpush1.xpose.msra.mxu0 0.0
        %2240 = vmatprep.subr.mxu0 0.0
        %2241 = vmatpush1.xpose.msra.mxu0 0.0
        %2242 = vmatprep.subr.mxu0 0.0
        %2243 = vmatpush1.xpose.msra.mxu0 0.0
        %2244 = vmatprep.subr.mxu0 0.0
        %2245 = vmatpush1.xpose.msra.mxu0 0.0
        %2246 = vmatprep.subr.mxu0 0.0
        %2247 = vmatpush1.xpose.msra.mxu0 0.0
        %2248 = vmatprep.subr.mxu0 0.0
        %2249 = vmatpush1.xpose.msra.mxu0 0.0
        %2250 = vmatprep.subr.mxu0 0.0
        %2251 = vmatpush1.xpose.msra.mxu0 0.0
        %2252 = vmatprep.subr.mxu0 0.0
        %2253 = vmatpush1.xpose.msra.mxu0 0.0
        %2254 = vmatprep.subr.mxu0 0.0
        %2255 = vmatpush1.xpose.msra.mxu0 0.0
        %2256 = vmatprep.subr.mxu0 0.0
        %2257 = vmatpush1.xpose.msra.mxu0 0.0
        %2258 = vmatprep.subr.mxu0 0.0
        %2259 = vmatpush1.xpose.msra.mxu0 0.0
        %2260 = vmatprep.subr.mxu0 0.0
        %2261 = vmatpush1.xpose.msra.mxu0 0.0
        %2262 = vmatprep.subr.mxu0 0.0
        %2263 = vmatpush1.xpose.msra.mxu0 0.0
        %2264 = vmatprep.subr.mxu0 0.0
        %2265 = vmatpush1.xpose.msra.mxu0 0.0
        %2266 = vmatprep.subr.mxu0 0.0
        %2267 = vmatpush1.xpose.msra.mxu0 0.0
        %2268 = vmatprep.subr.mxu0 0.0
        %2269 = vmatpush1.xpose.msra.mxu0 0.0
        %2270 = vmatprep.subr.mxu0 0.0
        %2271 = vmatpush1.xpose.msra.mxu0 0.0
        %2272 = vmatprep.subr.mxu0 0.0
        %2273 = vmatpush1.xpose.msra.mxu0 0.0
        %2274 = vmatprep.subr.mxu0 0.0
        %2275 = vmatpush1.xpose.msra.mxu0 0.0
        %2276 = vmatprep.subr.mxu0 0.0
        %2277 = vmatpush1.xpose.msra.mxu0 0.0
        %2278 = vmatprep.subr.mxu0 0.0
        %2279 = vmatpush1.xpose.msra.mxu0 0.0
        %2280 = vmatprep.subr.mxu0 0.0
        %2281 = vmatpush1.xpose.msra.mxu0 0.0
        %2282 = vmatprep.subr.mxu0 0.0
        %2283 = vmatpush1.xpose.msra.mxu0 0.0
        %2284 = vmatprep.mubr.f32.mxu0 0.0
        %2285 = vmatmul.mubr.f32.gmra.mrb[0].mxu0 %v2218
        %v2286 = vpop.f32.mrb[0].mxu0
        %v2287 = vadd.f32 0.0, %v2286
        %v2288 = vpop.f32.mrb[0].mxu0
        %2289 = vdwg.mxu0
        %vm2290 = vcmp.gt.f32.partialorder %v779, 0.5
        %v2291 = vsel %vm2290, 1, 0
        %v2292 = vlaneseq
        %v2293 = vshrl.u32 %v2292, 7
        %v2294 = vsub.s32 0, %v2293
        %v2295 = vrot.slane %v2291, %v2294
        %vm2296 = vcmp.eq.s32.totalorder %v2295, 1
        %v2297 = vsel %vm2296, -1e+30, %v2287
        %vm2298 = vcmask 64512
        %v2299 = vsel %vm2298, %v2297, -inf
        %2300 = vmax.xlane.f32.xlu0 %v2299
        %v2301 = vpop.xlane.xlu0 %2300
        %v2302 = vsub.f32 %v2297, %v2301
        %v2303 = vmul.f32 %v2302, 1.442695
        %v2304 = vpow.pop %v2303
        %v2305 = vsel %vm2298, %v2304, 0.0
        %2306 = vadd.xlane.f32.xlu0 %v2305
        %v2307 = vpop.xlane.xlu0 %2306
        %v2308 = vrcp.pop %v2307
        %v2309 = vmul.f32 %v2304, %v2308
        %v2311 = vsel %vm2298, %v2309, 0
        %2313 = vmatprep.subr.mxu0 0.0
        %2314 = vmatpush1.msra.mxu0 %v2132
        %2315 = vmatprep.subr.mxu0 0.0
        %2316 = vmatpush1.msra.mxu0 0.0
        %2317 = vmatprep.subr.mxu0 0.0
        %2318 = vmatpush1.msra.mxu0 0.0
        %2319 = vmatprep.subr.mxu0 0.0
        %2320 = vmatpush1.msra.mxu0 0.0
        %2321 = vmatprep.subr.mxu0 0.0
        %2322 = vmatpush1.msra.mxu0 0.0
        %2323 = vmatprep.subr.mxu0 0.0
        %2324 = vmatpush1.msra.mxu0 0.0
        %2325 = vmatprep.subr.mxu0 0.0
        %2326 = vmatpush1.msra.mxu0 0.0
        %2327 = vmatprep.subr.mxu0 0.0
        %2328 = vmatpush1.msra.mxu0 0.0
        %2329 = vmatprep.subr.mxu0 0.0
        %2330 = vmatpush1.msra.mxu0 0.0
        %2331 = vmatprep.subr.mxu0 0.0
        %2332 = vmatpush1.msra.mxu0 0.0
        %2333 = vmatprep.subr.mxu0 0.0
        %2334 = vmatpush1.msra.mxu0 0.0
        %2335 = vmatprep.subr.mxu0 0.0
        %2336 = vmatpush1.msra.mxu0 0.0
        %2337 = vmatprep.subr.mxu0 0.0
        %2338 = vmatpush1.msra.mxu0 0.0
        %2339 = vmatprep.subr.mxu0 0.0
        %2340 = vmatpush1.msra.mxu0 0.0
        %2341 = vmatprep.subr.mxu0 0.0
        %2342 = vmatpush1.msra.mxu0 0.0
        %2343 = vmatprep.subr.mxu0 0.0
        %2344 = vmatpush1.msra.mxu0 0.0
        %2345 = vmatprep.subr.mxu0 0.0
        %2346 = vmatpush1.msra.mxu0 0.0
        %2347 = vmatprep.subr.mxu0 0.0
        %2348 = vmatpush1.msra.mxu0 0.0
        %2349 = vmatprep.subr.mxu0 0.0
        %2350 = vmatpush1.msra.mxu0 0.0
        %2351 = vmatprep.subr.mxu0 0.0
        %2352 = vmatpush1.msra.mxu0 0.0
        %2353 = vmatprep.subr.mxu0 0.0
        %2354 = vmatpush1.msra.mxu0 0.0
        %2355 = vmatprep.subr.mxu0 0.0
        %2356 = vmatpush1.msra.mxu0 0.0
        %2357 = vmatprep.subr.mxu0 0.0
        %2358 = vmatpush1.msra.mxu0 0.0
        %2359 = vmatprep.subr.mxu0 0.0
        %2360 = vmatpush1.msra.mxu0 0.0
        %2361 = vmatprep.subr.mxu0 0.0
        %2362 = vmatpush1.msra.mxu0 0.0
        %2363 = vmatprep.subr.mxu0 0.0
        %2364 = vmatpush1.msra.mxu0 0.0
        %2365 = vmatprep.subr.mxu0 0.0
        %2366 = vmatpush1.msra.mxu0 0.0
        %2367 = vmatprep.subr.mxu0 0.0
        %2368 = vmatpush1.msra.mxu0 0.0
        %2369 = vmatprep.subr.mxu0 0.0
        %2370 = vmatpush1.msra.mxu0 0.0
        %2371 = vmatprep.subr.mxu0 0.0
        %2372 = vmatpush1.msra.mxu0 0.0
        %2373 = vmatprep.subr.mxu0 0.0
        %2374 = vmatpush1.msra.mxu0 0.0
        %2375 = vmatprep.subr.mxu0 0.0
        %2376 = vmatpush1.msra.mxu0 0.0
        %2377 = vmatprep.mubr.f32.mxu0 0.0
        %2378 = vmatmul.mubr.f32.gmra.mrb[0].mxu0 %v2311
        %v2379 = vpop.f32.mrb[0].mxu0
        %v2380 = vadd.f32 0.0, %v2379
        %v2381 = vpop.f32.mrb[0].mxu0
        %2382 = vdwg.mxu0
        %v2383 = vmul.f32 %v2380, 2.828427
        %v2384 = vld [vmem:[#allocation21] sm:$0xff]
        %v2385 = vld [vmem:[#allocation21 + $0x8] sm:$0xff]
        %v2386 = vld [vmem:[#allocation23] sm:$0x1]
        %v2388 = vlaneseq
        %v2389 = vshrl.u32 %v2388, 7
        %v2390 = vsub.s32 0, %v2389
        %v2391 = vrot.slane %v2386, %v2390
        %v2394 = vsel %vm905, %v2383, 0
        %2396 = vmatprep.subr.mxu0 0.0
        %2397 = vmatpush1.msra.mxu0 %v2384
        %2398 = vmatprep.subr.mxu0 0.0
        %2399 = vmatpush1.msra.mxu0 %v2385
        %2400 = vmatprep.subr.mxu0 0.0
        %2401 = vmatpush1.msra.mxu0 0.0
        %2402 = vmatprep.subr.mxu0 0.0
        %2403 = vmatpush1.msra.mxu0 0.0
        %2404 = vmatprep.subr.mxu0 0.0
        %2405 = vmatpush1.msra.mxu0 0.0
        %2406 = vmatprep.subr.mxu0 0.0
        %2407 = vmatpush1.msra.mxu0 0.0
        %2408 = vmatprep.subr.mxu0 0.0
        %2409 = vmatpush1.msra.mxu0 0.0
        %2410 = vmatprep.subr.mxu0 0.0
        %2411 = vmatpush1.msra.mxu0 0.0
        %2412 = vmatprep.subr.mxu0 0.0
        %2413 = vmatpush1.msra.mxu0 0.0
        %2414 = vmatprep.subr.mxu0 0.0
        %2415 = vmatpush1.msra.mxu0 0.0
        %2416 = vmatprep.subr.mxu0 0.0
        %2417 = vmatpush1.msra.mxu0 0.0
        %2418 = vmatprep.subr.mxu0 0.0
        %2419 = vmatpush1.msra.mxu0 0.0
        %2420 = vmatprep.subr.mxu0 0.0
        %2421 = vmatpush1.msra.mxu0 0.0
        %2422 = vmatprep.subr.mxu0 0.0
        %2423 = vmatpush1.msra.mxu0 0.0
        %2424 = vmatprep.subr.mxu0 0.0
        %2425 = vmatpush1.msra.mxu0 0.0
        %2426 = vmatprep.subr.mxu0 0.0
        %2427 = vmatpush1.msra.mxu0 0.0
        %2428 = vmatprep.subr.mxu0 0.0
        %2429 = vmatpush1.msra.mxu0 0.0
        %2430 = vmatprep.subr.mxu0 0.0
        %2431 = vmatpush1.msra.mxu0 0.0
        %2432 = vmatprep.subr.mxu0 0.0
        %2433 = vmatpush1.msra.mxu0 0.0
        %2434 = vmatprep.subr.mxu0 0.0
        %2435 = vmatpush1.msra.mxu0 0.0
        %2436 = vmatprep.subr.mxu0 0.0
        %2437 = vmatpush1.msra.mxu0 0.0
        %2438 = vmatprep.subr.mxu0 0.0
        %2439 = vmatpush1.msra.mxu0 0.0
        %2440 = vmatprep.subr.mxu0 0.0
        %2441 = vmatpush1.msra.mxu0 0.0
        %2442 = vmatprep.subr.mxu0 0.0
        %2443 = vmatpush1.msra.mxu0 0.0
        %2444 = vmatprep.subr.mxu0 0.0
        %2445 = vmatpush1.msra.mxu0 0.0
        %2446 = vmatprep.subr.mxu0 0.0
        %2447 = vmatpush1.msra.mxu0 0.0
        %2448 = vmatprep.subr.mxu0 0.0
        %2449 = vmatpush1.msra.mxu0 0.0
        %2450 = vmatprep.subr.mxu0 0.0
        %2451 = vmatpush1.msra.mxu0 0.0
        %2452 = vmatprep.subr.mxu0 0.0
        %2453 = vmatpush1.msra.mxu0 0.0
        %2454 = vmatprep.subr.mxu0 0.0
        %2455 = vmatpush1.msra.mxu0 0.0
        %2456 = vmatprep.subr.mxu0 0.0
        %2457 = vmatpush1.msra.mxu0 0.0
        %2458 = vmatprep.subr.mxu0 0.0
        %2459 = vmatpush1.msra.mxu0 0.0
        %2460 = vmatprep.mubr.f32.mxu0 0.0
        %2461 = vmatmul.mubr.f32.gmra.mrb[0].mxu0 %v2394
        %v2462 = vpop.f32.mrb[0].mxu0
        %v2463 = vadd.f32 %v2391, %v2462
        %v2464 = vpop.f32.mrb[0].mxu0
        %2465 = vdwg.mxu0
        %v2466 = vadd.f32 %v2463, %v2132
        %v2467 = vmul.f32 %v2466, 0.70710677
        %v2468 = vxor.u32 %v2467, 2147483648
        %v2469 = vmul.f32 %v2468, 1.442695
        %v2470 = vpow.pop %v2469
        %v2471 = vadd.f32 %v2470, 1.0
        %v2472 = vrcp.pop %v2471
        %v2473 = vmul.f32 1.0, %v2472
        %v2474 = vmul.f32 %v2132, %v2473
        %v2475 = vld [vmem:[#allocation24] sm:$0xff]
        %v2476 = vld [vmem:[#allocation24 + $0x8] sm:$0xff]
        %v2477 = vld [vmem:[#allocation26] sm:$0x1]
        %v2479 = vlaneseq
        %v2480 = vshrl.u32 %v2479, 7
        %v2481 = vsub.s32 0, %v2480
        %v2482 = vrot.slane %v2477, %v2481
        %v2485 = vsel %vm905, %v2474, 0
        %2487 = vmatprep.subr.mxu0 0.0
        %2488 = vmatpush1.msra.mxu0 %v2475
        %2489 = vmatprep.subr.mxu0 0.0
        %2490 = vmatpush1.msra.mxu0 %v2476
        %2491 = vmatprep.subr.mxu0 0.0
        %2492 = vmatpush1.msra.mxu0 0.0
        %2493 = vmatprep.subr.mxu0 0.0
        %2494 = vmatpush1.msra.mxu0 0.0
        %2495 = vmatprep.subr.mxu0 0.0
        %2496 = vmatpush1.msra.mxu0 0.0
        %2497 = vmatprep.subr.mxu0 0.0
        %2498 = vmatpush1.msra.mxu0 0.0
        %2499 = vmatprep.subr.mxu0 0.0
        %2500 = vmatpush1.msra.mxu0 0.0
        %2501 = vmatprep.subr.mxu0 0.0
        %2502 = vmatpush1.msra.mxu0 0.0
        %2503 = vmatprep.subr.mxu0 0.0
        %2504 = vmatpush1.msra.mxu0 0.0
        %2505 = vmatprep.subr.mxu0 0.0
        %2506 = vmatpush1.msra.mxu0 0.0
        %2507 = vmatprep.subr.mxu0 0.0
        %2508 = vmatpush1.msra.mxu0 0.0
        %2509 = vmatprep.subr.mxu0 0.0
        %2510 = vmatpush1.msra.mxu0 0.0
        %2511 = vmatprep.subr.mxu0 0.0
        %2512 = vmatpush1.msra.mxu0 0.0
        %2513 = vmatprep.subr.mxu0 0.0
        %2514 = vmatpush1.msra.mxu0 0.0
        %2515 = vmatprep.subr.mxu0 0.0
        %2516 = vmatpush1.msra.mxu0 0.0
        %2517 = vmatprep.subr.mxu0 0.0
        %2518 = vmatpush1.msra.mxu0 0.0
        %2519 = vmatprep.subr.mxu0 0.0
        %2520 = vmatpush1.msra.mxu0 0.0
        %2521 = vmatprep.subr.mxu0 0.0
        %2522 = vmatpush1.msra.mxu0 0.0
        %2523 = vmatprep.subr.mxu0 0.0
        %2524 = vmatpush1.msra.mxu0 0.0
        %2525 = vmatprep.subr.mxu0 0.0
        %2526 = vmatpush1.msra.mxu0 0.0
        %2527 = vmatprep.subr.mxu0 0.0
        %2528 = vmatpush1.msra.mxu0 0.0
        %2529 = vmatprep.subr.mxu0 0.0
        %2530 = vmatpush1.msra.mxu0 0.0
        %2531 = vmatprep.subr.mxu0 0.0
        %2532 = vmatpush1.msra.mxu0 0.0
        %2533 = vmatprep.subr.mxu0 0.0
        %2534 = vmatpush1.msra.mxu0 0.0
        %2535 = vmatprep.subr.mxu0 0.0
        %2536 = vmatpush1.msra.mxu0 0.0
        %2537 = vmatprep.subr.mxu0 0.0
        %2538 = vmatpush1.msra.mxu0 0.0
        %2539 = vmatprep.subr.mxu0 0.0
        %2540 = vmatpush1.msra.mxu0 0.0
        %2541 = vmatprep.subr.mxu0 0.0
        %2542 = vmatpush1.msra.mxu0 0.0
        %2543 = vmatprep.subr.mxu0 0.0
        %2544 = vmatpush1.msra.mxu0 0.0
        %2545 = vmatprep.subr.mxu0 0.0
        %2546 = vmatpush1.msra.mxu0 0.0
        %2547 = vmatprep.subr.mxu0 0.0
        %2548 = vmatpush1.msra.mxu0 0.0
        %2549 = vmatprep.subr.mxu0 0.0
        %2550 = vmatpush1.msra.mxu0 0.0
        %2551 = vmatprep.mubr.f32.mxu0 0.0
        %2552 = vmatmul.mubr.f32.gmra.mrb[0].mxu0 %v2485
        %v2553 = vpop.f32.mrb[0].mxu0
        %v2554 = vadd.f32 %v2482, %v2553
        %v2555 = vpop.f32.mrb[0].mxu0
        %2556 = vdwg.mxu0
        %v2557 = vmul.f32 %v2554, %v902
        %2558 = vst.msk [vmem:[%s770] sm:$0xff] %vm781, %v2557
        %v2559 = vadd.f32 %v2557, %v811
        %v2560 = vmul.f32 %v2559, 0.70710677
        %2561 = vst.msk [vmem:[%s777] sm:$0xff] %vm781, %v2560
        %s2562 = sand.u32 %s384, 1
        %s2563 = scalar_lea.sflag [#allocation5], %s2562
        %s2564 = sand.u32 %s384, 1
        %s2565 = smul.addr %s2564, 8
        %s2566 = scalar_lea.vmem [#allocation27], %s2565
        %s2567 = sand.u32 %s410, 1
        %s2568 = scalar_lea.sflag [#allocation29], %s2567
        %s2569 = sand.u32 %s410, 1
        %s2570 = smul.addr %s2569, 8
        %s2571 = scalar_lea.vmem [#allocation28], %s2570
        // Predicated region
        $region141: #{tpu_custom_call.1} parent=79 // pred_check
          %p2572 = pneg %p394
        $region142: #{tpu_custom_call.1} parent=79 // pred_check_branch
          %2574 = sbr.rel (%p2572) target = $region144
        $region143: #{tpu_custom_call.1} parent=79 // pred_region
          %s2576 = ssub.s32 128, 128
          %2577 = vsyncadd %s2563, %s2576
          %s2578 = smul.addr %s46, 128
          %s2579 = scalar_lea.hbm %s15, %s2578
          %s2581 = sshll.u32 %s2566, 4
          %s2582 = int_to_ptr.vmem [resolvable:$true] %s2581
          %2584 = dma.vmem_to_hbm [thread:$0]  %s2582, 128, %s2579, %s2563
        $region144: #{tpu_custom_call.1} parent=79 // pred_fallthru
          _
        // Predicated region
        $region145: #{tpu_custom_call.1} parent=79 // pred_check
          %p2585 = pneg %p420
        $region146: #{tpu_custom_call.1} parent=79 // pred_check_branch
          %2587 = sbr.rel (%p2585) target = $region148
        $region147: #{tpu_custom_call.1} parent=79 // pred_region
          %s2589 = ssub.s32 128, 128
          %2590 = vsyncadd %s2568, %s2589
          %s2591 = smul.addr %s46, 128
          %s2592 = scalar_lea.hbm %s16, %s2591
          %s2594 = sshll.u32 %s2571, 4
          %s2595 = int_to_ptr.vmem [resolvable:$true] %s2594
          %2597 = dma.vmem_to_hbm [thread:$0]  %s2595, 128, %s2592, %s2568
        $region148: #{tpu_custom_call.1} parent=79 // pred_fallthru
          _
      $region80: #{tpu_custom_call.1} parent=5 // pred_fallthru
        _
      %p2598 = scmp.le.s32.totalorder 2, %s41
      // Predicated region
      $region149: #{tpu_custom_call.1} parent=5 // pred_check
        %p2599 = pneg %p2598
      $region150: #{tpu_custom_call.1} parent=5 // pred_check_branch
        %2601 = sbr.rel (%p2599) target = $region152
      $region151: #{tpu_custom_call.1} parent=5 // pred_region
        %s2602 = ssub.s32 %s41, 2
        // Predicated region
        $region153: #{tpu_custom_call.1} parent=151 // pred_check
          %p2603 = pneg %p400
        $region154: #{tpu_custom_call.1} parent=151 // pred_check_branch
          %2605 = sbr.rel (%p2603) target = $region156
        $region155: #{tpu_custom_call.1} parent=151 // pred_region
          %s2606 = sand.u32 %s385, 1
          %s2607 = scalar_lea.sflag [#allocation5], %s2606
          %s2608 = sand.u32 %s385, 1
          %s2609 = smul.addr %s2608, 8
          %s2610 = scalar_lea.vmem [#allocation27], %s2609
          %2611 = dma.done %s2607, 128
        $region156: #{tpu_custom_call.1} parent=151 // pred_fallthru
          _
        // Predicated region
        $region157: #{tpu_custom_call.1} parent=151 // pred_check
          %p2612 = pneg %p426
        $region158: #{tpu_custom_call.1} parent=151 // pred_check_branch
          %2614 = sbr.rel (%p2612) target = $region160
        $region159: #{tpu_custom_call.1} parent=151 // pred_region
          %s2615 = sand.u32 %s411, 1
          %s2616 = scalar_lea.sflag [#allocation29], %s2615
          %s2617 = sand.u32 %s411, 1
          %s2618 = smul.addr %s2617, 8
          %s2619 = scalar_lea.vmem [#allocation28], %s2618
          %2620 = dma.done %s2616, 128
        $region160: #{tpu_custom_call.1} parent=151 // pred_fallthru
          _
      $region152: #{tpu_custom_call.1} parent=5 // pred_fallthru
        _
    $region6: #{tpu_custom_call.1} parent=1 // loop_footer
      %s45 = sadd.s32 1, %s41
    $region7: #{tpu_custom_call.1} parent=1 // loop_footer_branch
      %40 = sbr.rel target = $region3
    $region8: #{tpu_custom_call.1} parent=1 // loop_exit
      _
    %2621 = vsyncpa [#allocation4], 1
    %s2622 = scalar_lea.sflag [#allocation4], 1
    %2623 = vsyncpa %s2622, 1
    %2624 = vsyncpa [#allocation7], 1
    %s2625 = scalar_lea.sflag [#allocation7], 1
    %2626 = vsyncpa %s2625, 1
    %2627 = vsyncpa [#allocation10], 1
    %2628 = vsyncpa [#allocation13], 1
    %2629 = vsyncpa [#allocation16], 1
    %2630 = vsyncpa [#allocation19], 1
    %2631 = vsyncpa [#allocation22], 1
    %2632 = vsyncpa [#allocation25], 1
    %2633 = vsyncpa [#allocation5], 1
    %s2634 = scalar_lea.sflag [#allocation5], 1
    %2635 = vsyncpa %s2634, 1
    %2636 = vsyncpa [#allocation29], 1
    %s2637 = scalar_lea.sflag [#allocation29], 1
    %2638 = vsyncpa %s2637, 1

</llo_original>
